<compile_context>
chip_gen: v7x
topology: tpu7x:2x2x1
jax: 0.10.0
libtpu: 0.0.40
codegen_flags: <defaults>
</compile_context>

<pallas_src>
import jax
import jax.numpy as jnp
import numpy as np
from jax import lax
from jax.experimental import pallas as pl
from jax.experimental.pallas import tpu as pltpu

EPS = 1e-5


# ------------------------------ kernel --------------------------------------
def _make_kernel(NB, H, W, C_IN, C_MID, C_R):
    R = NB * H * W

    def kernel(x_ref, w1_ref, b1_ref, w2_ref, b2_ref, w3_ref, b3_ref,
               out_ref, pad_ref):
        # ---- lv1: 1x1 conv (BN1 scale folded into w1) + bias + relu --------
        x2d = x_ref[...].reshape(R, C_IN)                        # bf16 (R, Cin)
        h1 = jnp.dot(x2d, w1_ref[...], preferred_element_type=jnp.float32)
        h1 = jnp.maximum(h1 + b1_ref[...], 0.0)                  # f32 (R, Cmid)

        # ---- lv2: 3x3 conv as ONE deep-K matmul over 9 concatenated taps ---
        # Zero only the 1-pixel border (the interior is fully overwritten
        # below).  Done every grid step: cheap, and correct per-core when the
        # batch axis is "parallel" (each core owns its own scratch).
        pad_ref[:, 0:1, :, :] = jnp.zeros((NB, 1, W + 2, C_MID), jnp.float32)
        pad_ref[:, H + 1:H + 2, :, :] = jnp.zeros((NB, 1, W + 2, C_MID),
                                                  jnp.float32)
        pad_ref[:, :, 0:1, :] = jnp.zeros((NB, H + 2, 1, C_MID), jnp.float32)
        pad_ref[:, :, W + 1:W + 2, :] = jnp.zeros((NB, H + 2, 1, C_MID),
                                                  jnp.float32)
        pad_ref[:, 1:H + 1, 1:W + 1, :] = h1.reshape(NB, H, W, C_MID)

        taps = [pad_ref[:, dy:dy + H, dx:dx + W, :].reshape(R, C_MID)
                for dy in range(3) for dx in range(3)]            # 9 x (R,Cmid)
        cat = jnp.concatenate(taps, axis=1).astype(jnp.bfloat16)  # (R, 9*Cmid)
        h2 = jnp.dot(cat, w2_ref[...], preferred_element_type=jnp.float32)
        h2 = jnp.maximum(h2 + b2_ref[...], 0.0)                   # f32 (R, Cmid)

        # ---- lv3: 1x1 conv; BN3 scale AND the x2 identity shortcut folded --
        h3 = jnp.dot(h2.astype(jnp.bfloat16), w3_ref[...],
                     preferred_element_type=jnp.float32)
        out = jnp.maximum(h3 + b3_ref[...], 0.0)                  # (R, Cr)
        out_ref[...] = out.reshape(NB, H, W, C_R).astype(out_ref.dtype)

    return kernel


def _pick_block_n(N, H, W, max_rows=4096):
    """Largest divisor of N such that the fused matmul M stays bounded."""
    for nb in range(N, 0, -1):
        if N % nb == 0 and nb * H * W <= max_rows:
            return nb
    return 1


def bottleneck131_pallas(x_nchw, kparams, block_n=None):
    (w1, b1, w2, b2, w3, b3) = kparams
    N, C_IN, H, W = x_nchw.shape
    C_MID = w1.shape[1]
    C_R = w3.shape[1]
    if block_n is None:
        block_n = _pick_block_n(N, H, W)
    assert N % block_n == 0

    x_nhwc = jnp.transpose(x_nchw, (0, 2, 3, 1)).astype(jnp.bfloat16)

    out_nhwc = pl.pallas_call(
        _make_kernel(block_n, H, W, C_IN, C_MID, C_R),
        out_shape=jax.ShapeDtypeStruct((N, H, W, C_R), jnp.float32),
        grid_spec=pltpu.PrefetchScalarGridSpec(
            num_scalar_prefetch=0,
            grid=(N // block_n,),                 # NB images per grid step
            in_specs=[
                pl.BlockSpec((block_n, H, W, C_IN), lambda n: (n, 0, 0, 0)),
                # constant weight / bias blocks (small; at real ResNet sizes
                # consider pipeline_mode=pl.Buffered(1) to avoid double-buffer)
                pl.BlockSpec((C_IN, C_MID),        lambda n: (0, 0)),
                pl.BlockSpec((1, C_MID),           lambda n: (0, 0)),
                pl.BlockSpec((9 * C_MID, C_MID),   lambda n: (0, 0)),
                pl.BlockSpec((1, C_MID),           lambda n: (0, 0)),
                pl.BlockSpec((C_MID, C_R),         lambda n: (0, 0)),
                pl.BlockSpec((1, C_R),             lambda n: (0, 0)),
            ],
            out_specs=pl.BlockSpec((block_n, H, W, C_R),
                                   lambda n: (n, 0, 0, 0)),
            scratch_shapes=[
                pltpu.VMEM((block_n, H + 2, W + 2, C_MID), jnp.float32)],
        ),
        compiler_params=pltpu.CompilerParams(
            dimension_semantics=("parallel",)),   # batch axis: independent
    )(x_nhwc, w1, b1, w2, b2, w3, b3)

    return jnp.transpose(out_nhwc, (0, 3, 1, 2))


# --------------------------- parameter setup --------------------------------
def _fold_bn(key, c):
    k1, k2, k3, k4 = jax.random.split(key, 4)
    gamma = 1.0 + 0.1 * jax.random.normal(k1, (c,), jnp.float32)
    beta = 0.1 * jax.random.normal(k2, (c,), jnp.float32)
    mean = 0.1 * jax.random.normal(k3, (c,), jnp.float32)
    var = jnp.abs(jax.random.normal(k4, (c,), jnp.float32)) + 0.5
    scale = gamma / jnp.sqrt(var + EPS)
    bias = beta - mean * scale
    return scale, bias


def init_params(key, in_planes, out_planes):
    r_planes = 4 * out_planes
    ks = jax.random.split(key, 6)
    # conv weights in PyTorch layout (O, I, kH, kW)
    w1_t = 0.2 * jax.random.normal(ks[0], (out_planes, in_planes, 1, 1), jnp.float32)
    w2_t = 0.2 * jax.random.normal(ks[1], (out_planes, out_planes, 3, 3), jnp.float32)
    w3_t = 0.2 * jax.random.normal(ks[2], (r_planes, out_planes, 1, 1), jnp.float32)
    s1, b1 = _fold_bn(ks[3], out_planes)
    s2, b2 = _fold_bn(ks[4], out_planes)
    s3, b3 = _fold_bn(ks[5], r_planes)

    # Fold BN scales into the conv weights (per output channel); fold the
    # x2 identity-shortcut into lv3's weight and bias.  Cast weights to bf16.
    w1f = (w1_t.reshape(out_planes, in_planes).T * s1[None, :]).astype(jnp.bfloat16)
    w2_hwio = jnp.transpose(w2_t, (2, 3, 1, 0)) * s2[None, None, None, :]  # (3,3,I,O)
    w2f = w2_hwio.reshape(9 * out_planes, out_planes).astype(jnp.bfloat16)
    w3f = (w3_t.reshape(r_planes, out_planes).T * (2.0 * s3)[None, :]).astype(jnp.bfloat16)
    b3f = 2.0 * b3

    kparams = (w1f, b1.reshape(1, -1),
               w2f, b2.reshape(1, -1),
               w3f, b3f.reshape(1, -1))
    return kparams


# ---------------------------- pure-JAX reference -----------------------------
def reference(x_nchw, kparams):
    """Same folded/bf16-quantized weights as the kernel, evaluated with
    jnp/lax convs in f32 accumulation (differences vs. the kernel are
    accumulation-order only)."""
    w1f, b1, w2f, b2, w3f, b3 = kparams
    C_MID = w1f.shape[1]
    x = jnp.transpose(x_nchw, (0, 2, 3, 1)).astype(jnp.bfloat16).astype(jnp.float32)

    h1 = jnp.maximum(jnp.einsum('nhwi,io->nhwo', x, w1f.astype(jnp.float32)) + b1, 0.0)
    h1 = h1.astype(jnp.bfloat16).astype(jnp.float32)

    w2_hwio = w2f.astype(jnp.float32).reshape(3, 3, C_MID, C_MID)
    h2 = lax.conv_general_dilated(
        h1, w2_hwio, window_strides=(1, 1), padding=((1, 1), (1, 1)),
        dimension_numbers=('NHWC', 'HWIO', 'NHWC'))
    h2 = jnp.maximum(h2 + b2, 0.0)
    h2 = h2.astype(jnp.bfloat16).astype(jnp.float32)

    h3 = jnp.einsum('nhwi,io->nhwo', h2, w3f.astype(jnp.float32)) + b3
    out = jnp.maximum(h3, 0.0)          # x2 identity shortcut already folded
    return jnp.transpose(out, (0, 3, 1, 2))


if __name__ == "__main__":
    # Only runnable config of the original module: stride=1, in_planes == 4*out_planes.
    N, in_planes, out_planes, H, W = 2, 16, 4, 16, 16
    key = jax.random.PRNGKey(0)
    kx, kp = jax.random.split(key)
    x = jax.random.normal(kx, (N, in_planes, H, W), jnp.float32)   # NCHW like PyTorch

    kparams = init_params(kp, in_planes, out_planes)

    out = jax.jit(bottleneck131_pallas)(x, kparams)
    out = jax.block_until_ready(out)

    ref = jax.block_until_ready(reference(x, kparams))
    np.testing.assert_allclose(np.asarray(out, np.float32),
                               np.asarray(ref, np.float32),
                               rtol=2e-3, atol=2e-3)

    print("KERNEL_OK")
</pallas_src>

<mosaic_0001>
module attributes {stable_mosaic.version = 11 : i64} {
  func.func @kernel(%arg0: i32, %arg1: memref<2x16x16x16xbf16, #tpu.memory_space<vmem>>, %arg2: memref<16x4xbf16, #tpu.memory_space<vmem>>, %arg3: memref<1x4xf32, #tpu.memory_space<vmem>>, %arg4: memref<36x4xbf16, #tpu.memory_space<vmem>>, %arg5: memref<1x4xf32, #tpu.memory_space<vmem>>, %arg6: memref<4x16xbf16, #tpu.memory_space<vmem>>, %arg7: memref<1x16xf32, #tpu.memory_space<vmem>>, %arg8: memref<2x16x16x16xf32, #tpu.memory_space<vmem>>, %arg9: memref<2x18x18x4xf32, #tpu.memory_space<vmem>>) attributes {dimension_semantics = [#tpu.dimension_semantics<parallel>], iteration_bounds = array<i64: 1>, scalar_prefetch = 0 : i64, scratch_operands = 1 : i64, tpu.core_type = #tpu.core_type<tc>, window_params = [{transform_indices = @transform_0, window_bounds = array<i64: 2, 16, 16, 16>}, {pipeline_mode = #tpu.pipeline_mode<synchronous>, transform_indices = @transform_1, window_bounds = array<i64: 16, 4>}, {pipeline_mode = #tpu.pipeline_mode<synchronous>, transform_indices = @transform_2, window_bounds = array<i64: 1, 4>}, {pipeline_mode = #tpu.pipeline_mode<synchronous>, transform_indices = @transform_3, window_bounds = array<i64: 36, 4>}, {pipeline_mode = #tpu.pipeline_mode<synchronous>, transform_indices = @transform_4, window_bounds = array<i64: 1, 4>}, {pipeline_mode = #tpu.pipeline_mode<synchronous>, transform_indices = @transform_5, window_bounds = array<i64: 4, 16>}, {pipeline_mode = #tpu.pipeline_mode<synchronous>, transform_indices = @transform_6, window_bounds = array<i64: 1, 16>}, {transform_indices = @transform_7, window_bounds = array<i64: 2, 16, 16, 16>}]} {
    %c0 = arith.constant 0 : index
    %c0_0 = arith.constant 0 : index
    %c0_1 = arith.constant 0 : index
    %c0_2 = arith.constant 0 : index
    %0 = vector.load %arg1[%c0, %c0_0, %c0_1, %c0_2] : memref<2x16x16x16xbf16, #tpu.memory_space<vmem>>, vector<2x16x16x16xbf16>
    %1 = vector.shape_cast %0 : vector<2x16x16x16xbf16> to vector<512x16xbf16>
    %c0_3 = arith.constant 0 : index
    %c0_4 = arith.constant 0 : index
    %2 = vector.load %arg2[%c0_3, %c0_4] : memref<16x4xbf16, #tpu.memory_space<vmem>>, vector<16x4xbf16>
    %cst = arith.constant dense<0.000000e+00> : vector<512x4xf32>
    %3 = tpu.matmul %1, %2, %cst {dimension_numbers = #tpu.dot_dimension_numbers<[1], [0], [0], [1], [0, 0, 1, 1], [], []>} : vector<512x16xbf16>, vector<16x4xbf16>, vector<512x4xf32> -> vector<512x4xf32>
    %c0_5 = arith.constant 0 : index
    %c0_6 = arith.constant 0 : index
    %4 = vector.load %arg3[%c0_5, %c0_6] : memref<1x4xf32, #tpu.memory_space<vmem>>, vector<1x4xf32>
    %5 = vector.broadcast %4 : vector<1x4xf32> to vector<512x4xf32>
    %6 = arith.addf %3, %5 : vector<512x4xf32>
    %cst_7 = arith.constant 0.000000e+00 : f32
    %7 = vector.broadcast %cst_7 : f32 to vector<512x4xf32>
    %8 = arith.maximumf %6, %7 : vector<512x4xf32>
    %cst_8 = arith.constant 0.000000e+00 : f32
    %9 = vector.broadcast %cst_8 : f32 to vector<2x1x18x4xf32>
    %c0_9 = arith.constant 0 : index
    %c0_10 = arith.constant 0 : index
    %c0_11 = arith.constant 0 : index
    %c0_12 = arith.constant 0 : index
    %10 = vector.load %arg9[%c0_9, %c0_10, %c0_11, %c0_12] : memref<2x18x18x4xf32, #tpu.memory_space<vmem>>, vector<2x1x18x4xf32>
    tpu.vector_store %arg9[%c0_9, %c0_10, %c0_11, %c0_12], %9 {strides = array<i32>} : memref<2x18x18x4xf32, #tpu.memory_space<vmem>>, vector<2x1x18x4xf32>,
    %cst_13 = arith.constant 0.000000e+00 : f32
    %11 = vector.broadcast %cst_13 : f32 to vector<2x1x18x4xf32>
    %c0_14 = arith.constant 0 : index
    %c17 = arith.constant 17 : index
    %c0_15 = arith.constant 0 : index
    %c0_16 = arith.constant 0 : index
    %12 = vector.load %arg9[%c0_14, %c17, %c0_15, %c0_16] : memref<2x18x18x4xf32, #tpu.memory_space<vmem>>, vector<2x1x18x4xf32>
    tpu.vector_store %arg9[%c0_14, %c17, %c0_15, %c0_16], %11 {strides = array<i32>} : memref<2x18x18x4xf32, #tpu.memory_space<vmem>>, vector<2x1x18x4xf32>,
    %cst_17 = arith.constant 0.000000e+00 : f32
    %13 = vector.broadcast %cst_17 : f32 to vector<2x18x1x4xf32>
    %c0_18 = arith.constant 0 : index
    %c0_19 = arith.constant 0 : index
    %c0_20 = arith.constant 0 : index
    %c0_21 = arith.constant 0 : index
    %14 = vector.load %arg9[%c0_18, %c0_19, %c0_20, %c0_21] : memref<2x18x18x4xf32, #tpu.memory_space<vmem>>, vector<2x18x1x4xf32>
    tpu.vector_store %arg9[%c0_18, %c0_19, %c0_20, %c0_21], %13 {strides = array<i32>} : memref<2x18x18x4xf32, #tpu.memory_space<vmem>>, vector<2x18x1x4xf32>,
    %cst_22 = arith.constant 0.000000e+00 : f32
    %15 = vector.broadcast %cst_22 : f32 to vector<2x18x1x4xf32>
    %c0_23 = arith.constant 0 : index
    %c0_24 = arith.constant 0 : index
    %c17_25 = arith.constant 17 : index
    %c0_26 = arith.constant 0 : index
    %16 = vector.load %arg9[%c0_23, %c0_24, %c17_25, %c0_26] : memref<2x18x18x4xf32, #tpu.memory_space<vmem>>, vector<2x18x1x4xf32>
    tpu.vector_store %arg9[%c0_23, %c0_24, %c17_25, %c0_26], %15 {strides = array<i32>} : memref<2x18x18x4xf32, #tpu.memory_space<vmem>>, vector<2x18x1x4xf32>,
    %17 = vector.shape_cast %8 : vector<512x4xf32> to vector<2x16x16x4xf32>
    %c0_27 = arith.constant 0 : index
    %c1 = arith.constant 1 : index
    %c1_28 = arith.constant 1 : index
    %c0_29 = arith.constant 0 : index
    %18 = vector.load %arg9[%c0_27, %c1, %c1_28, %c0_29] : memref<2x18x18x4xf32, #tpu.memory_space<vmem>>, vector<2x16x16x4xf32>
    tpu.vector_store %arg9[%c0_27, %c1, %c1_28, %c0_29], %17 {strides = array<i32>} : memref<2x18x18x4xf32, #tpu.memory_space<vmem>>, vector<2x16x16x4xf32>,
    %c0_30 = arith.constant 0 : index
    %c0_31 = arith.constant 0 : index
    %c0_32 = arith.constant 0 : index
    %c0_33 = arith.constant 0 : index
    %19 = vector.load %arg9[%c0_30, %c0_31, %c0_32, %c0_33] : memref<2x18x18x4xf32, #tpu.memory_space<vmem>>, vector<2x16x16x4xf32>
    %20 = vector.shape_cast %19 : vector<2x16x16x4xf32> to vector<512x4xf32>
    %c0_34 = arith.constant 0 : index
    %c0_35 = arith.constant 0 : index
    %c1_36 = arith.constant 1 : index
    %c0_37 = arith.constant 0 : index
    %21 = vector.load %arg9[%c0_34, %c0_35, %c1_36, %c0_37] : memref<2x18x18x4xf32, #tpu.memory_space<vmem>>, vector<2x16x16x4xf32>
    %22 = vector.shape_cast %21 : vector<2x16x16x4xf32> to vector<512x4xf32>
    %c0_38 = arith.constant 0 : index
    %c0_39 = arith.constant 0 : index
    %c2 = arith.constant 2 : index
    %c0_40 = arith.constant 0 : index
    %23 = vector.load %arg9[%c0_38, %c0_39, %c2, %c0_40] : memref<2x18x18x4xf32, #tpu.memory_space<vmem>>, vector<2x16x16x4xf32>
    %24 = vector.shape_cast %23 : vector<2x16x16x4xf32> to vector<512x4xf32>
    %c0_41 = arith.constant 0 : index
    %c1_42 = arith.constant 1 : index
    %c0_43 = arith.constant 0 : index
    %c0_44 = arith.constant 0 : index
    %25 = vector.load %arg9[%c0_41, %c1_42, %c0_43, %c0_44] : memref<2x18x18x4xf32, #tpu.memory_space<vmem>>, vector<2x16x16x4xf32>
    %26 = vector.shape_cast %25 : vector<2x16x16x4xf32> to vector<512x4xf32>
    %c0_45 = arith.constant 0 : index
    %c1_46 = arith.constant 1 : index
    %c1_47 = arith.constant 1 : index
    %c0_48 = arith.constant 0 : index
    %27 = vector.load %arg9[%c0_45, %c1_46, %c1_47, %c0_48] : memref<2x18x18x4xf32, #tpu.memory_space<vmem>>, vector<2x16x16x4xf32>
    %28 = vector.shape_cast %27 : vector<2x16x16x4xf32> to vector<512x4xf32>
    %c0_49 = arith.constant 0 : index
    %c1_50 = arith.constant 1 : index
    %c2_51 = arith.constant 2 : index
    %c0_52 = arith.constant 0 : index
    %29 = vector.load %arg9[%c0_49, %c1_50, %c2_51, %c0_52] : memref<2x18x18x4xf32, #tpu.memory_space<vmem>>, vector<2x16x16x4xf32>
    %30 = vector.shape_cast %29 : vector<2x16x16x4xf32> to vector<512x4xf32>
    %c0_53 = arith.constant 0 : index
    %c2_54 = arith.constant 2 : index
    %c0_55 = arith.constant 0 : index
    %c0_56 = arith.constant 0 : index
    %31 = vector.load %arg9[%c0_53, %c2_54, %c0_55, %c0_56] : memref<2x18x18x4xf32, #tpu.memory_space<vmem>>, vector<2x16x16x4xf32>
    %32 = vector.shape_cast %31 : vector<2x16x16x4xf32> to vector<512x4xf32>
    %c0_57 = arith.constant 0 : index
    %c2_58 = arith.constant 2 : index
    %c1_59 = arith.constant 1 : index
    %c0_60 = arith.constant 0 : index
    %33 = vector.load %arg9[%c0_57, %c2_58, %c1_59, %c0_60] : memref<2x18x18x4xf32, #tpu.memory_space<vmem>>, vector<2x16x16x4xf32>
    %34 = vector.shape_cast %33 : vector<2x16x16x4xf32> to vector<512x4xf32>
    %c0_61 = arith.constant 0 : index
    %c2_62 = arith.constant 2 : index
    %c2_63 = arith.constant 2 : index
    %c0_64 = arith.constant 0 : index
    %35 = vector.load %arg9[%c0_61, %c2_62, %c2_63, %c0_64] : memref<2x18x18x4xf32, #tpu.memory_space<vmem>>, vector<2x16x16x4xf32>
    %36 = vector.shape_cast %35 : vector<2x16x16x4xf32> to vector<512x4xf32>
    %37 = tpu.concatenate %20, %22, %24, %26, %28, %30, %32, %34, %36 in 1 : vector<512x4xf32>, vector<512x4xf32>, vector<512x4xf32>, vector<512x4xf32>, vector<512x4xf32>, vector<512x4xf32>, vector<512x4xf32>, vector<512x4xf32>, vector<512x4xf32> -> vector<512x36xf32>
    %38 = arith.truncf %37 : vector<512x36xf32> to vector<512x36xbf16>
    %c0_65 = arith.constant 0 : index
    %c0_66 = arith.constant 0 : index
    %39 = vector.load %arg4[%c0_65, %c0_66] : memref<36x4xbf16, #tpu.memory_space<vmem>>, vector<36x4xbf16>
    %cst_67 = arith.constant dense<0.000000e+00> : vector<512x4xf32>
    %40 = tpu.matmul %38, %39, %cst_67 {dimension_numbers = #tpu.dot_dimension_numbers<[1], [0], [0], [1], [0, 0, 1, 1], [], []>} : vector<512x36xbf16>, vector<36x4xbf16>, vector<512x4xf32> -> vector<512x4xf32>
    %c0_68 = arith.constant 0 : index
    %c0_69 = arith.constant 0 : index
    %41 = vector.load %arg5[%c0_68, %c0_69] : memref<1x4xf32, #tpu.memory_space<vmem>>, vector<1x4xf32>
    %42 = vector.broadcast %41 : vector<1x4xf32> to vector<512x4xf32>
    %43 = arith.addf %40, %42 : vector<512x4xf32>
    %cst_70 = arith.constant 0.000000e+00 : f32
    %44 = vector.broadcast %cst_70 : f32 to vector<512x4xf32>
    %45 = arith.maximumf %43, %44 : vector<512x4xf32>
    %46 = arith.truncf %45 : vector<512x4xf32> to vector<512x4xbf16>
    %c0_71 = arith.constant 0 : index
    %c0_72 = arith.constant 0 : index
    %47 = vector.load %arg6[%c0_71, %c0_72] : memref<4x16xbf16, #tpu.memory_space<vmem>>, vector<4x16xbf16>
    %cst_73 = arith.constant dense<0.000000e+00> : vector<512x16xf32>
    %48 = tpu.matmul %46, %47, %cst_73 {dimension_numbers = #tpu.dot_dimension_numbers<[1], [0], [0], [1], [0, 0, 1, 1], [], []>} : vector<512x4xbf16>, vector<4x16xbf16>, vector<512x16xf32> -> vector<512x16xf32>
    %c0_74 = arith.constant 0 : index
    %c0_75 = arith.constant 0 : index
    %49 = vector.load %arg7[%c0_74, %c0_75] : memref<1x16xf32, #tpu.memory_space<vmem>>, vector<1x16xf32>
    %50 = vector.broadcast %49 : vector<1x16xf32> to vector<512x16xf32>
    %51 = arith.addf %48, %50 : vector<512x16xf32>
    %cst_76 = arith.constant 0.000000e+00 : f32
    %52 = vector.broadcast %cst_76 : f32 to vector<512x16xf32>
    %53 = arith.maximumf %51, %52 : vector<512x16xf32>
    %54 = vector.shape_cast %53 : vector<512x16xf32> to vector<2x16x16x16xf32>
    %c0_77 = arith.constant 0 : index
    %c0_78 = arith.constant 0 : index
    %c0_79 = arith.constant 0 : index
    %c0_80 = arith.constant 0 : index
    %55 = vector.load %arg8[%c0_77, %c0_78, %c0_79, %c0_80] : memref<2x16x16x16xf32, #tpu.memory_space<vmem>>, vector<2x16x16x16xf32>
    tpu.vector_store %arg8[%c0_77, %c0_78, %c0_79, %c0_80], %54 {strides = array<i32>} : memref<2x16x16x16xf32, #tpu.memory_space<vmem>>, vector<2x16x16x16xf32>,
    return
  }
  func.func @transform_0(%arg0: i32) -> (i32, i32, i32, i32) {
    %c0_i32 = arith.constant 0 : i32
    %c0_i32_0 = arith.constant 0 : i32
    %c0_i32_1 = arith.constant 0 : i32
    %c0_i32_2 = arith.constant 0 : i32
    return %arg0, %c0_i32, %c0_i32_0, %c0_i32_1 : i32, i32, i32, i32
  }
  func.func @transform_1(%arg0: i32) -> (i32, i32) {
    %c0_i32 = arith.constant 0 : i32
    %c0_i32_0 = arith.constant 0 : i32
    %c0_i32_1 = arith.constant 0 : i32
    return %c0_i32, %c0_i32_0 : i32, i32
  }
  func.func @transform_2(%arg0: i32) -> (i32, i32) {
    %c0_i32 = arith.constant 0 : i32
    %c0_i32_0 = arith.constant 0 : i32
    %c0_i32_1 = arith.constant 0 : i32
    return %c0_i32, %c0_i32_0 : i32, i32
  }
  func.func @transform_3(%arg0: i32) -> (i32, i32) {
    %c0_i32 = arith.constant 0 : i32
    %c0_i32_0 = arith.constant 0 : i32
    %c0_i32_1 = arith.constant 0 : i32
    return %c0_i32, %c0_i32_0 : i32, i32
  }
  func.func @transform_4(%arg0: i32) -> (i32, i32) {
    %c0_i32 = arith.constant 0 : i32
    %c0_i32_0 = arith.constant 0 : i32
    %c0_i32_1 = arith.constant 0 : i32
    return %c0_i32, %c0_i32_0 : i32, i32
  }
  func.func @transform_5(%arg0: i32) -> (i32, i32) {
    %c0_i32 = arith.constant 0 : i32
    %c0_i32_0 = arith.constant 0 : i32
    %c0_i32_1 = arith.constant 0 : i32
    return %c0_i32, %c0_i32_0 : i32, i32
  }
  func.func @transform_6(%arg0: i32) -> (i32, i32) {
    %c0_i32 = arith.constant 0 : i32
    %c0_i32_0 = arith.constant 0 : i32
    %c0_i32_1 = arith.constant 0 : i32
    return %c0_i32, %c0_i32_0 : i32, i32
  }
  func.func @transform_7(%arg0: i32) -> (i32, i32, i32, i32) {
    %c0_i32 = arith.constant 0 : i32
    %c0_i32_0 = arith.constant 0 : i32
    %c0_i32_1 = arith.constant 0 : i32
    %c0_i32_2 = arith.constant 0 : i32
    return %arg0, %c0_i32, %c0_i32_0, %c0_i32_1 : i32, i32, i32, i32
  }
}

</mosaic_0001>

<llo_original>
// kernel: bottleneck131_pallas.1
$region0: #{bottleneck131_pallas.1}
  #allocation0 [shape = 'u32[]', space=smem, size = 0x4, offset = 0x4, fixed_abs, tag = 'smem constant byte address 0x4 - core index']
  #allocation1 [shape = 'u32[144,128]{1,0:T(1,128)}', space=vmem, size = 0x12000, scoped, tag = 'internal scratch']
  #allocation2 [shape = 'f32[2,18,18,4]{3,2,1,0:T(8,128)}', space=vmem, size = 0x6c000, scoped, tag = 'scratch operand']
  %s0 = inlined_call_operand.vmem [shape: bf16[2,16,16,16], index: 0, kind: input, shape index: {}]
  %s1 = inlined_call_operand.vmem [shape: bf16[16,4], index: 1, kind: input, shape index: {}]
  %s2 = inlined_call_operand.vmem [shape: f32[1,4], index: 2, kind: input, shape index: {}]
  %s3 = inlined_call_operand.vmem [shape: bf16[36,4], index: 3, kind: input, shape index: {}]
  %s4 = inlined_call_operand.vmem [shape: f32[1,4], index: 4, kind: input, shape index: {}]
  %s5 = inlined_call_operand.vmem [shape: bf16[4,16], index: 5, kind: input, shape index: {}]
  %s6 = inlined_call_operand.vmem [shape: f32[1,16], index: 6, kind: input, shape index: {}]
  %s7 = inlined_call_operand.vmem [shape: f32[2,16,16,16], index: 7, kind: output, shape index: {}]
  %s8 = sld [smem:[#allocation0]]
  $region38: #{bottleneck131_pallas.1} parent=0
    _
  %s10 = ssub.s32 1, %s8
  %s11 = scalar_select 0, %s10, %s8
  // Predicated region
  $region2: #{bottleneck131_pallas.1} parent=0 // pred_check
    _
  $region3: #{bottleneck131_pallas.1} parent=0 // pred_check_branch
    %13 = sbr.rel (0) target = $region5
  $region4: #{bottleneck131_pallas.1} parent=0 // pred_region
    _
  $region5: #{bottleneck131_pallas.1} parent=0 // pred_fallthru
    _
  // Predicated region
  $region6: #{bottleneck131_pallas.1} parent=0 // pred_check
    _
  $region7: #{bottleneck131_pallas.1} parent=0 // pred_check_branch
    %15 = sbr.rel (0) target = $region9
  $region8: #{bottleneck131_pallas.1} parent=0 // pred_region
    _
  $region9: #{bottleneck131_pallas.1} parent=0 // pred_fallthru
    _
  // Predicated region
  $region10: #{bottleneck131_pallas.1} parent=0 // pred_check
    _
  $region11: #{bottleneck131_pallas.1} parent=0 // pred_check_branch
    %17 = sbr.rel (0) target = $region13
  $region12: #{bottleneck131_pallas.1} parent=0 // pred_region
    _
  $region13: #{bottleneck131_pallas.1} parent=0 // pred_fallthru
    _
  // Predicated region
  $region14: #{bottleneck131_pallas.1} parent=0 // pred_check
    _
  $region15: #{bottleneck131_pallas.1} parent=0 // pred_check_branch
    %19 = sbr.rel (0) target = $region17
  $region16: #{bottleneck131_pallas.1} parent=0 // pred_region
    _
  $region17: #{bottleneck131_pallas.1} parent=0 // pred_fallthru
    _
  // Predicated region
  $region18: #{bottleneck131_pallas.1} parent=0 // pred_check
    _
  $region19: #{bottleneck131_pallas.1} parent=0 // pred_check_branch
    %21 = sbr.rel (0) target = $region21
  $region20: #{bottleneck131_pallas.1} parent=0 // pred_region
    _
  $region21: #{bottleneck131_pallas.1} parent=0 // pred_fallthru
    _
  // Predicated region
  $region22: #{bottleneck131_pallas.1} parent=0 // pred_check
    _
  $region23: #{bottleneck131_pallas.1} parent=0 // pred_check_branch
    %23 = sbr.rel (0) target = $region25
  $region24: #{bottleneck131_pallas.1} parent=0 // pred_region
    _
  $region25: #{bottleneck131_pallas.1} parent=0 // pred_fallthru
    _
  // Predicated region
  $region26: #{bottleneck131_pallas.1} parent=0 // pred_check
    _
  $region27: #{bottleneck131_pallas.1} parent=0 // pred_check_branch
    %25 = sbr.rel (0) target = $region29
  $region28: #{bottleneck131_pallas.1} parent=0 // pred_region
    _
  $region29: #{bottleneck131_pallas.1} parent=0 // pred_fallthru
    _
  %v27 = vld [vmem:[%s0] sm:$0xf]
  %v28 = vld [vmem:[%s0 + $0x4] sm:$0xf]
  %v29 = vld [vmem:[%s0 + $0x8] sm:$0xf]
  %v30 = vld [vmem:[%s0 + $0xc] sm:$0xf]
  %v31 = vld [vmem:[%s0 + $0x10] sm:$0xf]
  %v32 = vld [vmem:[%s0 + $0x14] sm:$0xf]
  %v33 = vld [vmem:[%s0 + $0x18] sm:$0xf]
  %v34 = vld [vmem:[%s0 + $0x1c] sm:$0xf]
  %v35 = vld [vmem:[%s0 + $0x20] sm:$0xf]
  %v36 = vld [vmem:[%s0 + $0x24] sm:$0xf]
  %v37 = vld [vmem:[%s0 + $0x28] sm:$0xf]
  %v38 = vld [vmem:[%s0 + $0x2c] sm:$0xf]
  %v39 = vld [vmem:[%s0 + $0x30] sm:$0xf]
  %v40 = vld [vmem:[%s0 + $0x34] sm:$0xf]
  %v41 = vld [vmem:[%s0 + $0x38] sm:$0xf]
  %v42 = vld [vmem:[%s0 + $0x3c] sm:$0xf]
  %v43 = vld [vmem:[%s0 + $0x40] sm:$0xf]
  %v44 = vld [vmem:[%s0 + $0x44] sm:$0xf]
  %v45 = vld [vmem:[%s0 + $0x48] sm:$0xf]
  %v46 = vld [vmem:[%s0 + $0x4c] sm:$0xf]
  %v47 = vld [vmem:[%s0 + $0x50] sm:$0xf]
  %v48 = vld [vmem:[%s0 + $0x54] sm:$0xf]
  %v49 = vld [vmem:[%s0 + $0x58] sm:$0xf]
  %v50 = vld [vmem:[%s0 + $0x5c] sm:$0xf]
  %v51 = vld [vmem:[%s0 + $0x60] sm:$0xf]
  %v52 = vld [vmem:[%s0 + $0x64] sm:$0xf]
  %v53 = vld [vmem:[%s0 + $0x68] sm:$0xf]
  %v54 = vld [vmem:[%s0 + $0x6c] sm:$0xf]
  %v55 = vld [vmem:[%s0 + $0x70] sm:$0xf]
  %v56 = vld [vmem:[%s0 + $0x74] sm:$0xf]
  %v57 = vld [vmem:[%s0 + $0x78] sm:$0xf]
  %v58 = vld [vmem:[%s0 + $0x7c] sm:$0xf]
  %v59 = vld [vmem:[%s0 + $0x80] sm:$0xf]
  %v60 = vld [vmem:[%s0 + $0x84] sm:$0xf]
  %v61 = vld [vmem:[%s0 + $0x88] sm:$0xf]
  %v62 = vld [vmem:[%s0 + $0x8c] sm:$0xf]
  %v63 = vld [vmem:[%s0 + $0x90] sm:$0xf]
  %v64 = vld [vmem:[%s0 + $0x94] sm:$0xf]
  %v65 = vld [vmem:[%s0 + $0x98] sm:$0xf]
  %v66 = vld [vmem:[%s0 + $0x9c] sm:$0xf]
  %v67 = vld [vmem:[%s0 + $0xa0] sm:$0xf]
  %v68 = vld [vmem:[%s0 + $0xa4] sm:$0xf]
  %v69 = vld [vmem:[%s0 + $0xa8] sm:$0xf]
  %v70 = vld [vmem:[%s0 + $0xac] sm:$0xf]
  %v71 = vld [vmem:[%s0 + $0xb0] sm:$0xf]
  %v72 = vld [vmem:[%s0 + $0xb4] sm:$0xf]
  %v73 = vld [vmem:[%s0 + $0xb8] sm:$0xf]
  %v74 = vld [vmem:[%s0 + $0xbc] sm:$0xf]
  %v75 = vld [vmem:[%s0 + $0xc0] sm:$0xf]
  %v76 = vld [vmem:[%s0 + $0xc4] sm:$0xf]
  %v77 = vld [vmem:[%s0 + $0xc8] sm:$0xf]
  %v78 = vld [vmem:[%s0 + $0xcc] sm:$0xf]
  %v79 = vld [vmem:[%s0 + $0xd0] sm:$0xf]
  %v80 = vld [vmem:[%s0 + $0xd4] sm:$0xf]
  %v81 = vld [vmem:[%s0 + $0xd8] sm:$0xf]
  %v82 = vld [vmem:[%s0 + $0xdc] sm:$0xf]
  %v83 = vld [vmem:[%s0 + $0xe0] sm:$0xf]
  %v84 = vld [vmem:[%s0 + $0xe4] sm:$0xf]
  %v85 = vld [vmem:[%s0 + $0xe8] sm:$0xf]
  %v86 = vld [vmem:[%s0 + $0xec] sm:$0xf]
  %v87 = vld [vmem:[%s0 + $0xf0] sm:$0xf]
  %v88 = vld [vmem:[%s0 + $0xf4] sm:$0xf]
  %v89 = vld [vmem:[%s0 + $0xf8] sm:$0xf]
  %v90 = vld [vmem:[%s0 + $0xfc] sm:$0xf]
  %v91 = vld [vmem:[%s1] sm:$0xf]
  %v92 = vld [vmem:[%s1 + $0x4] sm:$0xf]
  %v93 = vld [vmem:[%s2] sm:$0x1]
  %v95 = vlaneseq
  %v96 = vshrl.u32 %v95, 7
  %v97 = vsub.s32 0, %v96
  %v98 = vrot.slane %v93, %v97
  %v164 = vunpack.c.l.b16 %v27
  %v165 = vunpack.c.l.b16 %v28
  %v166 = vunpack.c.l.b16 %v29
  %v167 = vunpack.c.l.b16 %v30
  %v168 = vunpack.c.l.b16 %v31
  %v169 = vunpack.c.l.b16 %v32
  %v170 = vunpack.c.l.b16 %v33
  %v171 = vunpack.c.l.b16 %v34
  %v172 = vunpack.c.l.b16 %v35
  %v173 = vunpack.c.l.b16 %v36
  %v174 = vunpack.c.l.b16 %v37
  %v175 = vunpack.c.l.b16 %v38
  %v176 = vunpack.c.l.b16 %v39
  %v177 = vunpack.c.l.b16 %v40
  %v178 = vunpack.c.l.b16 %v41
  %v179 = vunpack.c.l.b16 %v42
  %v180 = vunpack.c.l.b16 %v43
  %v181 = vunpack.c.l.b16 %v44
  %v182 = vunpack.c.l.b16 %v45
  %v183 = vunpack.c.l.b16 %v46
  %v184 = vunpack.c.l.b16 %v47
  %v185 = vunpack.c.l.b16 %v48
  %v186 = vunpack.c.l.b16 %v49
  %v187 = vunpack.c.l.b16 %v50
  %v188 = vunpack.c.l.b16 %v51
  %v189 = vunpack.c.l.b16 %v52
  %v190 = vunpack.c.l.b16 %v53
  %v191 = vunpack.c.l.b16 %v54
  %v192 = vunpack.c.l.b16 %v55
  %v193 = vunpack.c.l.b16 %v56
  %v194 = vunpack.c.l.b16 %v57
  %v195 = vunpack.c.l.b16 %v58
  %v196 = vunpack.c.l.b16 %v59
  %v197 = vunpack.c.l.b16 %v60
  %v198 = vunpack.c.l.b16 %v61
  %v199 = vunpack.c.l.b16 %v62
  %v200 = vunpack.c.l.b16 %v63
  %v201 = vunpack.c.l.b16 %v64
  %v202 = vunpack.c.l.b16 %v65
  %v203 = vunpack.c.l.b16 %v66
  %v204 = vunpack.c.l.b16 %v67
  %v205 = vunpack.c.l.b16 %v68
  %v206 = vunpack.c.l.b16 %v69
  %v207 = vunpack.c.l.b16 %v70
  %v208 = vunpack.c.l.b16 %v71
  %v209 = vunpack.c.l.b16 %v72
  %v210 = vunpack.c.l.b16 %v73
  %v211 = vunpack.c.l.b16 %v74
  %v212 = vunpack.c.l.b16 %v75
  %v213 = vunpack.c.l.b16 %v76
  %v214 = vunpack.c.l.b16 %v77
  %v215 = vunpack.c.l.b16 %v78
  %v216 = vunpack.c.l.b16 %v79
  %v217 = vunpack.c.l.b16 %v80
  %v218 = vunpack.c.l.b16 %v81
  %v219 = vunpack.c.l.b16 %v82
  %v220 = vunpack.c.l.b16 %v83
  %v221 = vunpack.c.l.b16 %v84
  %v222 = vunpack.c.l.b16 %v85
  %v223 = vunpack.c.l.b16 %v86
  %v224 = vunpack.c.l.b16 %v87
  %v225 = vunpack.c.l.b16 %v88
  %v226 = vunpack.c.l.b16 %v89
  %v227 = vunpack.c.l.b16 %v90
  %v228 = vpack.c.b16 %v165, %v164
  %v229 = vpack.c.b16 %v167, %v166
  %v230 = vpack.c.b16 %v169, %v168
  %v231 = vpack.c.b16 %v171, %v170
  %v232 = vpack.c.b16 %v173, %v172
  %v233 = vpack.c.b16 %v175, %v174
  %v234 = vpack.c.b16 %v177, %v176
  %v235 = vpack.c.b16 %v179, %v178
  %v236 = vpack.c.b16 %v181, %v180
  %v237 = vpack.c.b16 %v183, %v182
  %v238 = vpack.c.b16 %v185, %v184
  %v239 = vpack.c.b16 %v187, %v186
  %v240 = vpack.c.b16 %v189, %v188
  %v241 = vpack.c.b16 %v191, %v190
  %v242 = vpack.c.b16 %v193, %v192
  %v243 = vpack.c.b16 %v195, %v194
  %v244 = vpack.c.b16 %v197, %v196
  %v245 = vpack.c.b16 %v199, %v198
  %v246 = vpack.c.b16 %v201, %v200
  %v247 = vpack.c.b16 %v203, %v202
  %v248 = vpack.c.b16 %v205, %v204
  %v249 = vpack.c.b16 %v207, %v206
  %v250 = vpack.c.b16 %v209, %v208
  %v251 = vpack.c.b16 %v211, %v210
  %v252 = vpack.c.b16 %v213, %v212
  %v253 = vpack.c.b16 %v215, %v214
  %v254 = vpack.c.b16 %v217, %v216
  %v255 = vpack.c.b16 %v219, %v218
  %v256 = vpack.c.b16 %v221, %v220
  %v257 = vpack.c.b16 %v223, %v222
  %v258 = vpack.c.b16 %v225, %v224
  %v259 = vpack.c.b16 %v227, %v226
  %v262 = vunpack.c.l.b16 %v91
  %v263 = vunpack.c.l.b16 %v92
  %v264 = vpack.c.b16 %v263, %v262
  %vm266 = vcmask 130048
  %v268 = vsel %vm266, %v228, 0
  %v271 = vsel %vm266, %v229, 0
  %v274 = vsel %vm266, %v230, 0
  %v277 = vsel %vm266, %v231, 0
  %v280 = vsel %vm266, %v232, 0
  %v283 = vsel %vm266, %v233, 0
  %v286 = vsel %vm266, %v234, 0
  %v289 = vsel %vm266, %v235, 0
  %v292 = vsel %vm266, %v236, 0
  %v295 = vsel %vm266, %v237, 0
  %v298 = vsel %vm266, %v238, 0
  %v301 = vsel %vm266, %v239, 0
  %v304 = vsel %vm266, %v240, 0
  %v307 = vsel %vm266, %v241, 0
  %v310 = vsel %vm266, %v242, 0
  %v313 = vsel %vm266, %v243, 0
  %v316 = vsel %vm266, %v244, 0
  %v319 = vsel %vm266, %v245, 0
  %v322 = vsel %vm266, %v246, 0
  %v325 = vsel %vm266, %v247, 0
  %v328 = vsel %vm266, %v248, 0
  %v331 = vsel %vm266, %v249, 0
  %v334 = vsel %vm266, %v250, 0
  %v337 = vsel %vm266, %v251, 0
  %v340 = vsel %vm266, %v252, 0
  %v343 = vsel %vm266, %v253, 0
  %v346 = vsel %vm266, %v254, 0
  %v349 = vsel %vm266, %v255, 0
  %v352 = vsel %vm266, %v256, 0
  %v355 = vsel %vm266, %v257, 0
  %v358 = vsel %vm266, %v258, 0
  %v361 = vsel %vm266, %v259, 0
  %363 = vmatprep.subr.bf16.mxu0 0
  %364 = vmatpush1.bf16.msra.mxu0 %v264
  %365 = vmatprep.subr.bf16.mxu0 0
  %366 = vmatpush1.bf16.msra.mxu0 0
  %367 = vmatprep.subr.bf16.mxu0 0
  %368 = vmatpush1.bf16.msra.mxu0 0
  %369 = vmatprep.subr.bf16.mxu0 0
  %370 = vmatpush1.bf16.msra.mxu0 0
  %371 = vmatprep.subr.bf16.mxu0 0
  %372 = vmatpush1.bf16.msra.mxu0 0
  %373 = vmatprep.subr.bf16.mxu0 0
  %374 = vmatpush1.bf16.msra.mxu0 0
  %375 = vmatprep.subr.bf16.mxu0 0
  %376 = vmatpush1.bf16.msra.mxu0 0
  %377 = vmatprep.subr.bf16.mxu0 0
  %378 = vmatpush1.bf16.msra.mxu0 0
  %379 = vmatprep.subr.bf16.mxu0 0
  %380 = vmatpush1.bf16.msra.mxu0 0
  %381 = vmatprep.subr.bf16.mxu0 0
  %382 = vmatpush1.bf16.msra.mxu0 0
  %383 = vmatprep.subr.bf16.mxu0 0
  %384 = vmatpush1.bf16.msra.mxu0 0
  %385 = vmatprep.subr.bf16.mxu0 0
  %386 = vmatpush1.bf16.msra.mxu0 0
  %387 = vmatprep.subr.bf16.mxu0 0
  %388 = vmatpush1.bf16.msra.mxu0 0
  %389 = vmatprep.subr.bf16.mxu0 0
  %390 = vmatpush1.bf16.msra.mxu0 0
  %391 = vmatprep.subr.bf16.mxu0 0
  %392 = vmatpush1.bf16.msra.mxu0 0
  %393 = vmatprep.subr.bf16.mxu0 0
  %394 = vmatpush1.bf16.msra.mxu0 0
  %395 = vmatprep.mubr.bf16.mxu0 0
  %396 = vmatmul.mubr.bf16.gmra.mrb[0].mxu0 %v268
  %v397 = vpop.f32.mrb[0].mxu0
  %v398 = vadd.f32 %v98, %v397
  %v399 = vpop.f32.mrb[0].mxu0
  %v400 = vpop.f32.mrb[0].mxu0
  %v401 = vadd.f32 %v98, %v400
  %v402 = vpop.f32.mrb[0].mxu0
  %403 = vmatprep.mubr.bf16.mxu0 0
  %404 = vmatmul.mubr.bf16.gmra.mrb[0].mxu0 %v271
  %v405 = vpop.f32.mrb[0].mxu0
  %v406 = vadd.f32 %v98, %v405
  %v407 = vpop.f32.mrb[0].mxu0
  %v408 = vpop.f32.mrb[0].mxu0
  %v409 = vadd.f32 %v98, %v408
  %v410 = vpop.f32.mrb[0].mxu0
  %411 = vmatprep.mubr.bf16.mxu0 0
  %412 = vmatmul.mubr.bf16.gmra.mrb[0].mxu0 %v274
  %v413 = vpop.f32.mrb[0].mxu0
  %v414 = vadd.f32 %v98, %v413
  %v415 = vpop.f32.mrb[0].mxu0
  %v416 = vpop.f32.mrb[0].mxu0
  %v417 = vadd.f32 %v98, %v416
  %v418 = vpop.f32.mrb[0].mxu0
  %419 = vmatprep.mubr.bf16.mxu0 0
  %420 = vmatmul.mubr.bf16.gmra.mrb[0].mxu0 %v277
  %v421 = vpop.f32.mrb[0].mxu0
  %v422 = vadd.f32 %v98, %v421
  %v423 = vpop.f32.mrb[0].mxu0
  %v424 = vpop.f32.mrb[0].mxu0
  %v425 = vadd.f32 %v98, %v424
  %v426 = vpop.f32.mrb[0].mxu0
  %427 = vmatprep.mubr.bf16.mxu0 0
  %428 = vmatmul.mubr.bf16.gmra.mrb[0].mxu0 %v280
  %v429 = vpop.f32.mrb[0].mxu0
  %v430 = vadd.f32 %v98, %v429
  %v431 = vpop.f32.mrb[0].mxu0
  %v432 = vpop.f32.mrb[0].mxu0
  %v433 = vadd.f32 %v98, %v432
  %v434 = vpop.f32.mrb[0].mxu0
  %435 = vmatprep.mubr.bf16.mxu0 0
  %436 = vmatmul.mubr.bf16.gmra.mrb[0].mxu0 %v283
  %v437 = vpop.f32.mrb[0].mxu0
  %v438 = vadd.f32 %v98, %v437
  %v439 = vpop.f32.mrb[0].mxu0
  %v440 = vpop.f32.mrb[0].mxu0
  %v441 = vadd.f32 %v98, %v440
  %v442 = vpop.f32.mrb[0].mxu0
  %443 = vmatprep.mubr.bf16.mxu0 0
  %444 = vmatmul.mubr.bf16.gmra.mrb[0].mxu0 %v286
  %v445 = vpop.f32.mrb[0].mxu0
  %v446 = vadd.f32 %v98, %v445
  %v447 = vpop.f32.mrb[0].mxu0
  %v448 = vpop.f32.mrb[0].mxu0
  %v449 = vadd.f32 %v98, %v448
  %v450 = vpop.f32.mrb[0].mxu0
  %451 = vmatprep.mubr.bf16.mxu0 0
  %452 = vmatmul.mubr.bf16.gmra.mrb[0].mxu0 %v289
  %v453 = vpop.f32.mrb[0].mxu0
  %v454 = vadd.f32 %v98, %v453
  %v455 = vpop.f32.mrb[0].mxu0
  %v456 = vpop.f32.mrb[0].mxu0
  %v457 = vadd.f32 %v98, %v456
  %v458 = vpop.f32.mrb[0].mxu0
  %459 = vmatprep.mubr.bf16.mxu0 0
  %460 = vmatmul.mubr.bf16.gmra.mrb[0].mxu0 %v292
  %v461 = vpop.f32.mrb[0].mxu0
  %v462 = vadd.f32 %v98, %v461
  %v463 = vpop.f32.mrb[0].mxu0
  %v464 = vpop.f32.mrb[0].mxu0
  %v465 = vadd.f32 %v98, %v464
  %v466 = vpop.f32.mrb[0].mxu0
  %467 = vmatprep.mubr.bf16.mxu0 0
  %468 = vmatmul.mubr.bf16.gmra.mrb[0].mxu0 %v295
  %v469 = vpop.f32.mrb[0].mxu0
  %v470 = vadd.f32 %v98, %v469
  %v471 = vpop.f32.mrb[0].mxu0
  %v472 = vpop.f32.mrb[0].mxu0
  %v473 = vadd.f32 %v98, %v472
  %v474 = vpop.f32.mrb[0].mxu0
  %475 = vmatprep.mubr.bf16.mxu0 0
  %476 = vmatmul.mubr.bf16.gmra.mrb[0].mxu0 %v298
  %v477 = vpop.f32.mrb[0].mxu0
  %v478 = vadd.f32 %v98, %v477
  %v479 = vpop.f32.mrb[0].mxu0
  %v480 = vpop.f32.mrb[0].mxu0
  %v481 = vadd.f32 %v98, %v480
  %v482 = vpop.f32.mrb[0].mxu0
  %483 = vmatprep.mubr.bf16.mxu0 0
  %484 = vmatmul.mubr.bf16.gmra.mrb[0].mxu0 %v301
  %v485 = vpop.f32.mrb[0].mxu0
  %v486 = vadd.f32 %v98, %v485
  %v487 = vpop.f32.mrb[0].mxu0
  %v488 = vpop.f32.mrb[0].mxu0
  %v489 = vadd.f32 %v98, %v488
  %v490 = vpop.f32.mrb[0].mxu0
  %491 = vmatprep.mubr.bf16.mxu0 0
  %492 = vmatmul.mubr.bf16.gmra.mrb[0].mxu0 %v304
  %v493 = vpop.f32.mrb[0].mxu0
  %v494 = vadd.f32 %v98, %v493
  %v495 = vpop.f32.mrb[0].mxu0
  %v496 = vpop.f32.mrb[0].mxu0
  %v497 = vadd.f32 %v98, %v496
  %v498 = vpop.f32.mrb[0].mxu0
  %499 = vmatprep.mubr.bf16.mxu0 0
  %500 = vmatmul.mubr.bf16.gmra.mrb[0].mxu0 %v307
  %v501 = vpop.f32.mrb[0].mxu0
  %v502 = vadd.f32 %v98, %v501
  %v503 = vpop.f32.mrb[0].mxu0
  %v504 = vpop.f32.mrb[0].mxu0
  %v505 = vadd.f32 %v98, %v504
  %v506 = vpop.f32.mrb[0].mxu0
  %507 = vmatprep.mubr.bf16.mxu0 0
  %508 = vmatmul.mubr.bf16.gmra.mrb[0].mxu0 %v310
  %v509 = vpop.f32.mrb[0].mxu0
  %v510 = vadd.f32 %v98, %v509
  %v511 = vpop.f32.mrb[0].mxu0
  %v512 = vpop.f32.mrb[0].mxu0
  %v513 = vadd.f32 %v98, %v512
  %v514 = vpop.f32.mrb[0].mxu0
  %515 = vmatprep.mubr.bf16.mxu0 0
  %516 = vmatmul.mubr.bf16.gmra.mrb[0].mxu0 %v313
  %v517 = vpop.f32.mrb[0].mxu0
  %v518 = vadd.f32 %v98, %v517
  %v519 = vpop.f32.mrb[0].mxu0
  %v520 = vpop.f32.mrb[0].mxu0
  %v521 = vadd.f32 %v98, %v520
  %v522 = vpop.f32.mrb[0].mxu0
  %523 = vmatprep.mubr.bf16.mxu0 0
  %524 = vmatmul.mubr.bf16.gmra.mrb[0].mxu0 %v316
  %v525 = vpop.f32.mrb[0].mxu0
  %v526 = vadd.f32 %v98, %v525
  %v527 = vpop.f32.mrb[0].mxu0
  %v528 = vpop.f32.mrb[0].mxu0
  %v529 = vadd.f32 %v98, %v528
  %v530 = vpop.f32.mrb[0].mxu0
  %531 = vmatprep.mubr.bf16.mxu0 0
  %532 = vmatmul.mubr.bf16.gmra.mrb[0].mxu0 %v319
  %v533 = vpop.f32.mrb[0].mxu0
  %v534 = vadd.f32 %v98, %v533
  %v535 = vpop.f32.mrb[0].mxu0
  %v536 = vpop.f32.mrb[0].mxu0
  %v537 = vadd.f32 %v98, %v536
  %v538 = vpop.f32.mrb[0].mxu0
  %539 = vmatprep.mubr.bf16.mxu0 0
  %540 = vmatmul.mubr.bf16.gmra.mrb[0].mxu0 %v322
  %v541 = vpop.f32.mrb[0].mxu0
  %v542 = vadd.f32 %v98, %v541
  %v543 = vpop.f32.mrb[0].mxu0
  %v544 = vpop.f32.mrb[0].mxu0
  %v545 = vadd.f32 %v98, %v544
  %v546 = vpop.f32.mrb[0].mxu0
  %547 = vmatprep.mubr.bf16.mxu0 0
  %548 = vmatmul.mubr.bf16.gmra.mrb[0].mxu0 %v325
  %v549 = vpop.f32.mrb[0].mxu0
  %v550 = vadd.f32 %v98, %v549
  %v551 = vpop.f32.mrb[0].mxu0
  %v552 = vpop.f32.mrb[0].mxu0
  %v553 = vadd.f32 %v98, %v552
  %v554 = vpop.f32.mrb[0].mxu0
  %555 = vmatprep.mubr.bf16.mxu0 0
  %556 = vmatmul.mubr.bf16.gmra.mrb[0].mxu0 %v328
  %v557 = vpop.f32.mrb[0].mxu0
  %v558 = vadd.f32 %v98, %v557
  %v559 = vpop.f32.mrb[0].mxu0
  %v560 = vpop.f32.mrb[0].mxu0
  %v561 = vadd.f32 %v98, %v560
  %v562 = vpop.f32.mrb[0].mxu0
  %563 = vmatprep.mubr.bf16.mxu0 0
  %564 = vmatmul.mubr.bf16.gmra.mrb[0].mxu0 %v331
  %v565 = vpop.f32.mrb[0].mxu0
  %v566 = vadd.f32 %v98, %v565
  %v567 = vpop.f32.mrb[0].mxu0
  %v568 = vpop.f32.mrb[0].mxu0
  %v569 = vadd.f32 %v98, %v568
  %v570 = vpop.f32.mrb[0].mxu0
  %571 = vmatprep.mubr.bf16.mxu0 0
  %572 = vmatmul.mubr.bf16.gmra.mrb[0].mxu0 %v334
  %v573 = vpop.f32.mrb[0].mxu0
  %v574 = vadd.f32 %v98, %v573
  %v575 = vpop.f32.mrb[0].mxu0
  %v576 = vpop.f32.mrb[0].mxu0
  %v577 = vadd.f32 %v98, %v576
  %v578 = vpop.f32.mrb[0].mxu0
  %579 = vmatprep.mubr.bf16.mxu0 0
  %580 = vmatmul.mubr.bf16.gmra.mrb[0].mxu0 %v337
  %v581 = vpop.f32.mrb[0].mxu0
  %v582 = vadd.f32 %v98, %v581
  %v583 = vpop.f32.mrb[0].mxu0
  %v584 = vpop.f32.mrb[0].mxu0
  %v585 = vadd.f32 %v98, %v584
  %v586 = vpop.f32.mrb[0].mxu0
  %587 = vmatprep.mubr.bf16.mxu0 0
  %588 = vmatmul.mubr.bf16.gmra.mrb[0].mxu0 %v340
  %v589 = vpop.f32.mrb[0].mxu0
  %v590 = vadd.f32 %v98, %v589
  %v591 = vpop.f32.mrb[0].mxu0
  %v592 = vpop.f32.mrb[0].mxu0
  %v593 = vadd.f32 %v98, %v592
  %v594 = vpop.f32.mrb[0].mxu0
  %595 = vmatprep.mubr.bf16.mxu0 0
  %596 = vmatmul.mubr.bf16.gmra.mrb[0].mxu0 %v343
  %v597 = vpop.f32.mrb[0].mxu0
  %v598 = vadd.f32 %v98, %v597
  %v599 = vpop.f32.mrb[0].mxu0
  %v600 = vpop.f32.mrb[0].mxu0
  %v601 = vadd.f32 %v98, %v600
  %v602 = vpop.f32.mrb[0].mxu0
  %603 = vmatprep.mubr.bf16.mxu0 0
  %604 = vmatmul.mubr.bf16.gmra.mrb[0].mxu0 %v346
  %v605 = vpop.f32.mrb[0].mxu0
  %v606 = vadd.f32 %v98, %v605
  %v607 = vpop.f32.mrb[0].mxu0
  %v608 = vpop.f32.mrb[0].mxu0
  %v609 = vadd.f32 %v98, %v608
  %v610 = vpop.f32.mrb[0].mxu0
  %611 = vmatprep.mubr.bf16.mxu0 0
  %612 = vmatmul.mubr.bf16.gmra.mrb[0].mxu0 %v349
  %v613 = vpop.f32.mrb[0].mxu0
  %v614 = vadd.f32 %v98, %v613
  %v615 = vpop.f32.mrb[0].mxu0
  %v616 = vpop.f32.mrb[0].mxu0
  %v617 = vadd.f32 %v98, %v616
  %v618 = vpop.f32.mrb[0].mxu0
  %619 = vmatprep.mubr.bf16.mxu0 0
  %620 = vmatmul.mubr.bf16.gmra.mrb[0].mxu0 %v352
  %v621 = vpop.f32.mrb[0].mxu0
  %v622 = vadd.f32 %v98, %v621
  %v623 = vpop.f32.mrb[0].mxu0
  %v624 = vpop.f32.mrb[0].mxu0
  %v625 = vadd.f32 %v98, %v624
  %v626 = vpop.f32.mrb[0].mxu0
  %627 = vmatprep.mubr.bf16.mxu0 0
  %628 = vmatmul.mubr.bf16.gmra.mrb[0].mxu0 %v355
  %v629 = vpop.f32.mrb[0].mxu0
  %v630 = vadd.f32 %v98, %v629
  %v631 = vpop.f32.mrb[0].mxu0
  %v632 = vpop.f32.mrb[0].mxu0
  %v633 = vadd.f32 %v98, %v632
  %v634 = vpop.f32.mrb[0].mxu0
  %635 = vmatprep.mubr.bf16.mxu0 0
  %636 = vmatmul.mubr.bf16.gmra.mrb[0].mxu0 %v358
  %v637 = vpop.f32.mrb[0].mxu0
  %v638 = vadd.f32 %v98, %v637
  %v639 = vpop.f32.mrb[0].mxu0
  %v640 = vpop.f32.mrb[0].mxu0
  %v641 = vadd.f32 %v98, %v640
  %v642 = vpop.f32.mrb[0].mxu0
  %643 = vmatprep.mubr.bf16.mxu0 0
  %644 = vmatmul.mubr.bf16.gmra.mrb[0].mxu0 %v361
  %v645 = vpop.f32.mrb[0].mxu0
  %v646 = vadd.f32 %v98, %v645
  %v647 = vpop.f32.mrb[0].mxu0
  %v648 = vpop.f32.mrb[0].mxu0
  %v649 = vadd.f32 %v98, %v648
  %v650 = vpop.f32.mrb[0].mxu0
  %651 = vdwg.mxu0
  %v652 = vmax.f32 %v398, 0.0
  %v653 = vmax.f32 %v401, 0.0
  %v654 = vmax.f32 %v406, 0.0
  %v655 = vmax.f32 %v409, 0.0
  %v656 = vmax.f32 %v414, 0.0
  %v657 = vmax.f32 %v417, 0.0
  %v658 = vmax.f32 %v422, 0.0
  %v659 = vmax.f32 %v425, 0.0
  %v660 = vmax.f32 %v430, 0.0
  %v661 = vmax.f32 %v433, 0.0
  %v662 = vmax.f32 %v438, 0.0
  %v663 = vmax.f32 %v441, 0.0
  %v664 = vmax.f32 %v446, 0.0
  %v665 = vmax.f32 %v449, 0.0
  %v666 = vmax.f32 %v454, 0.0
  %v667 = vmax.f32 %v457, 0.0
  %v668 = vmax.f32 %v462, 0.0
  %v669 = vmax.f32 %v465, 0.0
  %v670 = vmax.f32 %v470, 0.0
  %v671 = vmax.f32 %v473, 0.0
  %v672 = vmax.f32 %v478, 0.0
  %v673 = vmax.f32 %v481, 0.0
  %v674 = vmax.f32 %v486, 0.0
  %v675 = vmax.f32 %v489, 0.0
  %v676 = vmax.f32 %v494, 0.0
  %v677 = vmax.f32 %v497, 0.0
  %v678 = vmax.f32 %v502, 0.0
  %v679 = vmax.f32 %v505, 0.0
  %v680 = vmax.f32 %v510, 0.0
  %v681 = vmax.f32 %v513, 0.0
  %v682 = vmax.f32 %v518, 0.0
  %v683 = vmax.f32 %v521, 0.0
  %v684 = vmax.f32 %v526, 0.0
  %v685 = vmax.f32 %v529, 0.0
  %v686 = vmax.f32 %v534, 0.0
  %v687 = vmax.f32 %v537, 0.0
  %v688 = vmax.f32 %v542, 0.0
  %v689 = vmax.f32 %v545, 0.0
  %v690 = vmax.f32 %v550, 0.0
  %v691 = vmax.f32 %v553, 0.0
  %v692 = vmax.f32 %v558, 0.0
  %v693 = vmax.f32 %v561, 0.0
  %v694 = vmax.f32 %v566, 0.0
  %v695 = vmax.f32 %v569, 0.0
  %v696 = vmax.f32 %v574, 0.0
  %v697 = vmax.f32 %v577, 0.0
  %v698 = vmax.f32 %v582, 0.0
  %v699 = vmax.f32 %v585, 0.0
  %v700 = vmax.f32 %v590, 0.0
  %v701 = vmax.f32 %v593, 0.0
  %v702 = vmax.f32 %v598, 0.0
  %v703 = vmax.f32 %v601, 0.0
  %v704 = vmax.f32 %v606, 0.0
  %v705 = vmax.f32 %v609, 0.0
  %v706 = vmax.f32 %v614, 0.0
  %v707 = vmax.f32 %v617, 0.0
  %v708 = vmax.f32 %v622, 0.0
  %v709 = vmax.f32 %v625, 0.0
  %v710 = vmax.f32 %v630, 0.0
  %v711 = vmax.f32 %v633, 0.0
  %v712 = vmax.f32 %v638, 0.0
  %v713 = vmax.f32 %v641, 0.0
  %v714 = vmax.f32 %v646, 0.0
  %v715 = vmax.f32 %v649, 0.0
  %vm716 = vcmask 31744
  %717 = vst.msk [vmem:[#allocation2] sm:$0xff] %vm716, 0.0
  %718 = vst.msk [vmem:[#allocation2 + $0x8] sm:$0xff] %vm716, 0.0
  %vm719 = vcmask 25600
  %720 = vst.msk [vmem:[#allocation2 + $0x10] sm:$0x3] %vm719, 0.0
  %721 = vst.msk [vmem:[#allocation2 + $0x1b0] sm:$0xff] %vm716, 0.0
  %722 = vst.msk [vmem:[#allocation2 + $0x1b8] sm:$0xff] %vm716, 0.0
  %723 = vst.msk [vmem:[#allocation2 + $0x1c0] sm:$0x3] %vm719, 0.0
  %s724 = scalar_lea.vmem [#allocation2], 408
  %725 = vst.msk [vmem:[%s724] sm:$0xff] %vm716, 0.0
  %726 = vst.msk [vmem:[%s724 + $0x8] sm:$0xff] %vm716, 0.0
  %727 = vst.msk [vmem:[%s724 + $0x10] sm:$0x3] %vm719, 0.0
  %728 = vst.msk [vmem:[%s724 + $0x1b0] sm:$0xff] %vm716, 0.0
  %729 = vst.msk [vmem:[%s724 + $0x1b8] sm:$0xff] %vm716, 0.0
  %730 = vst.msk [vmem:[%s724 + $0x1c0] sm:$0x3] %vm719, 0.0
  %vm731 = vcmask 24576
  %732 = vst.msk [vmem:[#allocation2] sm:$0x1] %vm731, 0.0
  %733 = vst.msk [vmem:[#allocation2 + $0x18] sm:$0x1] %vm731, 0.0
  %734 = vst.msk [vmem:[#allocation2 + $0x30] sm:$0x1] %vm731, 0.0
  %735 = vst.msk [vmem:[#allocation2 + $0x48] sm:$0x1] %vm731, 0.0
  %736 = vst.msk [vmem:[#allocation2 + $0x60] sm:$0x1] %vm731, 0.0
  %737 = vst.msk [vmem:[#allocation2 + $0x78] sm:$0x1] %vm731, 0.0
  %738 = vst.msk [vmem:[#allocation2 + $0x90] sm:$0x1] %vm731, 0.0
  %739 = vst.msk [vmem:[#allocation2 + $0xa8] sm:$0x1] %vm731, 0.0
  %740 = vst.msk [vmem:[#allocation2 + $0xc0] sm:$0x1] %vm731, 0.0
  %741 = vst.msk [vmem:[#allocation2 + $0xd8] sm:$0x1] %vm731, 0.0
  %742 = vst.msk [vmem:[#allocation2 + $0xf0] sm:$0x1] %vm731, 0.0
  %743 = vst.msk [vmem:[#allocation2 + $0x108] sm:$0x1] %vm731, 0.0
  %744 = vst.msk [vmem:[#allocation2 + $0x120] sm:$0x1] %vm731, 0.0
  %745 = vst.msk [vmem:[#allocation2 + $0x138] sm:$0x1] %vm731, 0.0
  %746 = vst.msk [vmem:[#allocation2 + $0x150] sm:$0x1] %vm731, 0.0
  %747 = vst.msk [vmem:[#allocation2 + $0x168] sm:$0x1] %vm731, 0.0
  %748 = vst.msk [vmem:[#allocation2 + $0x180] sm:$0x1] %vm731, 0.0
  %749 = vst.msk [vmem:[#allocation2 + $0x198] sm:$0x1] %vm731, 0.0
  %750 = vst.msk [vmem:[#allocation2 + $0x1b0] sm:$0x1] %vm731, 0.0
  %751 = vst.msk [vmem:[#allocation2 + $0x1c8] sm:$0x1] %vm731, 0.0
  %752 = vst.msk [vmem:[#allocation2 + $0x1e0] sm:$0x1] %vm731, 0.0
  %753 = vst.msk [vmem:[#allocation2 + $0x1f8] sm:$0x1] %vm731, 0.0
  %754 = vst.msk [vmem:[#allocation2 + $0x210] sm:$0x1] %vm731, 0.0
  %755 = vst.msk [vmem:[#allocation2 + $0x228] sm:$0x1] %vm731, 0.0
  %756 = vst.msk [vmem:[#allocation2 + $0x240] sm:$0x1] %vm731, 0.0
  %757 = vst.msk [vmem:[#allocation2 + $0x258] sm:$0x1] %vm731, 0.0
  %758 = vst.msk [vmem:[#allocation2 + $0x270] sm:$0x1] %vm731, 0.0
  %759 = vst.msk [vmem:[#allocation2 + $0x288] sm:$0x1] %vm731, 0.0
  %760 = vst.msk [vmem:[#allocation2 + $0x2a0] sm:$0x1] %vm731, 0.0
  %761 = vst.msk [vmem:[#allocation2 + $0x2b8] sm:$0x1] %vm731, 0.0
  %762 = vst.msk [vmem:[#allocation2 + $0x2d0] sm:$0x1] %vm731, 0.0
  %763 = vst.msk [vmem:[#allocation2 + $0x2e8] sm:$0x1] %vm731, 0.0
  %764 = vst.msk [vmem:[#allocation2 + $0x300] sm:$0x1] %vm731, 0.0
  %765 = vst.msk [vmem:[#allocation2 + $0x318] sm:$0x1] %vm731, 0.0
  %766 = vst.msk [vmem:[#allocation2 + $0x330] sm:$0x1] %vm731, 0.0
  %767 = vst.msk [vmem:[#allocation2 + $0x348] sm:$0x1] %vm731, 0.0
  %768 = vst.msk [vmem:[#allocation2 + $0x11] sm:$0x1] %vm731, 0.0
  %769 = vst.msk [vmem:[#allocation2 + $0x29] sm:$0x1] %vm731, 0.0
  %770 = vst.msk [vmem:[#allocation2 + $0x41] sm:$0x1] %vm731, 0.0
  %771 = vst.msk [vmem:[#allocation2 + $0x59] sm:$0x1] %vm731, 0.0
  %772 = vst.msk [vmem:[#allocation2 + $0x71] sm:$0x1] %vm731, 0.0
  %773 = vst.msk [vmem:[#allocation2 + $0x89] sm:$0x1] %vm731, 0.0
  %774 = vst.msk [vmem:[#allocation2 + $0xa1] sm:$0x1] %vm731, 0.0
  %775 = vst.msk [vmem:[#allocation2 + $0xb9] sm:$0x1] %vm731, 0.0
  %776 = vst.msk [vmem:[#allocation2 + $0xd1] sm:$0x1] %vm731, 0.0
  %777 = vst.msk [vmem:[#allocation2 + $0xe9] sm:$0x1] %vm731, 0.0
  %778 = vst.msk [vmem:[#allocation2 + $0x101] sm:$0x1] %vm731, 0.0
  %779 = vst.msk [vmem:[#allocation2 + $0x119] sm:$0x1] %vm731, 0.0
  %780 = vst.msk [vmem:[#allocation2 + $0x131] sm:$0x1] %vm731, 0.0
  %781 = vst.msk [vmem:[#allocation2 + $0x149] sm:$0x1] %vm731, 0.0
  %782 = vst.msk [vmem:[#allocation2 + $0x161] sm:$0x1] %vm731, 0.0
  %783 = vst.msk [vmem:[#allocation2 + $0x179] sm:$0x1] %vm731, 0.0
  %784 = vst.msk [vmem:[#allocation2 + $0x191] sm:$0x1] %vm731, 0.0
  %785 = vst.msk [vmem:[#allocation2 + $0x1a9] sm:$0x1] %vm731, 0.0
  %786 = vst.msk [vmem:[#allocation2 + $0x1c1] sm:$0x1] %vm731, 0.0
  %787 = vst.msk [vmem:[#allocation2 + $0x1d9] sm:$0x1] %vm731, 0.0
  %788 = vst.msk [vmem:[#allocation2 + $0x1f1] sm:$0x1] %vm731, 0.0
  %789 = vst.msk [vmem:[#allocation2 + $0x209] sm:$0x1] %vm731, 0.0
  %790 = vst.msk [vmem:[#allocation2 + $0x221] sm:$0x1] %vm731, 0.0
  %791 = vst.msk [vmem:[#allocation2 + $0x239] sm:$0x1] %vm731, 0.0
  %792 = vst.msk [vmem:[#allocation2 + $0x251] sm:$0x1] %vm731, 0.0
  %793 = vst.msk [vmem:[#allocation2 + $0x269] sm:$0x1] %vm731, 0.0
  %794 = vst.msk [vmem:[#allocation2 + $0x281] sm:$0x1] %vm731, 0.0
  %795 = vst.msk [vmem:[#allocation2 + $0x299] sm:$0x1] %vm731, 0.0
  %796 = vst.msk [vmem:[#allocation2 + $0x2b1] sm:$0x1] %vm731, 0.0
  %797 = vst.msk [vmem:[#allocation2 + $0x2c9] sm:$0x1] %vm731, 0.0
  %798 = vst.msk [vmem:[#allocation2 + $0x2e1] sm:$0x1] %vm731, 0.0
  %799 = vst.msk [vmem:[#allocation2 + $0x2f9] sm:$0x1] %vm731, 0.0
  %800 = vst.msk [vmem:[#allocation2 + $0x311] sm:$0x1] %vm731, 0.0
  %801 = vst.msk [vmem:[#allocation2 + $0x329] sm:$0x1] %vm731, 0.0
  %802 = vst.msk [vmem:[#allocation2 + $0x341] sm:$0x1] %vm731, 0.0
  %803 = vst.msk [vmem:[#allocation2 + $0x359] sm:$0x1] %vm731, 0.0
  %s804 = scalar_lea.vmem [#allocation2], 24
  %805 = vst.msk [vmem:[%s804 + $0x1] sm:$0xff] %vm716, %v652
  %806 = vst.msk [vmem:[%s804 + $0x9] sm:$0xff] %vm716, %v653
  %807 = vst.msk [vmem:[%s804 + $0x19] sm:$0xff] %vm716, %v654
  %808 = vst.msk [vmem:[%s804 + $0x21] sm:$0xff] %vm716, %v655
  %809 = vst.msk [vmem:[%s804 + $0x31] sm:$0xff] %vm716, %v656
  %810 = vst.msk [vmem:[%s804 + $0x39] sm:$0xff] %vm716, %v657
  %811 = vst.msk [vmem:[%s804 + $0x49] sm:$0xff] %vm716, %v658
  %812 = vst.msk [vmem:[%s804 + $0x51] sm:$0xff] %vm716, %v659
  %813 = vst.msk [vmem:[%s804 + $0x61] sm:$0xff] %vm716, %v660
  %814 = vst.msk [vmem:[%s804 + $0x69] sm:$0xff] %vm716, %v661
  %815 = vst.msk [vmem:[%s804 + $0x79] sm:$0xff] %vm716, %v662
  %816 = vst.msk [vmem:[%s804 + $0x81] sm:$0xff] %vm716, %v663
  %817 = vst.msk [vmem:[%s804 + $0x91] sm:$0xff] %vm716, %v664
  %818 = vst.msk [vmem:[%s804 + $0x99] sm:$0xff] %vm716, %v665
  %819 = vst.msk [vmem:[%s804 + $0xa9] sm:$0xff] %vm716, %v666
  %820 = vst.msk [vmem:[%s804 + $0xb1] sm:$0xff] %vm716, %v667
  %821 = vst.msk [vmem:[%s804 + $0xc1] sm:$0xff] %vm716, %v668
  %822 = vst.msk [vmem:[%s804 + $0xc9] sm:$0xff] %vm716, %v669
  %823 = vst.msk [vmem:[%s804 + $0xd9] sm:$0xff] %vm716, %v670
  %824 = vst.msk [vmem:[%s804 + $0xe1] sm:$0xff] %vm716, %v671
  %825 = vst.msk [vmem:[%s804 + $0xf1] sm:$0xff] %vm716, %v672
  %826 = vst.msk [vmem:[%s804 + $0xf9] sm:$0xff] %vm716, %v673
  %827 = vst.msk [vmem:[%s804 + $0x109] sm:$0xff] %vm716, %v674
  %828 = vst.msk [vmem:[%s804 + $0x111] sm:$0xff] %vm716, %v675
  %829 = vst.msk [vmem:[%s804 + $0x121] sm:$0xff] %vm716, %v676
  %830 = vst.msk [vmem:[%s804 + $0x129] sm:$0xff] %vm716, %v677
  %831 = vst.msk [vmem:[%s804 + $0x139] sm:$0xff] %vm716, %v678
  %832 = vst.msk [vmem:[%s804 + $0x141] sm:$0xff] %vm716, %v679
  %833 = vst.msk [vmem:[%s804 + $0x151] sm:$0xff] %vm716, %v680
  %834 = vst.msk [vmem:[%s804 + $0x159] sm:$0xff] %vm716, %v681
  %835 = vst.msk [vmem:[%s804 + $0x169] sm:$0xff] %vm716, %v682
  %836 = vst.msk [vmem:[%s804 + $0x171] sm:$0xff] %vm716, %v683
  %837 = vst.msk [vmem:[%s804 + $0x1b1] sm:$0xff] %vm716, %v684
  %838 = vst.msk [vmem:[%s804 + $0x1b9] sm:$0xff] %vm716, %v685
  %839 = vst.msk [vmem:[%s804 + $0x1c9] sm:$0xff] %vm716, %v686
  %840 = vst.msk [vmem:[%s804 + $0x1d1] sm:$0xff] %vm716, %v687
  %841 = vst.msk [vmem:[%s804 + $0x1e1] sm:$0xff] %vm716, %v688
  %842 = vst.msk [vmem:[%s804 + $0x1e9] sm:$0xff] %vm716, %v689
  %843 = vst.msk [vmem:[%s804 + $0x1f9] sm:$0xff] %vm716, %v690
  %844 = vst.msk [vmem:[%s804 + $0x201] sm:$0xff] %vm716, %v691
  %845 = vst.msk [vmem:[%s804 + $0x211] sm:$0xff] %vm716, %v692
  %846 = vst.msk [vmem:[%s804 + $0x219] sm:$0xff] %vm716, %v693
  %847 = vst.msk [vmem:[%s804 + $0x229] sm:$0xff] %vm716, %v694
  %848 = vst.msk [vmem:[%s804 + $0x231] sm:$0xff] %vm716, %v695
  %849 = vst.msk [vmem:[%s804 + $0x241] sm:$0xff] %vm716, %v696
  %850 = vst.msk [vmem:[%s804 + $0x249] sm:$0xff] %vm716, %v697
  %851 = vst.msk [vmem:[%s804 + $0x259] sm:$0xff] %vm716, %v698
  %852 = vst.msk [vmem:[%s804 + $0x261] sm:$0xff] %vm716, %v699
  %853 = vst.msk [vmem:[%s804 + $0x271] sm:$0xff] %vm716, %v700
  %854 = vst.msk [vmem:[%s804 + $0x279] sm:$0xff] %vm716, %v701
  %855 = vst.msk [vmem:[%s804 + $0x289] sm:$0xff] %vm716, %v702
  %856 = vst.msk [vmem:[%s804 + $0x291] sm:$0xff] %vm716, %v703
  %857 = vst.msk [vmem:[%s804 + $0x2a1] sm:$0xff] %vm716, %v704
  %858 = vst.msk [vmem:[%s804 + $0x2a9] sm:$0xff] %vm716, %v705
  %859 = vst.msk [vmem:[%s804 + $0x2b9] sm:$0xff] %vm716, %v706
  %860 = vst.msk [vmem:[%s804 + $0x2c1] sm:$0xff] %vm716, %v707
  %861 = vst.msk [vmem:[%s804 + $0x2d1] sm:$0xff] %vm716, %v708
  %862 = vst.msk [vmem:[%s804 + $0x2d9] sm:$0xff] %vm716, %v709
  %863 = vst.msk [vmem:[%s804 + $0x2e9] sm:$0xff] %vm716, %v710
  %864 = vst.msk [vmem:[%s804 + $0x2f1] sm:$0xff] %vm716, %v711
  %865 = vst.msk [vmem:[%s804 + $0x301] sm:$0xff] %vm716, %v712
  %866 = vst.msk [vmem:[%s804 + $0x309] sm:$0xff] %vm716, %v713
  %867 = vst.msk [vmem:[%s804 + $0x319] sm:$0xff] %vm716, %v714
  %868 = vst.msk [vmem:[%s804 + $0x321] sm:$0xff] %vm716, %v715
  %v869 = vld [vmem:[#allocation2] sm:$0xff]
  %v870 = vld [vmem:[#allocation2 + $0x8] sm:$0xff]
  %v871 = vld [vmem:[#allocation2 + $0x18] sm:$0xff]
  %v872 = vld [vmem:[#allocation2 + $0x20] sm:$0xff]
  %v873 = vld [vmem:[#allocation2 + $0x30] sm:$0xff]
  %v874 = vld [vmem:[#allocation2 + $0x38] sm:$0xff]
  %v875 = vld [vmem:[#allocation2 + $0x48] sm:$0xff]
  %v876 = vld [vmem:[#allocation2 + $0x50] sm:$0xff]
  %v877 = vld [vmem:[#allocation2 + $0x60] sm:$0xff]
  %v878 = vld [vmem:[#allocation2 + $0x68] sm:$0xff]
  %v879 = vld [vmem:[#allocation2 + $0x78] sm:$0xff]
  %v880 = vld [vmem:[#allocation2 + $0x80] sm:$0xff]
  %v881 = vld [vmem:[#allocation2 + $0x90] sm:$0xff]
  %v882 = vld [vmem:[#allocation2 + $0x98] sm:$0xff]
  %v883 = vld [vmem:[#allocation2 + $0xa8] sm:$0xff]
  %v884 = vld [vmem:[#allocation2 + $0xb0] sm:$0xff]
  %v885 = vld [vmem:[#allocation2 + $0xc0] sm:$0xff]
  %v886 = vld [vmem:[#allocation2 + $0xc8] sm:$0xff]
  %v887 = vld [vmem:[#allocation2 + $0xd8] sm:$0xff]
  %v888 = vld [vmem:[#allocation2 + $0xe0] sm:$0xff]
  %v889 = vld [vmem:[#allocation2 + $0xf0] sm:$0xff]
  %v890 = vld [vmem:[#allocation2 + $0xf8] sm:$0xff]
  %v891 = vld [vmem:[#allocation2 + $0x108] sm:$0xff]
  %v892 = vld [vmem:[#allocation2 + $0x110] sm:$0xff]
  %v893 = vld [vmem:[#allocation2 + $0x120] sm:$0xff]
  %v894 = vld [vmem:[#allocation2 + $0x128] sm:$0xff]
  %v895 = vld [vmem:[#allocation2 + $0x138] sm:$0xff]
  %v896 = vld [vmem:[#allocation2 + $0x140] sm:$0xff]
  %v897 = vld [vmem:[#allocation2 + $0x150] sm:$0xff]
  %v898 = vld [vmem:[#allocation2 + $0x158] sm:$0xff]
  %v899 = vld [vmem:[#allocation2 + $0x168] sm:$0xff]
  %v900 = vld [vmem:[#allocation2 + $0x170] sm:$0xff]
  %v901 = vld [vmem:[#allocation2 + $0x1b0] sm:$0xff]
  %v902 = vld [vmem:[#allocation2 + $0x1b8] sm:$0xff]
  %v903 = vld [vmem:[#allocation2 + $0x1c8] sm:$0xff]
  %v904 = vld [vmem:[#allocation2 + $0x1d0] sm:$0xff]
  %v905 = vld [vmem:[#allocation2 + $0x1e0] sm:$0xff]
  %v906 = vld [vmem:[#allocation2 + $0x1e8] sm:$0xff]
  %v907 = vld [vmem:[#allocation2 + $0x1f8] sm:$0xff]
  %v908 = vld [vmem:[#allocation2 + $0x200] sm:$0xff]
  %v909 = vld [vmem:[#allocation2 + $0x210] sm:$0xff]
  %v910 = vld [vmem:[#allocation2 + $0x218] sm:$0xff]
  %v911 = vld [vmem:[#allocation2 + $0x228] sm:$0xff]
  %v912 = vld [vmem:[#allocation2 + $0x230] sm:$0xff]
  %v913 = vld [vmem:[#allocation2 + $0x240] sm:$0xff]
  %v914 = vld [vmem:[#allocation2 + $0x248] sm:$0xff]
  %v915 = vld [vmem:[#allocation2 + $0x258] sm:$0xff]
  %v916 = vld [vmem:[#allocation2 + $0x260] sm:$0xff]
  %v917 = vld [vmem:[#allocation2 + $0x270] sm:$0xff]
  %v918 = vld [vmem:[#allocation2 + $0x278] sm:$0xff]
  %v919 = vld [vmem:[#allocation2 + $0x288] sm:$0xff]
  %v920 = vld [vmem:[#allocation2 + $0x290] sm:$0xff]
  %v921 = vld [vmem:[#allocation2 + $0x2a0] sm:$0xff]
  %v922 = vld [vmem:[#allocation2 + $0x2a8] sm:$0xff]
  %v923 = vld [vmem:[#allocation2 + $0x2b8] sm:$0xff]
  %v924 = vld [vmem:[#allocation2 + $0x2c0] sm:$0xff]
  %v925 = vld [vmem:[#allocation2 + $0x2d0] sm:$0xff]
  %v926 = vld [vmem:[#allocation2 + $0x2d8] sm:$0xff]
  %v927 = vld [vmem:[#allocation2 + $0x2e8] sm:$0xff]
  %v928 = vld [vmem:[#allocation2 + $0x2f0] sm:$0xff]
  %v929 = vld [vmem:[#allocation2 + $0x300] sm:$0xff]
  %v930 = vld [vmem:[#allocation2 + $0x308] sm:$0xff]
  %v931 = vld [vmem:[#allocation2 + $0x318] sm:$0xff]
  %v932 = vld [vmem:[#allocation2 + $0x320] sm:$0xff]
  %v933 = vld [vmem:[#allocation2 + $0x1] sm:$0xff]
  %v934 = vld [vmem:[#allocation2 + $0x9] sm:$0xff]
  %v935 = vld [vmem:[#allocation2 + $0x19] sm:$0xff]
  %v936 = vld [vmem:[#allocation2 + $0x21] sm:$0xff]
  %v937 = vld [vmem:[#allocation2 + $0x31] sm:$0xff]
  %v938 = vld [vmem:[#allocation2 + $0x39] sm:$0xff]
  %v939 = vld [vmem:[#allocation2 + $0x49] sm:$0xff]
  %v940 = vld [vmem:[#allocation2 + $0x51] sm:$0xff]
  %v941 = vld [vmem:[#allocation2 + $0x61] sm:$0xff]
  %v942 = vld [vmem:[#allocation2 + $0x69] sm:$0xff]
  %v943 = vld [vmem:[#allocation2 + $0x79] sm:$0xff]
  %v944 = vld [vmem:[#allocation2 + $0x81] sm:$0xff]
  %v945 = vld [vmem:[#allocation2 + $0x91] sm:$0xff]
  %v946 = vld [vmem:[#allocation2 + $0x99] sm:$0xff]
  %v947 = vld [vmem:[#allocation2 + $0xa9] sm:$0xff]
  %v948 = vld [vmem:[#allocation2 + $0xb1] sm:$0xff]
  %v949 = vld [vmem:[#allocation2 + $0xc1] sm:$0xff]
  %v950 = vld [vmem:[#allocation2 + $0xc9] sm:$0xff]
  %v951 = vld [vmem:[#allocation2 + $0xd9] sm:$0xff]
  %v952 = vld [vmem:[#allocation2 + $0xe1] sm:$0xff]
  %v953 = vld [vmem:[#allocation2 + $0xf1] sm:$0xff]
  %v954 = vld [vmem:[#allocation2 + $0xf9] sm:$0xff]
  %v955 = vld [vmem:[#allocation2 + $0x109] sm:$0xff]
  %v956 = vld [vmem:[#allocation2 + $0x111] sm:$0xff]
  %v957 = vld [vmem:[#allocation2 + $0x121] sm:$0xff]
  %v958 = vld [vmem:[#allocation2 + $0x129] sm:$0xff]
  %v959 = vld [vmem:[#allocation2 + $0x139] sm:$0xff]
  %v960 = vld [vmem:[#allocation2 + $0x141] sm:$0xff]
  %v961 = vld [vmem:[#allocation2 + $0x151] sm:$0xff]
  %v962 = vld [vmem:[#allocation2 + $0x159] sm:$0xff]
  %v963 = vld [vmem:[#allocation2 + $0x169] sm:$0xff]
  %v964 = vld [vmem:[#allocation2 + $0x171] sm:$0xff]
  %v965 = vld [vmem:[#allocation2 + $0x1b1] sm:$0xff]
  %v966 = vld [vmem:[#allocation2 + $0x1b9] sm:$0xff]
  %v967 = vld [vmem:[#allocation2 + $0x1c9] sm:$0xff]
  %v968 = vld [vmem:[#allocation2 + $0x1d1] sm:$0xff]
  %v969 = vld [vmem:[#allocation2 + $0x1e1] sm:$0xff]
  %v970 = vld [vmem:[#allocation2 + $0x1e9] sm:$0xff]
  %v971 = vld [vmem:[#allocation2 + $0x1f9] sm:$0xff]
  %v972 = vld [vmem:[#allocation2 + $0x201] sm:$0xff]
  %v973 = vld [vmem:[#allocation2 + $0x211] sm:$0xff]
  %v974 = vld [vmem:[#allocation2 + $0x219] sm:$0xff]
  %v975 = vld [vmem:[#allocation2 + $0x229] sm:$0xff]
  %v976 = vld [vmem:[#allocation2 + $0x231] sm:$0xff]
  %v977 = vld [vmem:[#allocation2 + $0x241] sm:$0xff]
  %v978 = vld [vmem:[#allocation2 + $0x249] sm:$0xff]
  %v979 = vld [vmem:[#allocation2 + $0x259] sm:$0xff]
  %v980 = vld [vmem:[#allocation2 + $0x261] sm:$0xff]
  %v981 = vld [vmem:[#allocation2 + $0x271] sm:$0xff]
  %v982 = vld [vmem:[#allocation2 + $0x279] sm:$0xff]
  %v983 = vld [vmem:[#allocation2 + $0x289] sm:$0xff]
  %v984 = vld [vmem:[#allocation2 + $0x291] sm:$0xff]
  %v985 = vld [vmem:[#allocation2 + $0x2a1] sm:$0xff]
  %v986 = vld [vmem:[#allocation2 + $0x2a9] sm:$0xff]
  %v987 = vld [vmem:[#allocation2 + $0x2b9] sm:$0xff]
  %v988 = vld [vmem:[#allocation2 + $0x2c1] sm:$0xff]
  %v989 = vld [vmem:[#allocation2 + $0x2d1] sm:$0xff]
  %v990 = vld [vmem:[#allocation2 + $0x2d9] sm:$0xff]
  %v991 = vld [vmem:[#allocation2 + $0x2e9] sm:$0xff]
  %v992 = vld [vmem:[#allocation2 + $0x2f1] sm:$0xff]
  %v993 = vld [vmem:[#allocation2 + $0x301] sm:$0xff]
  %v994 = vld [vmem:[#allocation2 + $0x309] sm:$0xff]
  %v995 = vld [vmem:[#allocation2 + $0x319] sm:$0xff]
  %v996 = vld [vmem:[#allocation2 + $0x321] sm:$0xff]
  %v997 = vld [vmem:[#allocation2 + $0x2] sm:$0xff]
  %v998 = vld [vmem:[#allocation2 + $0xa] sm:$0xff]
  %v999 = vld [vmem:[#allocation2 + $0x1a] sm:$0xff]
  %v1000 = vld [vmem:[#allocation2 + $0x22] sm:$0xff]
  %v1001 = vld [vmem:[#allocation2 + $0x32] sm:$0xff]
  %v1002 = vld [vmem:[#allocation2 + $0x3a] sm:$0xff]
  %v1003 = vld [vmem:[#allocation2 + $0x4a] sm:$0xff]
  %v1004 = vld [vmem:[#allocation2 + $0x52] sm:$0xff]
  %v1005 = vld [vmem:[#allocation2 + $0x62] sm:$0xff]
  %v1006 = vld [vmem:[#allocation2 + $0x6a] sm:$0xff]
  %v1007 = vld [vmem:[#allocation2 + $0x7a] sm:$0xff]
  %v1008 = vld [vmem:[#allocation2 + $0x82] sm:$0xff]
  %v1009 = vld [vmem:[#allocation2 + $0x92] sm:$0xff]
  %v1010 = vld [vmem:[#allocation2 + $0x9a] sm:$0xff]
  %v1011 = vld [vmem:[#allocation2 + $0xaa] sm:$0xff]
  %v1012 = vld [vmem:[#allocation2 + $0xb2] sm:$0xff]
  %v1013 = vld [vmem:[#allocation2 + $0xc2] sm:$0xff]
  %v1014 = vld [vmem:[#allocation2 + $0xca] sm:$0xff]
  %v1015 = vld [vmem:[#allocation2 + $0xda] sm:$0xff]
  %v1016 = vld [vmem:[#allocation2 + $0xe2] sm:$0xff]
  %v1017 = vld [vmem:[#allocation2 + $0xf2] sm:$0xff]
  %v1018 = vld [vmem:[#allocation2 + $0xfa] sm:$0xff]
  %v1019 = vld [vmem:[#allocation2 + $0x10a] sm:$0xff]
  %v1020 = vld [vmem:[#allocation2 + $0x112] sm:$0xff]
  %v1021 = vld [vmem:[#allocation2 + $0x122] sm:$0xff]
  %v1022 = vld [vmem:[#allocation2 + $0x12a] sm:$0xff]
  %v1023 = vld [vmem:[#allocation2 + $0x13a] sm:$0xff]
  %v1024 = vld [vmem:[#allocation2 + $0x142] sm:$0xff]
  %v1025 = vld [vmem:[#allocation2 + $0x152] sm:$0xff]
  %v1026 = vld [vmem:[#allocation2 + $0x15a] sm:$0xff]
  %v1027 = vld [vmem:[#allocation2 + $0x16a] sm:$0xff]
  %v1028 = vld [vmem:[#allocation2 + $0x172] sm:$0xff]
  %v1029 = vld [vmem:[#allocation2 + $0x1b2] sm:$0xff]
  %v1030 = vld [vmem:[#allocation2 + $0x1ba] sm:$0xff]
  %v1031 = vld [vmem:[#allocation2 + $0x1ca] sm:$0xff]
  %v1032 = vld [vmem:[#allocation2 + $0x1d2] sm:$0xff]
  %v1033 = vld [vmem:[#allocation2 + $0x1e2] sm:$0xff]
  %v1034 = vld [vmem:[#allocation2 + $0x1ea] sm:$0xff]
  %v1035 = vld [vmem:[#allocation2 + $0x1fa] sm:$0xff]
  %v1036 = vld [vmem:[#allocation2 + $0x202] sm:$0xff]
  %v1037 = vld [vmem:[#allocation2 + $0x212] sm:$0xff]
  %v1038 = vld [vmem:[#allocation2 + $0x21a] sm:$0xff]
  %v1039 = vld [vmem:[#allocation2 + $0x22a] sm:$0xff]
  %v1040 = vld [vmem:[#allocation2 + $0x232] sm:$0xff]
  %v1041 = vld [vmem:[#allocation2 + $0x242] sm:$0xff]
  %v1042 = vld [vmem:[#allocation2 + $0x24a] sm:$0xff]
  %v1043 = vld [vmem:[#allocation2 + $0x25a] sm:$0xff]
  %v1044 = vld [vmem:[#allocation2 + $0x262] sm:$0xff]
  %v1045 = vld [vmem:[#allocation2 + $0x272] sm:$0xff]
  %v1046 = vld [vmem:[#allocation2 + $0x27a] sm:$0xff]
  %v1047 = vld [vmem:[#allocation2 + $0x28a] sm:$0xff]
  %v1048 = vld [vmem:[#allocation2 + $0x292] sm:$0xff]
  %v1049 = vld [vmem:[#allocation2 + $0x2a2] sm:$0xff]
  %v1050 = vld [vmem:[#allocation2 + $0x2aa] sm:$0xff]
  %v1051 = vld [vmem:[#allocation2 + $0x2ba] sm:$0xff]
  %v1052 = vld [vmem:[#allocation2 + $0x2c2] sm:$0xff]
  %v1053 = vld [vmem:[#allocation2 + $0x2d2] sm:$0xff]
  %v1054 = vld [vmem:[#allocation2 + $0x2da] sm:$0xff]
  %v1055 = vld [vmem:[#allocation2 + $0x2ea] sm:$0xff]
  %v1056 = vld [vmem:[#allocation2 + $0x2f2] sm:$0xff]
  %v1057 = vld [vmem:[#allocation2 + $0x302] sm:$0xff]
  %v1058 = vld [vmem:[#allocation2 + $0x30a] sm:$0xff]
  %v1059 = vld [vmem:[#allocation2 + $0x31a] sm:$0xff]
  %v1060 = vld [vmem:[#allocation2 + $0x322] sm:$0xff]
  %v1061 = vld [vmem:[%s804] sm:$0xff]
  %v1062 = vld [vmem:[%s804 + $0x8] sm:$0xff]
  %v1063 = vld [vmem:[%s804 + $0x18] sm:$0xff]
  %v1064 = vld [vmem:[%s804 + $0x20] sm:$0xff]
  %v1065 = vld [vmem:[%s804 + $0x30] sm:$0xff]
  %v1066 = vld [vmem:[%s804 + $0x38] sm:$0xff]
  %v1067 = vld [vmem:[%s804 + $0x48] sm:$0xff]
  %v1068 = vld [vmem:[%s804 + $0x50] sm:$0xff]
  %v1069 = vld [vmem:[%s804 + $0x60] sm:$0xff]
  %v1070 = vld [vmem:[%s804 + $0x68] sm:$0xff]
  %v1071 = vld [vmem:[%s804 + $0x78] sm:$0xff]
  %v1072 = vld [vmem:[%s804 + $0x80] sm:$0xff]
  %v1073 = vld [vmem:[%s804 + $0x90] sm:$0xff]
  %v1074 = vld [vmem:[%s804 + $0x98] sm:$0xff]
  %v1075 = vld [vmem:[%s804 + $0xa8] sm:$0xff]
  %v1076 = vld [vmem:[%s804 + $0xb0] sm:$0xff]
  %v1077 = vld [vmem:[%s804 + $0xc0] sm:$0xff]
  %v1078 = vld [vmem:[%s804 + $0xc8] sm:$0xff]
  %v1079 = vld [vmem:[%s804 + $0xd8] sm:$0xff]
  %v1080 = vld [vmem:[%s804 + $0xe0] sm:$0xff]
  %v1081 = vld [vmem:[%s804 + $0xf0] sm:$0xff]
  %v1082 = vld [vmem:[%s804 + $0xf8] sm:$0xff]
  %v1083 = vld [vmem:[%s804 + $0x108] sm:$0xff]
  %v1084 = vld [vmem:[%s804 + $0x110] sm:$0xff]
  %v1085 = vld [vmem:[%s804 + $0x120] sm:$0xff]
  %v1086 = vld [vmem:[%s804 + $0x128] sm:$0xff]
  %v1087 = vld [vmem:[%s804 + $0x138] sm:$0xff]
  %v1088 = vld [vmem:[%s804 + $0x140] sm:$0xff]
  %v1089 = vld [vmem:[%s804 + $0x150] sm:$0xff]
  %v1090 = vld [vmem:[%s804 + $0x158] sm:$0xff]
  %v1091 = vld [vmem:[%s804 + $0x168] sm:$0xff]
  %v1092 = vld [vmem:[%s804 + $0x170] sm:$0xff]
  %v1093 = vld [vmem:[%s804 + $0x1b0] sm:$0xff]
  %v1094 = vld [vmem:[%s804 + $0x1b8] sm:$0xff]
  %v1095 = vld [vmem:[%s804 + $0x1c8] sm:$0xff]
  %v1096 = vld [vmem:[%s804 + $0x1d0] sm:$0xff]
  %v1097 = vld [vmem:[%s804 + $0x1e0] sm:$0xff]
  %v1098 = vld [vmem:[%s804 + $0x1e8] sm:$0xff]
  %v1099 = vld [vmem:[%s804 + $0x1f8] sm:$0xff]
  %v1100 = vld [vmem:[%s804 + $0x200] sm:$0xff]
  %v1101 = vld [vmem:[%s804 + $0x210] sm:$0xff]
  %v1102 = vld [vmem:[%s804 + $0x218] sm:$0xff]
  %v1103 = vld [vmem:[%s804 + $0x228] sm:$0xff]
  %v1104 = vld [vmem:[%s804 + $0x230] sm:$0xff]
  %v1105 = vld [vmem:[%s804 + $0x240] sm:$0xff]
  %v1106 = vld [vmem:[%s804 + $0x248] sm:$0xff]
  %v1107 = vld [vmem:[%s804 + $0x258] sm:$0xff]
  %v1108 = vld [vmem:[%s804 + $0x260] sm:$0xff]
  %v1109 = vld [vmem:[%s804 + $0x270] sm:$0xff]
  %v1110 = vld [vmem:[%s804 + $0x278] sm:$0xff]
  %v1111 = vld [vmem:[%s804 + $0x288] sm:$0xff]
  %v1112 = vld [vmem:[%s804 + $0x290] sm:$0xff]
  %v1113 = vld [vmem:[%s804 + $0x2a0] sm:$0xff]
  %v1114 = vld [vmem:[%s804 + $0x2a8] sm:$0xff]
  %v1115 = vld [vmem:[%s804 + $0x2b8] sm:$0xff]
  %v1116 = vld [vmem:[%s804 + $0x2c0] sm:$0xff]
  %v1117 = vld [vmem:[%s804 + $0x2d0] sm:$0xff]
  %v1118 = vld [vmem:[%s804 + $0x2d8] sm:$0xff]
  %v1119 = vld [vmem:[%s804 + $0x2e8] sm:$0xff]
  %v1120 = vld [vmem:[%s804 + $0x2f0] sm:$0xff]
  %v1121 = vld [vmem:[%s804 + $0x300] sm:$0xff]
  %v1122 = vld [vmem:[%s804 + $0x308] sm:$0xff]
  %v1123 = vld [vmem:[%s804 + $0x318] sm:$0xff]
  %v1124 = vld [vmem:[%s804 + $0x320] sm:$0xff]
  %v1125 = vld [vmem:[%s804 + $0x1] sm:$0xff]
  %v1126 = vld [vmem:[%s804 + $0x9] sm:$0xff]
  %v1127 = vld [vmem:[%s804 + $0x19] sm:$0xff]
  %v1128 = vld [vmem:[%s804 + $0x21] sm:$0xff]
  %v1129 = vld [vmem:[%s804 + $0x31] sm:$0xff]
  %v1130 = vld [vmem:[%s804 + $0x39] sm:$0xff]
  %v1131 = vld [vmem:[%s804 + $0x49] sm:$0xff]
  %v1132 = vld [vmem:[%s804 + $0x51] sm:$0xff]
  %v1133 = vld [vmem:[%s804 + $0x61] sm:$0xff]
  %v1134 = vld [vmem:[%s804 + $0x69] sm:$0xff]
  %v1135 = vld [vmem:[%s804 + $0x79] sm:$0xff]
  %v1136 = vld [vmem:[%s804 + $0x81] sm:$0xff]
  %v1137 = vld [vmem:[%s804 + $0x91] sm:$0xff]
  %v1138 = vld [vmem:[%s804 + $0x99] sm:$0xff]
  %v1139 = vld [vmem:[%s804 + $0xa9] sm:$0xff]
  %v1140 = vld [vmem:[%s804 + $0xb1] sm:$0xff]
  %v1141 = vld [vmem:[%s804 + $0xc1] sm:$0xff]
  %v1142 = vld [vmem:[%s804 + $0xc9] sm:$0xff]
  %v1143 = vld [vmem:[%s804 + $0xd9] sm:$0xff]
  %v1144 = vld [vmem:[%s804 + $0xe1] sm:$0xff]
  %v1145 = vld [vmem:[%s804 + $0xf1] sm:$0xff]
  %v1146 = vld [vmem:[%s804 + $0xf9] sm:$0xff]
  %v1147 = vld [vmem:[%s804 + $0x109] sm:$0xff]
  %v1148 = vld [vmem:[%s804 + $0x111] sm:$0xff]
  %v1149 = vld [vmem:[%s804 + $0x121] sm:$0xff]
  %v1150 = vld [vmem:[%s804 + $0x129] sm:$0xff]
  %v1151 = vld [vmem:[%s804 + $0x139] sm:$0xff]
  %v1152 = vld [vmem:[%s804 + $0x141] sm:$0xff]
  %v1153 = vld [vmem:[%s804 + $0x151] sm:$0xff]
  %v1154 = vld [vmem:[%s804 + $0x159] sm:$0xff]
  %v1155 = vld [vmem:[%s804 + $0x169] sm:$0xff]
  %v1156 = vld [vmem:[%s804 + $0x171] sm:$0xff]
  %v1157 = vld [vmem:[%s804 + $0x1b1] sm:$0xff]
  %v1158 = vld [vmem:[%s804 + $0x1b9] sm:$0xff]
  %v1159 = vld [vmem:[%s804 + $0x1c9] sm:$0xff]
  %v1160 = vld [vmem:[%s804 + $0x1d1] sm:$0xff]
  %v1161 = vld [vmem:[%s804 + $0x1e1] sm:$0xff]
  %v1162 = vld [vmem:[%s804 + $0x1e9] sm:$0xff]
  %v1163 = vld [vmem:[%s804 + $0x1f9] sm:$0xff]
  %v1164 = vld [vmem:[%s804 + $0x201] sm:$0xff]
  %v1165 = vld [vmem:[%s804 + $0x211] sm:$0xff]
  %v1166 = vld [vmem:[%s804 + $0x219] sm:$0xff]
  %v1167 = vld [vmem:[%s804 + $0x229] sm:$0xff]
  %v1168 = vld [vmem:[%s804 + $0x231] sm:$0xff]
  %v1169 = vld [vmem:[%s804 + $0x241] sm:$0xff]
  %v1170 = vld [vmem:[%s804 + $0x249] sm:$0xff]
  %v1171 = vld [vmem:[%s804 + $0x259] sm:$0xff]
  %v1172 = vld [vmem:[%s804 + $0x261] sm:$0xff]
  %v1173 = vld [vmem:[%s804 + $0x271] sm:$0xff]
  %v1174 = vld [vmem:[%s804 + $0x279] sm:$0xff]
  %v1175 = vld [vmem:[%s804 + $0x289] sm:$0xff]
  %v1176 = vld [vmem:[%s804 + $0x291] sm:$0xff]
  %v1177 = vld [vmem:[%s804 + $0x2a1] sm:$0xff]
  %v1178 = vld [vmem:[%s804 + $0x2a9] sm:$0xff]
  %v1179 = vld [vmem:[%s804 + $0x2b9] sm:$0xff]
  %v1180 = vld [vmem:[%s804 + $0x2c1] sm:$0xff]
  %v1181 = vld [vmem:[%s804 + $0x2d1] sm:$0xff]
  %v1182 = vld [vmem:[%s804 + $0x2d9] sm:$0xff]
  %v1183 = vld [vmem:[%s804 + $0x2e9] sm:$0xff]
  %v1184 = vld [vmem:[%s804 + $0x2f1] sm:$0xff]
  %v1185 = vld [vmem:[%s804 + $0x301] sm:$0xff]
  %v1186 = vld [vmem:[%s804 + $0x309] sm:$0xff]
  %v1187 = vld [vmem:[%s804 + $0x319] sm:$0xff]
  %v1188 = vld [vmem:[%s804 + $0x321] sm:$0xff]
  %v1189 = vld [vmem:[%s804 + $0x2] sm:$0xff]
  %v1190 = vld [vmem:[%s804 + $0xa] sm:$0xff]
  %v1191 = vld [vmem:[%s804 + $0x1a] sm:$0xff]
  %v1192 = vld [vmem:[%s804 + $0x22] sm:$0xff]
  %v1193 = vld [vmem:[%s804 + $0x32] sm:$0xff]
  %v1194 = vld [vmem:[%s804 + $0x3a] sm:$0xff]
  %v1195 = vld [vmem:[%s804 + $0x4a] sm:$0xff]
  %v1196 = vld [vmem:[%s804 + $0x52] sm:$0xff]
  %v1197 = vld [vmem:[%s804 + $0x62] sm:$0xff]
  %v1198 = vld [vmem:[%s804 + $0x6a] sm:$0xff]
  %v1199 = vld [vmem:[%s804 + $0x7a] sm:$0xff]
  %v1200 = vld [vmem:[%s804 + $0x82] sm:$0xff]
  %v1201 = vld [vmem:[%s804 + $0x92] sm:$0xff]
  %v1202 = vld [vmem:[%s804 + $0x9a] sm:$0xff]
  %v1203 = vld [vmem:[%s804 + $0xaa] sm:$0xff]
  %v1204 = vld [vmem:[%s804 + $0xb2] sm:$0xff]
  %v1205 = vld [vmem:[%s804 + $0xc2] sm:$0xff]
  %v1206 = vld [vmem:[%s804 + $0xca] sm:$0xff]
  %v1207 = vld [vmem:[%s804 + $0xda] sm:$0xff]
  %v1208 = vld [vmem:[%s804 + $0xe2] sm:$0xff]
  %v1209 = vld [vmem:[%s804 + $0xf2] sm:$0xff]
  %v1210 = vld [vmem:[%s804 + $0xfa] sm:$0xff]
  %v1211 = vld [vmem:[%s804 + $0x10a] sm:$0xff]
  %v1212 = vld [vmem:[%s804 + $0x112] sm:$0xff]
  %v1213 = vld [vmem:[%s804 + $0x122] sm:$0xff]
  %v1214 = vld [vmem:[%s804 + $0x12a] sm:$0xff]
  %v1215 = vld [vmem:[%s804 + $0x13a] sm:$0xff]
  %v1216 = vld [vmem:[%s804 + $0x142] sm:$0xff]
  %v1217 = vld [vmem:[%s804 + $0x152] sm:$0xff]
  %v1218 = vld [vmem:[%s804 + $0x15a] sm:$0xff]
  %v1219 = vld [vmem:[%s804 + $0x16a] sm:$0xff]
  %v1220 = vld [vmem:[%s804 + $0x172] sm:$0xff]
  %v1221 = vld [vmem:[%s804 + $0x1b2] sm:$0xff]
  %v1222 = vld [vmem:[%s804 + $0x1ba] sm:$0xff]
  %v1223 = vld [vmem:[%s804 + $0x1ca] sm:$0xff]
  %v1224 = vld [vmem:[%s804 + $0x1d2] sm:$0xff]
  %v1225 = vld [vmem:[%s804 + $0x1e2] sm:$0xff]
  %v1226 = vld [vmem:[%s804 + $0x1ea] sm:$0xff]
  %v1227 = vld [vmem:[%s804 + $0x1fa] sm:$0xff]
  %v1228 = vld [vmem:[%s804 + $0x202] sm:$0xff]
  %v1229 = vld [vmem:[%s804 + $0x212] sm:$0xff]
  %v1230 = vld [vmem:[%s804 + $0x21a] sm:$0xff]
  %v1231 = vld [vmem:[%s804 + $0x22a] sm:$0xff]
  %v1232 = vld [vmem:[%s804 + $0x232] sm:$0xff]
  %v1233 = vld [vmem:[%s804 + $0x242] sm:$0xff]
  %v1234 = vld [vmem:[%s804 + $0x24a] sm:$0xff]
  %v1235 = vld [vmem:[%s804 + $0x25a] sm:$0xff]
  %v1236 = vld [vmem:[%s804 + $0x262] sm:$0xff]
  %v1237 = vld [vmem:[%s804 + $0x272] sm:$0xff]
  %v1238 = vld [vmem:[%s804 + $0x27a] sm:$0xff]
  %v1239 = vld [vmem:[%s804 + $0x28a] sm:$0xff]
  %v1240 = vld [vmem:[%s804 + $0x292] sm:$0xff]
  %v1241 = vld [vmem:[%s804 + $0x2a2] sm:$0xff]
  %v1242 = vld [vmem:[%s804 + $0x2aa] sm:$0xff]
  %v1243 = vld [vmem:[%s804 + $0x2ba] sm:$0xff]
  %v1244 = vld [vmem:[%s804 + $0x2c2] sm:$0xff]
  %v1245 = vld [vmem:[%s804 + $0x2d2] sm:$0xff]
  %v1246 = vld [vmem:[%s804 + $0x2da] sm:$0xff]
  %v1247 = vld [vmem:[%s804 + $0x2ea] sm:$0xff]
  %v1248 = vld [vmem:[%s804 + $0x2f2] sm:$0xff]
  %v1249 = vld [vmem:[%s804 + $0x302] sm:$0xff]
  %v1250 = vld [vmem:[%s804 + $0x30a] sm:$0xff]
  %v1251 = vld [vmem:[%s804 + $0x31a] sm:$0xff]
  %v1252 = vld [vmem:[%s804 + $0x322] sm:$0xff]
  %s1253 = scalar_lea.vmem [#allocation2], 48
  %v1254 = vld [vmem:[%s1253] sm:$0xff]
  %v1255 = vld [vmem:[%s1253 + $0x8] sm:$0xff]
  %v1256 = vld [vmem:[%s1253 + $0x18] sm:$0xff]
  %v1257 = vld [vmem:[%s1253 + $0x20] sm:$0xff]
  %v1258 = vld [vmem:[%s1253 + $0x30] sm:$0xff]
  %v1259 = vld [vmem:[%s1253 + $0x38] sm:$0xff]
  %v1260 = vld [vmem:[%s1253 + $0x48] sm:$0xff]
  %v1261 = vld [vmem:[%s1253 + $0x50] sm:$0xff]
  %v1262 = vld [vmem:[%s1253 + $0x60] sm:$0xff]
  %v1263 = vld [vmem:[%s1253 + $0x68] sm:$0xff]
  %v1264 = vld [vmem:[%s1253 + $0x78] sm:$0xff]
  %v1265 = vld [vmem:[%s1253 + $0x80] sm:$0xff]
  %v1266 = vld [vmem:[%s1253 + $0x90] sm:$0xff]
  %v1267 = vld [vmem:[%s1253 + $0x98] sm:$0xff]
  %v1268 = vld [vmem:[%s1253 + $0xa8] sm:$0xff]
  %v1269 = vld [vmem:[%s1253 + $0xb0] sm:$0xff]
  %v1270 = vld [vmem:[%s1253 + $0xc0] sm:$0xff]
  %v1271 = vld [vmem:[%s1253 + $0xc8] sm:$0xff]
  %v1272 = vld [vmem:[%s1253 + $0xd8] sm:$0xff]
  %v1273 = vld [vmem:[%s1253 + $0xe0] sm:$0xff]
  %v1274 = vld [vmem:[%s1253 + $0xf0] sm:$0xff]
  %v1275 = vld [vmem:[%s1253 + $0xf8] sm:$0xff]
  %v1276 = vld [vmem:[%s1253 + $0x108] sm:$0xff]
  %v1277 = vld [vmem:[%s1253 + $0x110] sm:$0xff]
  %v1278 = vld [vmem:[%s1253 + $0x120] sm:$0xff]
  %v1279 = vld [vmem:[%s1253 + $0x128] sm:$0xff]
  %v1280 = vld [vmem:[%s1253 + $0x138] sm:$0xff]
  %v1281 = vld [vmem:[%s1253 + $0x140] sm:$0xff]
  %v1282 = vld [vmem:[%s1253 + $0x150] sm:$0xff]
  %v1283 = vld [vmem:[%s1253 + $0x158] sm:$0xff]
  %v1284 = vld [vmem:[%s1253 + $0x168] sm:$0xff]
  %v1285 = vld [vmem:[%s1253 + $0x170] sm:$0xff]
  %v1286 = vld [vmem:[%s1253 + $0x1b0] sm:$0xff]
  %v1287 = vld [vmem:[%s1253 + $0x1b8] sm:$0xff]
  %v1288 = vld [vmem:[%s1253 + $0x1c8] sm:$0xff]
  %v1289 = vld [vmem:[%s1253 + $0x1d0] sm:$0xff]
  %v1290 = vld [vmem:[%s1253 + $0x1e0] sm:$0xff]
  %v1291 = vld [vmem:[%s1253 + $0x1e8] sm:$0xff]
  %v1292 = vld [vmem:[%s1253 + $0x1f8] sm:$0xff]
  %v1293 = vld [vmem:[%s1253 + $0x200] sm:$0xff]
  %v1294 = vld [vmem:[%s1253 + $0x210] sm:$0xff]
  %v1295 = vld [vmem:[%s1253 + $0x218] sm:$0xff]
  %v1296 = vld [vmem:[%s1253 + $0x228] sm:$0xff]
  %v1297 = vld [vmem:[%s1253 + $0x230] sm:$0xff]
  %v1298 = vld [vmem:[%s1253 + $0x240] sm:$0xff]
  %v1299 = vld [vmem:[%s1253 + $0x248] sm:$0xff]
  %v1300 = vld [vmem:[%s1253 + $0x258] sm:$0xff]
  %v1301 = vld [vmem:[%s1253 + $0x260] sm:$0xff]
  %v1302 = vld [vmem:[%s1253 + $0x270] sm:$0xff]
  %v1303 = vld [vmem:[%s1253 + $0x278] sm:$0xff]
  %v1304 = vld [vmem:[%s1253 + $0x288] sm:$0xff]
  %v1305 = vld [vmem:[%s1253 + $0x290] sm:$0xff]
  %v1306 = vld [vmem:[%s1253 + $0x2a0] sm:$0xff]
  %v1307 = vld [vmem:[%s1253 + $0x2a8] sm:$0xff]
  %v1308 = vld [vmem:[%s1253 + $0x2b8] sm:$0xff]
  %v1309 = vld [vmem:[%s1253 + $0x2c0] sm:$0xff]
  %v1310 = vld [vmem:[%s1253 + $0x2d0] sm:$0xff]
  %v1311 = vld [vmem:[%s1253 + $0x2d8] sm:$0xff]
  %v1312 = vld [vmem:[%s1253 + $0x2e8] sm:$0xff]
  %v1313 = vld [vmem:[%s1253 + $0x2f0] sm:$0xff]
  %v1314 = vld [vmem:[%s1253 + $0x300] sm:$0xff]
  %v1315 = vld [vmem:[%s1253 + $0x308] sm:$0xff]
  %v1316 = vld [vmem:[%s1253 + $0x318] sm:$0xff]
  %v1317 = vld [vmem:[%s1253 + $0x320] sm:$0xff]
  %v1318 = vld [vmem:[%s1253 + $0x1] sm:$0xff]
  %v1319 = vld [vmem:[%s1253 + $0x9] sm:$0xff]
  %v1320 = vld [vmem:[%s1253 + $0x19] sm:$0xff]
  %v1321 = vld [vmem:[%s1253 + $0x21] sm:$0xff]
  %v1322 = vld [vmem:[%s1253 + $0x31] sm:$0xff]
  %v1323 = vld [vmem:[%s1253 + $0x39] sm:$0xff]
  %v1324 = vld [vmem:[%s1253 + $0x49] sm:$0xff]
  %v1325 = vld [vmem:[%s1253 + $0x51] sm:$0xff]
  %v1326 = vld [vmem:[%s1253 + $0x61] sm:$0xff]
  %v1327 = vld [vmem:[%s1253 + $0x69] sm:$0xff]
  %v1328 = vld [vmem:[%s1253 + $0x79] sm:$0xff]
  %v1329 = vld [vmem:[%s1253 + $0x81] sm:$0xff]
  %v1330 = vld [vmem:[%s1253 + $0x91] sm:$0xff]
  %v1331 = vld [vmem:[%s1253 + $0x99] sm:$0xff]
  %v1332 = vld [vmem:[%s1253 + $0xa9] sm:$0xff]
  %v1333 = vld [vmem:[%s1253 + $0xb1] sm:$0xff]
  %v1334 = vld [vmem:[%s1253 + $0xc1] sm:$0xff]
  %v1335 = vld [vmem:[%s1253 + $0xc9] sm:$0xff]
  %v1336 = vld [vmem:[%s1253 + $0xd9] sm:$0xff]
  %v1337 = vld [vmem:[%s1253 + $0xe1] sm:$0xff]
  %v1338 = vld [vmem:[%s1253 + $0xf1] sm:$0xff]
  %v1339 = vld [vmem:[%s1253 + $0xf9] sm:$0xff]
  %v1340 = vld [vmem:[%s1253 + $0x109] sm:$0xff]
  %v1341 = vld [vmem:[%s1253 + $0x111] sm:$0xff]
  %v1342 = vld [vmem:[%s1253 + $0x121] sm:$0xff]
  %v1343 = vld [vmem:[%s1253 + $0x129] sm:$0xff]
  %v1344 = vld [vmem:[%s1253 + $0x139] sm:$0xff]
  %v1345 = vld [vmem:[%s1253 + $0x141] sm:$0xff]
  %v1346 = vld [vmem:[%s1253 + $0x151] sm:$0xff]
  %v1347 = vld [vmem:[%s1253 + $0x159] sm:$0xff]
  %v1348 = vld [vmem:[%s1253 + $0x169] sm:$0xff]
  %v1349 = vld [vmem:[%s1253 + $0x171] sm:$0xff]
  %v1350 = vld [vmem:[%s1253 + $0x1b1] sm:$0xff]
  %v1351 = vld [vmem:[%s1253 + $0x1b9] sm:$0xff]
  %v1352 = vld [vmem:[%s1253 + $0x1c9] sm:$0xff]
  %v1353 = vld [vmem:[%s1253 + $0x1d1] sm:$0xff]
  %v1354 = vld [vmem:[%s1253 + $0x1e1] sm:$0xff]
  %v1355 = vld [vmem:[%s1253 + $0x1e9] sm:$0xff]
  %v1356 = vld [vmem:[%s1253 + $0x1f9] sm:$0xff]
  %v1357 = vld [vmem:[%s1253 + $0x201] sm:$0xff]
  %v1358 = vld [vmem:[%s1253 + $0x211] sm:$0xff]
  %v1359 = vld [vmem:[%s1253 + $0x219] sm:$0xff]
  %v1360 = vld [vmem:[%s1253 + $0x229] sm:$0xff]
  %v1361 = vld [vmem:[%s1253 + $0x231] sm:$0xff]
  %v1362 = vld [vmem:[%s1253 + $0x241] sm:$0xff]
  %v1363 = vld [vmem:[%s1253 + $0x249] sm:$0xff]
  %v1364 = vld [vmem:[%s1253 + $0x259] sm:$0xff]
  %v1365 = vld [vmem:[%s1253 + $0x261] sm:$0xff]
  %v1366 = vld [vmem:[%s1253 + $0x271] sm:$0xff]
  %v1367 = vld [vmem:[%s1253 + $0x279] sm:$0xff]
  %v1368 = vld [vmem:[%s1253 + $0x289] sm:$0xff]
  %v1369 = vld [vmem:[%s1253 + $0x291] sm:$0xff]
  %v1370 = vld [vmem:[%s1253 + $0x2a1] sm:$0xff]
  %v1371 = vld [vmem:[%s1253 + $0x2a9] sm:$0xff]
  %v1372 = vld [vmem:[%s1253 + $0x2b9] sm:$0xff]
  %v1373 = vld [vmem:[%s1253 + $0x2c1] sm:$0xff]
  %v1374 = vld [vmem:[%s1253 + $0x2d1] sm:$0xff]
  %v1375 = vld [vmem:[%s1253 + $0x2d9] sm:$0xff]
  %v1376 = vld [vmem:[%s1253 + $0x2e9] sm:$0xff]
  %v1377 = vld [vmem:[%s1253 + $0x2f1] sm:$0xff]
  %v1378 = vld [vmem:[%s1253 + $0x301] sm:$0xff]
  %v1379 = vld [vmem:[%s1253 + $0x309] sm:$0xff]
  %v1380 = vld [vmem:[%s1253 + $0x319] sm:$0xff]
  %v1381 = vld [vmem:[%s1253 + $0x321] sm:$0xff]
  %v1382 = vld [vmem:[%s1253 + $0x2] sm:$0xff]
  %v1383 = vld [vmem:[%s1253 + $0xa] sm:$0xff]
  %v1384 = vld [vmem:[%s1253 + $0x1a] sm:$0xff]
  %v1385 = vld [vmem:[%s1253 + $0x22] sm:$0xff]
  %v1386 = vld [vmem:[%s1253 + $0x32] sm:$0xff]
  %v1387 = vld [vmem:[%s1253 + $0x3a] sm:$0xff]
  %v1388 = vld [vmem:[%s1253 + $0x4a] sm:$0xff]
  %v1389 = vld [vmem:[%s1253 + $0x52] sm:$0xff]
  %v1390 = vld [vmem:[%s1253 + $0x62] sm:$0xff]
  %v1391 = vld [vmem:[%s1253 + $0x6a] sm:$0xff]
  %v1392 = vld [vmem:[%s1253 + $0x7a] sm:$0xff]
  %v1393 = vld [vmem:[%s1253 + $0x82] sm:$0xff]
  %v1394 = vld [vmem:[%s1253 + $0x92] sm:$0xff]
  %v1395 = vld [vmem:[%s1253 + $0x9a] sm:$0xff]
  %v1396 = vld [vmem:[%s1253 + $0xaa] sm:$0xff]
  %v1397 = vld [vmem:[%s1253 + $0xb2] sm:$0xff]
  %v1398 = vld [vmem:[%s1253 + $0xc2] sm:$0xff]
  %v1399 = vld [vmem:[%s1253 + $0xca] sm:$0xff]
  %v1400 = vld [vmem:[%s1253 + $0xda] sm:$0xff]
  %v1401 = vld [vmem:[%s1253 + $0xe2] sm:$0xff]
  %v1402 = vld [vmem:[%s1253 + $0xf2] sm:$0xff]
  %v1403 = vld [vmem:[%s1253 + $0xfa] sm:$0xff]
  %v1404 = vld [vmem:[%s1253 + $0x10a] sm:$0xff]
  %v1405 = vld [vmem:[%s1253 + $0x112] sm:$0xff]
  %v1406 = vld [vmem:[%s1253 + $0x122] sm:$0xff]
  %v1407 = vld [vmem:[%s1253 + $0x12a] sm:$0xff]
  %v1408 = vld [vmem:[%s1253 + $0x13a] sm:$0xff]
  %v1409 = vld [vmem:[%s1253 + $0x142] sm:$0xff]
  %v1410 = vld [vmem:[%s1253 + $0x152] sm:$0xff]
  %v1411 = vld [vmem:[%s1253 + $0x15a] sm:$0xff]
  %v1412 = vld [vmem:[%s1253 + $0x16a] sm:$0xff]
  %v1413 = vld [vmem:[%s1253 + $0x172] sm:$0xff]
  %v1414 = vld [vmem:[%s1253 + $0x1b2] sm:$0xff]
  %v1415 = vld [vmem:[%s1253 + $0x1ba] sm:$0xff]
  %v1416 = vld [vmem:[%s1253 + $0x1ca] sm:$0xff]
  %v1417 = vld [vmem:[%s1253 + $0x1d2] sm:$0xff]
  %v1418 = vld [vmem:[%s1253 + $0x1e2] sm:$0xff]
  %v1419 = vld [vmem:[%s1253 + $0x1ea] sm:$0xff]
  %v1420 = vld [vmem:[%s1253 + $0x1fa] sm:$0xff]
  %v1421 = vld [vmem:[%s1253 + $0x202] sm:$0xff]
  %v1422 = vld [vmem:[%s1253 + $0x212] sm:$0xff]
  %v1423 = vld [vmem:[%s1253 + $0x21a] sm:$0xff]
  %v1424 = vld [vmem:[%s1253 + $0x22a] sm:$0xff]
  %v1425 = vld [vmem:[%s1253 + $0x232] sm:$0xff]
  %v1426 = vld [vmem:[%s1253 + $0x242] sm:$0xff]
  %v1427 = vld [vmem:[%s1253 + $0x24a] sm:$0xff]
  %v1428 = vld [vmem:[%s1253 + $0x25a] sm:$0xff]
  %v1429 = vld [vmem:[%s1253 + $0x262] sm:$0xff]
  %v1430 = vld [vmem:[%s1253 + $0x272] sm:$0xff]
  %v1431 = vld [vmem:[%s1253 + $0x27a] sm:$0xff]
  %v1432 = vld [vmem:[%s1253 + $0x28a] sm:$0xff]
  %v1433 = vld [vmem:[%s1253 + $0x292] sm:$0xff]
  %v1434 = vld [vmem:[%s1253 + $0x2a2] sm:$0xff]
  %v1435 = vld [vmem:[%s1253 + $0x2aa] sm:$0xff]
  %v1436 = vld [vmem:[%s1253 + $0x2ba] sm:$0xff]
  %v1437 = vld [vmem:[%s1253 + $0x2c2] sm:$0xff]
  %v1438 = vld [vmem:[%s1253 + $0x2d2] sm:$0xff]
  %v1439 = vld [vmem:[%s1253 + $0x2da] sm:$0xff]
  %v1440 = vld [vmem:[%s1253 + $0x2ea] sm:$0xff]
  %v1441 = vld [vmem:[%s1253 + $0x2f2] sm:$0xff]
  %v1442 = vld [vmem:[%s1253 + $0x302] sm:$0xff]
  %v1443 = vld [vmem:[%s1253 + $0x30a] sm:$0xff]
  %v1444 = vld [vmem:[%s1253 + $0x31a] sm:$0xff]
  %v1445 = vld [vmem:[%s1253 + $0x322] sm:$0xff]
  %1510 = vrot.lane.b32.xlu0 %v933, 4
  %v1511 = vpop.permute.xlu0 %1510
  %1512 = vrot.lane.b32.xlu0 %v934, 4
  %v1513 = vpop.permute.xlu0 %1512
  %1514 = vrot.lane.b32.xlu0 %v935, 4
  %v1515 = vpop.permute.xlu0 %1514
  %1516 = vrot.lane.b32.xlu0 %v936, 4
  %v1517 = vpop.permute.xlu0 %1516
  %1518 = vrot.lane.b32.xlu0 %v937, 4
  %v1519 = vpop.permute.xlu0 %1518
  %1520 = vrot.lane.b32.xlu0 %v938, 4
  %v1521 = vpop.permute.xlu0 %1520
  %1522 = vrot.lane.b32.xlu0 %v939, 4
  %v1523 = vpop.permute.xlu0 %1522
  %1524 = vrot.lane.b32.xlu0 %v940, 4
  %v1525 = vpop.permute.xlu0 %1524
  %1526 = vrot.lane.b32.xlu0 %v941, 4
  %v1527 = vpop.permute.xlu0 %1526
  %1528 = vrot.lane.b32.xlu0 %v942, 4
  %v1529 = vpop.permute.xlu0 %1528
  %1530 = vrot.lane.b32.xlu0 %v943, 4
  %v1531 = vpop.permute.xlu0 %1530
  %1532 = vrot.lane.b32.xlu0 %v944, 4
  %v1533 = vpop.permute.xlu0 %1532
  %1534 = vrot.lane.b32.xlu0 %v945, 4
  %v1535 = vpop.permute.xlu0 %1534
  %1536 = vrot.lane.b32.xlu0 %v946, 4
  %v1537 = vpop.permute.xlu0 %1536
  %1538 = vrot.lane.b32.xlu0 %v947, 4
  %v1539 = vpop.permute.xlu0 %1538
  %1540 = vrot.lane.b32.xlu0 %v948, 4
  %v1541 = vpop.permute.xlu0 %1540
  %1542 = vrot.lane.b32.xlu0 %v949, 4
  %v1543 = vpop.permute.xlu0 %1542
  %1544 = vrot.lane.b32.xlu0 %v950, 4
  %v1545 = vpop.permute.xlu0 %1544
  %1546 = vrot.lane.b32.xlu0 %v951, 4
  %v1547 = vpop.permute.xlu0 %1546
  %1548 = vrot.lane.b32.xlu0 %v952, 4
  %v1549 = vpop.permute.xlu0 %1548
  %1550 = vrot.lane.b32.xlu0 %v953, 4
  %v1551 = vpop.permute.xlu0 %1550
  %1552 = vrot.lane.b32.xlu0 %v954, 4
  %v1553 = vpop.permute.xlu0 %1552
  %1554 = vrot.lane.b32.xlu0 %v955, 4
  %v1555 = vpop.permute.xlu0 %1554
  %1556 = vrot.lane.b32.xlu0 %v956, 4
  %v1557 = vpop.permute.xlu0 %1556
  %1558 = vrot.lane.b32.xlu0 %v957, 4
  %v1559 = vpop.permute.xlu0 %1558
  %1560 = vrot.lane.b32.xlu0 %v958, 4
  %v1561 = vpop.permute.xlu0 %1560
  %1562 = vrot.lane.b32.xlu0 %v959, 4
  %v1563 = vpop.permute.xlu0 %1562
  %1564 = vrot.lane.b32.xlu0 %v960, 4
  %v1565 = vpop.permute.xlu0 %1564
  %1566 = vrot.lane.b32.xlu0 %v961, 4
  %v1567 = vpop.permute.xlu0 %1566
  %1568 = vrot.lane.b32.xlu0 %v962, 4
  %v1569 = vpop.permute.xlu0 %1568
  %1570 = vrot.lane.b32.xlu0 %v963, 4
  %v1571 = vpop.permute.xlu0 %1570
  %1572 = vrot.lane.b32.xlu0 %v964, 4
  %v1573 = vpop.permute.xlu0 %1572
  %1574 = vrot.lane.b32.xlu0 %v965, 4
  %v1575 = vpop.permute.xlu0 %1574
  %1576 = vrot.lane.b32.xlu0 %v966, 4
  %v1577 = vpop.permute.xlu0 %1576
  %1578 = vrot.lane.b32.xlu0 %v967, 4
  %v1579 = vpop.permute.xlu0 %1578
  %1580 = vrot.lane.b32.xlu0 %v968, 4
  %v1581 = vpop.permute.xlu0 %1580
  %1582 = vrot.lane.b32.xlu0 %v969, 4
  %v1583 = vpop.permute.xlu0 %1582
  %1584 = vrot.lane.b32.xlu0 %v970, 4
  %v1585 = vpop.permute.xlu0 %1584
  %1586 = vrot.lane.b32.xlu0 %v971, 4
  %v1587 = vpop.permute.xlu0 %1586
  %1588 = vrot.lane.b32.xlu0 %v972, 4
  %v1589 = vpop.permute.xlu0 %1588
  %1590 = vrot.lane.b32.xlu0 %v973, 4
  %v1591 = vpop.permute.xlu0 %1590
  %1592 = vrot.lane.b32.xlu0 %v974, 4
  %v1593 = vpop.permute.xlu0 %1592
  %1594 = vrot.lane.b32.xlu0 %v975, 4
  %v1595 = vpop.permute.xlu0 %1594
  %1596 = vrot.lane.b32.xlu0 %v976, 4
  %v1597 = vpop.permute.xlu0 %1596
  %1598 = vrot.lane.b32.xlu0 %v977, 4
  %v1599 = vpop.permute.xlu0 %1598
  %1600 = vrot.lane.b32.xlu0 %v978, 4
  %v1601 = vpop.permute.xlu0 %1600
  %1602 = vrot.lane.b32.xlu0 %v979, 4
  %v1603 = vpop.permute.xlu0 %1602
  %1604 = vrot.lane.b32.xlu0 %v980, 4
  %v1605 = vpop.permute.xlu0 %1604
  %1606 = vrot.lane.b32.xlu0 %v981, 4
  %v1607 = vpop.permute.xlu0 %1606
  %1608 = vrot.lane.b32.xlu0 %v982, 4
  %v1609 = vpop.permute.xlu0 %1608
  %1610 = vrot.lane.b32.xlu0 %v983, 4
  %v1611 = vpop.permute.xlu0 %1610
  %1612 = vrot.lane.b32.xlu0 %v984, 4
  %v1613 = vpop.permute.xlu0 %1612
  %1614 = vrot.lane.b32.xlu0 %v985, 4
  %v1615 = vpop.permute.xlu0 %1614
  %1616 = vrot.lane.b32.xlu0 %v986, 4
  %v1617 = vpop.permute.xlu0 %1616
  %1618 = vrot.lane.b32.xlu0 %v987, 4
  %v1619 = vpop.permute.xlu0 %1618
  %1620 = vrot.lane.b32.xlu0 %v988, 4
  %v1621 = vpop.permute.xlu0 %1620
  %1622 = vrot.lane.b32.xlu0 %v989, 4
  %v1623 = vpop.permute.xlu0 %1622
  %1624 = vrot.lane.b32.xlu0 %v990, 4
  %v1625 = vpop.permute.xlu0 %1624
  %1626 = vrot.lane.b32.xlu0 %v991, 4
  %v1627 = vpop.permute.xlu0 %1626
  %1628 = vrot.lane.b32.xlu0 %v992, 4
  %v1629 = vpop.permute.xlu0 %1628
  %1630 = vrot.lane.b32.xlu0 %v993, 4
  %v1631 = vpop.permute.xlu0 %1630
  %1632 = vrot.lane.b32.xlu0 %v994, 4
  %v1633 = vpop.permute.xlu0 %1632
  %1634 = vrot.lane.b32.xlu0 %v995, 4
  %v1635 = vpop.permute.xlu0 %1634
  %1636 = vrot.lane.b32.xlu0 %v996, 4
  %v1637 = vpop.permute.xlu0 %1636
  %1766 = vrot.lane.b32.xlu0 %v997, 8
  %v1767 = vpop.permute.xlu0 %1766
  %1768 = vrot.lane.b32.xlu0 %v998, 8
  %v1769 = vpop.permute.xlu0 %1768
  %1770 = vrot.lane.b32.xlu0 %v999, 8
  %v1771 = vpop.permute.xlu0 %1770
  %1772 = vrot.lane.b32.xlu0 %v1000, 8
  %v1773 = vpop.permute.xlu0 %1772
  %1774 = vrot.lane.b32.xlu0 %v1001, 8
  %v1775 = vpop.permute.xlu0 %1774
  %1776 = vrot.lane.b32.xlu0 %v1002, 8
  %v1777 = vpop.permute.xlu0 %1776
  %1778 = vrot.lane.b32.xlu0 %v1003, 8
  %v1779 = vpop.permute.xlu0 %1778
  %1780 = vrot.lane.b32.xlu0 %v1004, 8
  %v1781 = vpop.permute.xlu0 %1780
  %1782 = vrot.lane.b32.xlu0 %v1005, 8
  %v1783 = vpop.permute.xlu0 %1782
  %1784 = vrot.lane.b32.xlu0 %v1006, 8
  %v1785 = vpop.permute.xlu0 %1784
  %1786 = vrot.lane.b32.xlu0 %v1007, 8
  %v1787 = vpop.permute.xlu0 %1786
  %1788 = vrot.lane.b32.xlu0 %v1008, 8
  %v1789 = vpop.permute.xlu0 %1788
  %1790 = vrot.lane.b32.xlu0 %v1009, 8
  %v1791 = vpop.permute.xlu0 %1790
  %1792 = vrot.lane.b32.xlu0 %v1010, 8
  %v1793 = vpop.permute.xlu0 %1792
  %1794 = vrot.lane.b32.xlu0 %v1011, 8
  %v1795 = vpop.permute.xlu0 %1794
  %1796 = vrot.lane.b32.xlu0 %v1012, 8
  %v1797 = vpop.permute.xlu0 %1796
  %1798 = vrot.lane.b32.xlu0 %v1013, 8
  %v1799 = vpop.permute.xlu0 %1798
  %1800 = vrot.lane.b32.xlu0 %v1014, 8
  %v1801 = vpop.permute.xlu0 %1800
  %1802 = vrot.lane.b32.xlu0 %v1015, 8
  %v1803 = vpop.permute.xlu0 %1802
  %1804 = vrot.lane.b32.xlu0 %v1016, 8
  %v1805 = vpop.permute.xlu0 %1804
  %1806 = vrot.lane.b32.xlu0 %v1017, 8
  %v1807 = vpop.permute.xlu0 %1806
  %1808 = vrot.lane.b32.xlu0 %v1018, 8
  %v1809 = vpop.permute.xlu0 %1808
  %1810 = vrot.lane.b32.xlu0 %v1019, 8
  %v1811 = vpop.permute.xlu0 %1810
  %1812 = vrot.lane.b32.xlu0 %v1020, 8
  %v1813 = vpop.permute.xlu0 %1812
  %1814 = vrot.lane.b32.xlu0 %v1021, 8
  %v1815 = vpop.permute.xlu0 %1814
  %1816 = vrot.lane.b32.xlu0 %v1022, 8
  %v1817 = vpop.permute.xlu0 %1816
  %1818 = vrot.lane.b32.xlu0 %v1023, 8
  %v1819 = vpop.permute.xlu0 %1818
  %1820 = vrot.lane.b32.xlu0 %v1024, 8
  %v1821 = vpop.permute.xlu0 %1820
  %1822 = vrot.lane.b32.xlu0 %v1025, 8
  %v1823 = vpop.permute.xlu0 %1822
  %1824 = vrot.lane.b32.xlu0 %v1026, 8
  %v1825 = vpop.permute.xlu0 %1824
  %1826 = vrot.lane.b32.xlu0 %v1027, 8
  %v1827 = vpop.permute.xlu0 %1826
  %1828 = vrot.lane.b32.xlu0 %v1028, 8
  %v1829 = vpop.permute.xlu0 %1828
  %1830 = vrot.lane.b32.xlu0 %v1029, 8
  %v1831 = vpop.permute.xlu0 %1830
  %1832 = vrot.lane.b32.xlu0 %v1030, 8
  %v1833 = vpop.permute.xlu0 %1832
  %1834 = vrot.lane.b32.xlu0 %v1031, 8
  %v1835 = vpop.permute.xlu0 %1834
  %1836 = vrot.lane.b32.xlu0 %v1032, 8
  %v1837 = vpop.permute.xlu0 %1836
  %1838 = vrot.lane.b32.xlu0 %v1033, 8
  %v1839 = vpop.permute.xlu0 %1838
  %1840 = vrot.lane.b32.xlu0 %v1034, 8
  %v1841 = vpop.permute.xlu0 %1840
  %1842 = vrot.lane.b32.xlu0 %v1035, 8
  %v1843 = vpop.permute.xlu0 %1842
  %1844 = vrot.lane.b32.xlu0 %v1036, 8
  %v1845 = vpop.permute.xlu0 %1844
  %1846 = vrot.lane.b32.xlu0 %v1037, 8
  %v1847 = vpop.permute.xlu0 %1846
  %1848 = vrot.lane.b32.xlu0 %v1038, 8
  %v1849 = vpop.permute.xlu0 %1848
  %1850 = vrot.lane.b32.xlu0 %v1039, 8
  %v1851 = vpop.permute.xlu0 %1850
  %1852 = vrot.lane.b32.xlu0 %v1040, 8
  %v1853 = vpop.permute.xlu0 %1852
  %1854 = vrot.lane.b32.xlu0 %v1041, 8
  %v1855 = vpop.permute.xlu0 %1854
  %1856 = vrot.lane.b32.xlu0 %v1042, 8
  %v1857 = vpop.permute.xlu0 %1856
  %1858 = vrot.lane.b32.xlu0 %v1043, 8
  %v1859 = vpop.permute.xlu0 %1858
  %1860 = vrot.lane.b32.xlu0 %v1044, 8
  %v1861 = vpop.permute.xlu0 %1860
  %1862 = vrot.lane.b32.xlu0 %v1045, 8
  %v1863 = vpop.permute.xlu0 %1862
  %1864 = vrot.lane.b32.xlu0 %v1046, 8
  %v1865 = vpop.permute.xlu0 %1864
  %1866 = vrot.lane.b32.xlu0 %v1047, 8
  %v1867 = vpop.permute.xlu0 %1866
  %1868 = vrot.lane.b32.xlu0 %v1048, 8
  %v1869 = vpop.permute.xlu0 %1868
  %1870 = vrot.lane.b32.xlu0 %v1049, 8
  %v1871 = vpop.permute.xlu0 %1870
  %1872 = vrot.lane.b32.xlu0 %v1050, 8
  %v1873 = vpop.permute.xlu0 %1872
  %1874 = vrot.lane.b32.xlu0 %v1051, 8
  %v1875 = vpop.permute.xlu0 %1874
  %1876 = vrot.lane.b32.xlu0 %v1052, 8
  %v1877 = vpop.permute.xlu0 %1876
  %1878 = vrot.lane.b32.xlu0 %v1053, 8
  %v1879 = vpop.permute.xlu0 %1878
  %1880 = vrot.lane.b32.xlu0 %v1054, 8
  %v1881 = vpop.permute.xlu0 %1880
  %1882 = vrot.lane.b32.xlu0 %v1055, 8
  %v1883 = vpop.permute.xlu0 %1882
  %1884 = vrot.lane.b32.xlu0 %v1056, 8
  %v1885 = vpop.permute.xlu0 %1884
  %1886 = vrot.lane.b32.xlu0 %v1057, 8
  %v1887 = vpop.permute.xlu0 %1886
  %1888 = vrot.lane.b32.xlu0 %v1058, 8
  %v1889 = vpop.permute.xlu0 %1888
  %1890 = vrot.lane.b32.xlu0 %v1059, 8
  %v1891 = vpop.permute.xlu0 %1890
  %1892 = vrot.lane.b32.xlu0 %v1060, 8
  %v1893 = vpop.permute.xlu0 %1892
  %2022 = vrot.lane.b32.xlu0 %v1061, 12
  %v2023 = vpop.permute.xlu0 %2022
  %2024 = vrot.lane.b32.xlu0 %v1062, 12
  %v2025 = vpop.permute.xlu0 %2024
  %2026 = vrot.lane.b32.xlu0 %v1063, 12
  %v2027 = vpop.permute.xlu0 %2026
  %2028 = vrot.lane.b32.xlu0 %v1064, 12
  %v2029 = vpop.permute.xlu0 %2028
  %2030 = vrot.lane.b32.xlu0 %v1065, 12
  %v2031 = vpop.permute.xlu0 %2030
  %2032 = vrot.lane.b32.xlu0 %v1066, 12
  %v2033 = vpop.permute.xlu0 %2032
  %2034 = vrot.lane.b32.xlu0 %v1067, 12
  %v2035 = vpop.permute.xlu0 %2034
  %2036 = vrot.lane.b32.xlu0 %v1068, 12
  %v2037 = vpop.permute.xlu0 %2036
  %2038 = vrot.lane.b32.xlu0 %v1069, 12
  %v2039 = vpop.permute.xlu0 %2038
  %2040 = vrot.lane.b32.xlu0 %v1070, 12
  %v2041 = vpop.permute.xlu0 %2040
  %2042 = vrot.lane.b32.xlu0 %v1071, 12
  %v2043 = vpop.permute.xlu0 %2042
  %2044 = vrot.lane.b32.xlu0 %v1072, 12
  %v2045 = vpop.permute.xlu0 %2044
  %2046 = vrot.lane.b32.xlu0 %v1073, 12
  %v2047 = vpop.permute.xlu0 %2046
  %2048 = vrot.lane.b32.xlu0 %v1074, 12
  %v2049 = vpop.permute.xlu0 %2048
  %2050 = vrot.lane.b32.xlu0 %v1075, 12
  %v2051 = vpop.permute.xlu0 %2050
  %2052 = vrot.lane.b32.xlu0 %v1076, 12
  %v2053 = vpop.permute.xlu0 %2052
  %2054 = vrot.lane.b32.xlu0 %v1077, 12
  %v2055 = vpop.permute.xlu0 %2054
  %2056 = vrot.lane.b32.xlu0 %v1078, 12
  %v2057 = vpop.permute.xlu0 %2056
  %2058 = vrot.lane.b32.xlu0 %v1079, 12
  %v2059 = vpop.permute.xlu0 %2058
  %2060 = vrot.lane.b32.xlu0 %v1080, 12
  %v2061 = vpop.permute.xlu0 %2060
  %2062 = vrot.lane.b32.xlu0 %v1081, 12
  %v2063 = vpop.permute.xlu0 %2062
  %2064 = vrot.lane.b32.xlu0 %v1082, 12
  %v2065 = vpop.permute.xlu0 %2064
  %2066 = vrot.lane.b32.xlu0 %v1083, 12
  %v2067 = vpop.permute.xlu0 %2066
  %2068 = vrot.lane.b32.xlu0 %v1084, 12
  %v2069 = vpop.permute.xlu0 %2068
  %2070 = vrot.lane.b32.xlu0 %v1085, 12
  %v2071 = vpop.permute.xlu0 %2070
  %2072 = vrot.lane.b32.xlu0 %v1086, 12
  %v2073 = vpop.permute.xlu0 %2072
  %2074 = vrot.lane.b32.xlu0 %v1087, 12
  %v2075 = vpop.permute.xlu0 %2074
  %2076 = vrot.lane.b32.xlu0 %v1088, 12
  %v2077 = vpop.permute.xlu0 %2076
  %2078 = vrot.lane.b32.xlu0 %v1089, 12
  %v2079 = vpop.permute.xlu0 %2078
  %2080 = vrot.lane.b32.xlu0 %v1090, 12
  %v2081 = vpop.permute.xlu0 %2080
  %2082 = vrot.lane.b32.xlu0 %v1091, 12
  %v2083 = vpop.permute.xlu0 %2082
  %2084 = vrot.lane.b32.xlu0 %v1092, 12
  %v2085 = vpop.permute.xlu0 %2084
  %2086 = vrot.lane.b32.xlu0 %v1093, 12
  %v2087 = vpop.permute.xlu0 %2086
  %2088 = vrot.lane.b32.xlu0 %v1094, 12
  %v2089 = vpop.permute.xlu0 %2088
  %2090 = vrot.lane.b32.xlu0 %v1095, 12
  %v2091 = vpop.permute.xlu0 %2090
  %2092 = vrot.lane.b32.xlu0 %v1096, 12
  %v2093 = vpop.permute.xlu0 %2092
  %2094 = vrot.lane.b32.xlu0 %v1097, 12
  %v2095 = vpop.permute.xlu0 %2094
  %2096 = vrot.lane.b32.xlu0 %v1098, 12
  %v2097 = vpop.permute.xlu0 %2096
  %2098 = vrot.lane.b32.xlu0 %v1099, 12
  %v2099 = vpop.permute.xlu0 %2098
  %2100 = vrot.lane.b32.xlu0 %v1100, 12
  %v2101 = vpop.permute.xlu0 %2100
  %2102 = vrot.lane.b32.xlu0 %v1101, 12
  %v2103 = vpop.permute.xlu0 %2102
  %2104 = vrot.lane.b32.xlu0 %v1102, 12
  %v2105 = vpop.permute.xlu0 %2104
  %2106 = vrot.lane.b32.xlu0 %v1103, 12
  %v2107 = vpop.permute.xlu0 %2106
  %2108 = vrot.lane.b32.xlu0 %v1104, 12
  %v2109 = vpop.permute.xlu0 %2108
  %2110 = vrot.lane.b32.xlu0 %v1105, 12
  %v2111 = vpop.permute.xlu0 %2110
  %2112 = vrot.lane.b32.xlu0 %v1106, 12
  %v2113 = vpop.permute.xlu0 %2112
  %2114 = vrot.lane.b32.xlu0 %v1107, 12
  %v2115 = vpop.permute.xlu0 %2114
  %2116 = vrot.lane.b32.xlu0 %v1108, 12
  %v2117 = vpop.permute.xlu0 %2116
  %2118 = vrot.lane.b32.xlu0 %v1109, 12
  %v2119 = vpop.permute.xlu0 %2118
  %2120 = vrot.lane.b32.xlu0 %v1110, 12
  %v2121 = vpop.permute.xlu0 %2120
  %2122 = vrot.lane.b32.xlu0 %v1111, 12
  %v2123 = vpop.permute.xlu0 %2122
  %2124 = vrot.lane.b32.xlu0 %v1112, 12
  %v2125 = vpop.permute.xlu0 %2124
  %2126 = vrot.lane.b32.xlu0 %v1113, 12
  %v2127 = vpop.permute.xlu0 %2126
  %2128 = vrot.lane.b32.xlu0 %v1114, 12
  %v2129 = vpop.permute.xlu0 %2128
  %2130 = vrot.lane.b32.xlu0 %v1115, 12
  %v2131 = vpop.permute.xlu0 %2130
  %2132 = vrot.lane.b32.xlu0 %v1116, 12
  %v2133 = vpop.permute.xlu0 %2132
  %2134 = vrot.lane.b32.xlu0 %v1117, 12
  %v2135 = vpop.permute.xlu0 %2134
  %2136 = vrot.lane.b32.xlu0 %v1118, 12
  %v2137 = vpop.permute.xlu0 %2136
  %2138 = vrot.lane.b32.xlu0 %v1119, 12
  %v2139 = vpop.permute.xlu0 %2138
  %2140 = vrot.lane.b32.xlu0 %v1120, 12
  %v2141 = vpop.permute.xlu0 %2140
  %2142 = vrot.lane.b32.xlu0 %v1121, 12
  %v2143 = vpop.permute.xlu0 %2142
  %2144 = vrot.lane.b32.xlu0 %v1122, 12
  %v2145 = vpop.permute.xlu0 %2144
  %2146 = vrot.lane.b32.xlu0 %v1123, 12
  %v2147 = vpop.permute.xlu0 %2146
  %2148 = vrot.lane.b32.xlu0 %v1124, 12
  %v2149 = vpop.permute.xlu0 %2148
  %2278 = vrot.lane.b32.xlu0 %v1125, 16
  %v2279 = vpop.permute.xlu0 %2278
  %2280 = vrot.lane.b32.xlu0 %v1126, 16
  %v2281 = vpop.permute.xlu0 %2280
  %2282 = vrot.lane.b32.xlu0 %v1127, 16
  %v2283 = vpop.permute.xlu0 %2282
  %2284 = vrot.lane.b32.xlu0 %v1128, 16
  %v2285 = vpop.permute.xlu0 %2284
  %2286 = vrot.lane.b32.xlu0 %v1129, 16
  %v2287 = vpop.permute.xlu0 %2286
  %2288 = vrot.lane.b32.xlu0 %v1130, 16
  %v2289 = vpop.permute.xlu0 %2288
  %2290 = vrot.lane.b32.xlu0 %v1131, 16
  %v2291 = vpop.permute.xlu0 %2290
  %2292 = vrot.lane.b32.xlu0 %v1132, 16
  %v2293 = vpop.permute.xlu0 %2292
  %2294 = vrot.lane.b32.xlu0 %v1133, 16
  %v2295 = vpop.permute.xlu0 %2294
  %2296 = vrot.lane.b32.xlu0 %v1134, 16
  %v2297 = vpop.permute.xlu0 %2296
  %2298 = vrot.lane.b32.xlu0 %v1135, 16
  %v2299 = vpop.permute.xlu0 %2298
  %2300 = vrot.lane.b32.xlu0 %v1136, 16
  %v2301 = vpop.permute.xlu0 %2300
  %2302 = vrot.lane.b32.xlu0 %v1137, 16
  %v2303 = vpop.permute.xlu0 %2302
  %2304 = vrot.lane.b32.xlu0 %v1138, 16
  %v2305 = vpop.permute.xlu0 %2304
  %2306 = vrot.lane.b32.xlu0 %v1139, 16
  %v2307 = vpop.permute.xlu0 %2306
  %2308 = vrot.lane.b32.xlu0 %v1140, 16
  %v2309 = vpop.permute.xlu0 %2308
  %2310 = vrot.lane.b32.xlu0 %v1141, 16
  %v2311 = vpop.permute.xlu0 %2310
  %2312 = vrot.lane.b32.xlu0 %v1142, 16
  %v2313 = vpop.permute.xlu0 %2312
  %2314 = vrot.lane.b32.xlu0 %v1143, 16
  %v2315 = vpop.permute.xlu0 %2314
  %2316 = vrot.lane.b32.xlu0 %v1144, 16
  %v2317 = vpop.permute.xlu0 %2316
  %2318 = vrot.lane.b32.xlu0 %v1145, 16
  %v2319 = vpop.permute.xlu0 %2318
  %2320 = vrot.lane.b32.xlu0 %v1146, 16
  %v2321 = vpop.permute.xlu0 %2320
  %2322 = vrot.lane.b32.xlu0 %v1147, 16
  %v2323 = vpop.permute.xlu0 %2322
  %2324 = vrot.lane.b32.xlu0 %v1148, 16
  %v2325 = vpop.permute.xlu0 %2324
  %2326 = vrot.lane.b32.xlu0 %v1149, 16
  %v2327 = vpop.permute.xlu0 %2326
  %2328 = vrot.lane.b32.xlu0 %v1150, 16
  %v2329 = vpop.permute.xlu0 %2328
  %2330 = vrot.lane.b32.xlu0 %v1151, 16
  %v2331 = vpop.permute.xlu0 %2330
  %2332 = vrot.lane.b32.xlu0 %v1152, 16
  %v2333 = vpop.permute.xlu0 %2332
  %2334 = vrot.lane.b32.xlu0 %v1153, 16
  %v2335 = vpop.permute.xlu0 %2334
  %2336 = vrot.lane.b32.xlu0 %v1154, 16
  %v2337 = vpop.permute.xlu0 %2336
  %2338 = vrot.lane.b32.xlu0 %v1155, 16
  %v2339 = vpop.permute.xlu0 %2338
  %2340 = vrot.lane.b32.xlu0 %v1156, 16
  %v2341 = vpop.permute.xlu0 %2340
  %2342 = vrot.lane.b32.xlu0 %v1157, 16
  %v2343 = vpop.permute.xlu0 %2342
  %2344 = vrot.lane.b32.xlu0 %v1158, 16
  %v2345 = vpop.permute.xlu0 %2344
  %2346 = vrot.lane.b32.xlu0 %v1159, 16
  %v2347 = vpop.permute.xlu0 %2346
  %2348 = vrot.lane.b32.xlu0 %v1160, 16
  %v2349 = vpop.permute.xlu0 %2348
  %2350 = vrot.lane.b32.xlu0 %v1161, 16
  %v2351 = vpop.permute.xlu0 %2350
  %2352 = vrot.lane.b32.xlu0 %v1162, 16
  %v2353 = vpop.permute.xlu0 %2352
  %2354 = vrot.lane.b32.xlu0 %v1163, 16
  %v2355 = vpop.permute.xlu0 %2354
  %2356 = vrot.lane.b32.xlu0 %v1164, 16
  %v2357 = vpop.permute.xlu0 %2356
  %2358 = vrot.lane.b32.xlu0 %v1165, 16
  %v2359 = vpop.permute.xlu0 %2358
  %2360 = vrot.lane.b32.xlu0 %v1166, 16
  %v2361 = vpop.permute.xlu0 %2360
  %2362 = vrot.lane.b32.xlu0 %v1167, 16
  %v2363 = vpop.permute.xlu0 %2362
  %2364 = vrot.lane.b32.xlu0 %v1168, 16
  %v2365 = vpop.permute.xlu0 %2364
  %2366 = vrot.lane.b32.xlu0 %v1169, 16
  %v2367 = vpop.permute.xlu0 %2366
  %2368 = vrot.lane.b32.xlu0 %v1170, 16
  %v2369 = vpop.permute.xlu0 %2368
  %2370 = vrot.lane.b32.xlu0 %v1171, 16
  %v2371 = vpop.permute.xlu0 %2370
  %2372 = vrot.lane.b32.xlu0 %v1172, 16
  %v2373 = vpop.permute.xlu0 %2372
  %2374 = vrot.lane.b32.xlu0 %v1173, 16
  %v2375 = vpop.permute.xlu0 %2374
  %2376 = vrot.lane.b32.xlu0 %v1174, 16
  %v2377 = vpop.permute.xlu0 %2376
  %2378 = vrot.lane.b32.xlu0 %v1175, 16
  %v2379 = vpop.permute.xlu0 %2378
  %2380 = vrot.lane.b32.xlu0 %v1176, 16
  %v2381 = vpop.permute.xlu0 %2380
  %2382 = vrot.lane.b32.xlu0 %v1177, 16
  %v2383 = vpop.permute.xlu0 %2382
  %2384 = vrot.lane.b32.xlu0 %v1178, 16
  %v2385 = vpop.permute.xlu0 %2384
  %2386 = vrot.lane.b32.xlu0 %v1179, 16
  %v2387 = vpop.permute.xlu0 %2386
  %2388 = vrot.lane.b32.xlu0 %v1180, 16
  %v2389 = vpop.permute.xlu0 %2388
  %2390 = vrot.lane.b32.xlu0 %v1181, 16
  %v2391 = vpop.permute.xlu0 %2390
  %2392 = vrot.lane.b32.xlu0 %v1182, 16
  %v2393 = vpop.permute.xlu0 %2392
  %2394 = vrot.lane.b32.xlu0 %v1183, 16
  %v2395 = vpop.permute.xlu0 %2394
  %2396 = vrot.lane.b32.xlu0 %v1184, 16
  %v2397 = vpop.permute.xlu0 %2396
  %2398 = vrot.lane.b32.xlu0 %v1185, 16
  %v2399 = vpop.permute.xlu0 %2398
  %2400 = vrot.lane.b32.xlu0 %v1186, 16
  %v2401 = vpop.permute.xlu0 %2400
  %2402 = vrot.lane.b32.xlu0 %v1187, 16
  %v2403 = vpop.permute.xlu0 %2402
  %2404 = vrot.lane.b32.xlu0 %v1188, 16
  %v2405 = vpop.permute.xlu0 %2404
  %2534 = vrot.lane.b32.xlu0 %v1189, 20
  %v2535 = vpop.permute.xlu0 %2534
  %2536 = vrot.lane.b32.xlu0 %v1190, 20
  %v2537 = vpop.permute.xlu0 %2536
  %2538 = vrot.lane.b32.xlu0 %v1191, 20
  %v2539 = vpop.permute.xlu0 %2538
  %2540 = vrot.lane.b32.xlu0 %v1192, 20
  %v2541 = vpop.permute.xlu0 %2540
  %2542 = vrot.lane.b32.xlu0 %v1193, 20
  %v2543 = vpop.permute.xlu0 %2542
  %2544 = vrot.lane.b32.xlu0 %v1194, 20
  %v2545 = vpop.permute.xlu0 %2544
  %2546 = vrot.lane.b32.xlu0 %v1195, 20
  %v2547 = vpop.permute.xlu0 %2546
  %2548 = vrot.lane.b32.xlu0 %v1196, 20
  %v2549 = vpop.permute.xlu0 %2548
  %2550 = vrot.lane.b32.xlu0 %v1197, 20
  %v2551 = vpop.permute.xlu0 %2550
  %2552 = vrot.lane.b32.xlu0 %v1198, 20
  %v2553 = vpop.permute.xlu0 %2552
  %2554 = vrot.lane.b32.xlu0 %v1199, 20
  %v2555 = vpop.permute.xlu0 %2554
  %2556 = vrot.lane.b32.xlu0 %v1200, 20
  %v2557 = vpop.permute.xlu0 %2556
  %2558 = vrot.lane.b32.xlu0 %v1201, 20
  %v2559 = vpop.permute.xlu0 %2558
  %2560 = vrot.lane.b32.xlu0 %v1202, 20
  %v2561 = vpop.permute.xlu0 %2560
  %2562 = vrot.lane.b32.xlu0 %v1203, 20
  %v2563 = vpop.permute.xlu0 %2562
  %2564 = vrot.lane.b32.xlu0 %v1204, 20
  %v2565 = vpop.permute.xlu0 %2564
  %2566 = vrot.lane.b32.xlu0 %v1205, 20
  %v2567 = vpop.permute.xlu0 %2566
  %2568 = vrot.lane.b32.xlu0 %v1206, 20
  %v2569 = vpop.permute.xlu0 %2568
  %2570 = vrot.lane.b32.xlu0 %v1207, 20
  %v2571 = vpop.permute.xlu0 %2570
  %2572 = vrot.lane.b32.xlu0 %v1208, 20
  %v2573 = vpop.permute.xlu0 %2572
  %2574 = vrot.lane.b32.xlu0 %v1209, 20
  %v2575 = vpop.permute.xlu0 %2574
  %2576 = vrot.lane.b32.xlu0 %v1210, 20
  %v2577 = vpop.permute.xlu0 %2576
  %2578 = vrot.lane.b32.xlu0 %v1211, 20
  %v2579 = vpop.permute.xlu0 %2578
  %2580 = vrot.lane.b32.xlu0 %v1212, 20
  %v2581 = vpop.permute.xlu0 %2580
  %2582 = vrot.lane.b32.xlu0 %v1213, 20
  %v2583 = vpop.permute.xlu0 %2582
  %2584 = vrot.lane.b32.xlu0 %v1214, 20
  %v2585 = vpop.permute.xlu0 %2584
  %2586 = vrot.lane.b32.xlu0 %v1215, 20
  %v2587 = vpop.permute.xlu0 %2586
  %2588 = vrot.lane.b32.xlu0 %v1216, 20
  %v2589 = vpop.permute.xlu0 %2588
  %2590 = vrot.lane.b32.xlu0 %v1217, 20
  %v2591 = vpop.permute.xlu0 %2590
  %2592 = vrot.lane.b32.xlu0 %v1218, 20
  %v2593 = vpop.permute.xlu0 %2592
  %2594 = vrot.lane.b32.xlu0 %v1219, 20
  %v2595 = vpop.permute.xlu0 %2594
  %2596 = vrot.lane.b32.xlu0 %v1220, 20
  %v2597 = vpop.permute.xlu0 %2596
  %2598 = vrot.lane.b32.xlu0 %v1221, 20
  %v2599 = vpop.permute.xlu0 %2598
  %2600 = vrot.lane.b32.xlu0 %v1222, 20
  %v2601 = vpop.permute.xlu0 %2600
  %2602 = vrot.lane.b32.xlu0 %v1223, 20
  %v2603 = vpop.permute.xlu0 %2602
  %2604 = vrot.lane.b32.xlu0 %v1224, 20
  %v2605 = vpop.permute.xlu0 %2604
  %2606 = vrot.lane.b32.xlu0 %v1225, 20
  %v2607 = vpop.permute.xlu0 %2606
  %2608 = vrot.lane.b32.xlu0 %v1226, 20
  %v2609 = vpop.permute.xlu0 %2608
  %2610 = vrot.lane.b32.xlu0 %v1227, 20
  %v2611 = vpop.permute.xlu0 %2610
  %2612 = vrot.lane.b32.xlu0 %v1228, 20
  %v2613 = vpop.permute.xlu0 %2612
  %2614 = vrot.lane.b32.xlu0 %v1229, 20
  %v2615 = vpop.permute.xlu0 %2614
  %2616 = vrot.lane.b32.xlu0 %v1230, 20
  %v2617 = vpop.permute.xlu0 %2616
  %2618 = vrot.lane.b32.xlu0 %v1231, 20
  %v2619 = vpop.permute.xlu0 %2618
  %2620 = vrot.lane.b32.xlu0 %v1232, 20
  %v2621 = vpop.permute.xlu0 %2620
  %2622 = vrot.lane.b32.xlu0 %v1233, 20
  %v2623 = vpop.permute.xlu0 %2622
  %2624 = vrot.lane.b32.xlu0 %v1234, 20
  %v2625 = vpop.permute.xlu0 %2624
  %2626 = vrot.lane.b32.xlu0 %v1235, 20
  %v2627 = vpop.permute.xlu0 %2626
  %2628 = vrot.lane.b32.xlu0 %v1236, 20
  %v2629 = vpop.permute.xlu0 %2628
  %2630 = vrot.lane.b32.xlu0 %v1237, 20
  %v2631 = vpop.permute.xlu0 %2630
  %2632 = vrot.lane.b32.xlu0 %v1238, 20
  %v2633 = vpop.permute.xlu0 %2632
  %2634 = vrot.lane.b32.xlu0 %v1239, 20
  %v2635 = vpop.permute.xlu0 %2634
  %2636 = vrot.lane.b32.xlu0 %v1240, 20
  %v2637 = vpop.permute.xlu0 %2636
  %2638 = vrot.lane.b32.xlu0 %v1241, 20
  %v2639 = vpop.permute.xlu0 %2638
  %2640 = vrot.lane.b32.xlu0 %v1242, 20
  %v2641 = vpop.permute.xlu0 %2640
  %2642 = vrot.lane.b32.xlu0 %v1243, 20
  %v2643 = vpop.permute.xlu0 %2642
  %2644 = vrot.lane.b32.xlu0 %v1244, 20
  %v2645 = vpop.permute.xlu0 %2644
  %2646 = vrot.lane.b32.xlu0 %v1245, 20
  %v2647 = vpop.permute.xlu0 %2646
  %2648 = vrot.lane.b32.xlu0 %v1246, 20
  %v2649 = vpop.permute.xlu0 %2648
  %2650 = vrot.lane.b32.xlu0 %v1247, 20
  %v2651 = vpop.permute.xlu0 %2650
  %2652 = vrot.lane.b32.xlu0 %v1248, 20
  %v2653 = vpop.permute.xlu0 %2652
  %2654 = vrot.lane.b32.xlu0 %v1249, 20
  %v2655 = vpop.permute.xlu0 %2654
  %2656 = vrot.lane.b32.xlu0 %v1250, 20
  %v2657 = vpop.permute.xlu0 %2656
  %2658 = vrot.lane.b32.xlu0 %v1251, 20
  %v2659 = vpop.permute.xlu0 %2658
  %2660 = vrot.lane.b32.xlu0 %v1252, 20
  %v2661 = vpop.permute.xlu0 %2660
  %2790 = vrot.lane.b32.xlu0 %v1254, 24
  %v2791 = vpop.permute.xlu0 %2790
  %2792 = vrot.lane.b32.xlu0 %v1255, 24
  %v2793 = vpop.permute.xlu0 %2792
  %2794 = vrot.lane.b32.xlu0 %v1256, 24
  %v2795 = vpop.permute.xlu0 %2794
  %2796 = vrot.lane.b32.xlu0 %v1257, 24
  %v2797 = vpop.permute.xlu0 %2796
  %2798 = vrot.lane.b32.xlu0 %v1258, 24
  %v2799 = vpop.permute.xlu0 %2798
  %2800 = vrot.lane.b32.xlu0 %v1259, 24
  %v2801 = vpop.permute.xlu0 %2800
  %2802 = vrot.lane.b32.xlu0 %v1260, 24
  %v2803 = vpop.permute.xlu0 %2802
  %2804 = vrot.lane.b32.xlu0 %v1261, 24
  %v2805 = vpop.permute.xlu0 %2804
  %2806 = vrot.lane.b32.xlu0 %v1262, 24
  %v2807 = vpop.permute.xlu0 %2806
  %2808 = vrot.lane.b32.xlu0 %v1263, 24
  %v2809 = vpop.permute.xlu0 %2808
  %2810 = vrot.lane.b32.xlu0 %v1264, 24
  %v2811 = vpop.permute.xlu0 %2810
  %2812 = vrot.lane.b32.xlu0 %v1265, 24
  %v2813 = vpop.permute.xlu0 %2812
  %2814 = vrot.lane.b32.xlu0 %v1266, 24
  %v2815 = vpop.permute.xlu0 %2814
  %2816 = vrot.lane.b32.xlu0 %v1267, 24
  %v2817 = vpop.permute.xlu0 %2816
  %2818 = vrot.lane.b32.xlu0 %v1268, 24
  %v2819 = vpop.permute.xlu0 %2818
  %2820 = vrot.lane.b32.xlu0 %v1269, 24
  %v2821 = vpop.permute.xlu0 %2820
  %2822 = vrot.lane.b32.xlu0 %v1270, 24
  %v2823 = vpop.permute.xlu0 %2822
  %2824 = vrot.lane.b32.xlu0 %v1271, 24
  %v2825 = vpop.permute.xlu0 %2824
  %2826 = vrot.lane.b32.xlu0 %v1272, 24
  %v2827 = vpop.permute.xlu0 %2826
  %2828 = vrot.lane.b32.xlu0 %v1273, 24
  %v2829 = vpop.permute.xlu0 %2828
  %2830 = vrot.lane.b32.xlu0 %v1274, 24
  %v2831 = vpop.permute.xlu0 %2830
  %2832 = vrot.lane.b32.xlu0 %v1275, 24
  %v2833 = vpop.permute.xlu0 %2832
  %2834 = vrot.lane.b32.xlu0 %v1276, 24
  %v2835 = vpop.permute.xlu0 %2834
  %2836 = vrot.lane.b32.xlu0 %v1277, 24
  %v2837 = vpop.permute.xlu0 %2836
  %2838 = vrot.lane.b32.xlu0 %v1278, 24
  %v2839 = vpop.permute.xlu0 %2838
  %2840 = vrot.lane.b32.xlu0 %v1279, 24
  %v2841 = vpop.permute.xlu0 %2840
  %2842 = vrot.lane.b32.xlu0 %v1280, 24
  %v2843 = vpop.permute.xlu0 %2842
  %2844 = vrot.lane.b32.xlu0 %v1281, 24
  %v2845 = vpop.permute.xlu0 %2844
  %2846 = vrot.lane.b32.xlu0 %v1282, 24
  %v2847 = vpop.permute.xlu0 %2846
  %2848 = vrot.lane.b32.xlu0 %v1283, 24
  %v2849 = vpop.permute.xlu0 %2848
  %2850 = vrot.lane.b32.xlu0 %v1284, 24
  %v2851 = vpop.permute.xlu0 %2850
  %2852 = vrot.lane.b32.xlu0 %v1285, 24
  %v2853 = vpop.permute.xlu0 %2852
  %2854 = vrot.lane.b32.xlu0 %v1286, 24
  %v2855 = vpop.permute.xlu0 %2854
  %2856 = vrot.lane.b32.xlu0 %v1287, 24
  %v2857 = vpop.permute.xlu0 %2856
  %2858 = vrot.lane.b32.xlu0 %v1288, 24
  %v2859 = vpop.permute.xlu0 %2858
  %2860 = vrot.lane.b32.xlu0 %v1289, 24
  %v2861 = vpop.permute.xlu0 %2860
  %2862 = vrot.lane.b32.xlu0 %v1290, 24
  %v2863 = vpop.permute.xlu0 %2862
  %2864 = vrot.lane.b32.xlu0 %v1291, 24
  %v2865 = vpop.permute.xlu0 %2864
  %2866 = vrot.lane.b32.xlu0 %v1292, 24
  %v2867 = vpop.permute.xlu0 %2866
  %2868 = vrot.lane.b32.xlu0 %v1293, 24
  %v2869 = vpop.permute.xlu0 %2868
  %2870 = vrot.lane.b32.xlu0 %v1294, 24
  %v2871 = vpop.permute.xlu0 %2870
  %2872 = vrot.lane.b32.xlu0 %v1295, 24
  %v2873 = vpop.permute.xlu0 %2872
  %2874 = vrot.lane.b32.xlu0 %v1296, 24
  %v2875 = vpop.permute.xlu0 %2874
  %2876 = vrot.lane.b32.xlu0 %v1297, 24
  %v2877 = vpop.permute.xlu0 %2876
  %2878 = vrot.lane.b32.xlu0 %v1298, 24
  %v2879 = vpop.permute.xlu0 %2878
  %2880 = vrot.lane.b32.xlu0 %v1299, 24
  %v2881 = vpop.permute.xlu0 %2880
  %2882 = vrot.lane.b32.xlu0 %v1300, 24
  %v2883 = vpop.permute.xlu0 %2882
  %2884 = vrot.lane.b32.xlu0 %v1301, 24
  %v2885 = vpop.permute.xlu0 %2884
  %2886 = vrot.lane.b32.xlu0 %v1302, 24
  %v2887 = vpop.permute.xlu0 %2886
  %2888 = vrot.lane.b32.xlu0 %v1303, 24
  %v2889 = vpop.permute.xlu0 %2888
  %2890 = vrot.lane.b32.xlu0 %v1304, 24
  %v2891 = vpop.permute.xlu0 %2890
  %2892 = vrot.lane.b32.xlu0 %v1305, 24
  %v2893 = vpop.permute.xlu0 %2892
  %2894 = vrot.lane.b32.xlu0 %v1306, 24
  %v2895 = vpop.permute.xlu0 %2894
  %2896 = vrot.lane.b32.xlu0 %v1307, 24
  %v2897 = vpop.permute.xlu0 %2896
  %2898 = vrot.lane.b32.xlu0 %v1308, 24
  %v2899 = vpop.permute.xlu0 %2898
  %2900 = vrot.lane.b32.xlu0 %v1309, 24
  %v2901 = vpop.permute.xlu0 %2900
  %2902 = vrot.lane.b32.xlu0 %v1310, 24
  %v2903 = vpop.permute.xlu0 %2902
  %2904 = vrot.lane.b32.xlu0 %v1311, 24
  %v2905 = vpop.permute.xlu0 %2904
  %2906 = vrot.lane.b32.xlu0 %v1312, 24
  %v2907 = vpop.permute.xlu0 %2906
  %2908 = vrot.lane.b32.xlu0 %v1313, 24
  %v2909 = vpop.permute.xlu0 %2908
  %2910 = vrot.lane.b32.xlu0 %v1314, 24
  %v2911 = vpop.permute.xlu0 %2910
  %2912 = vrot.lane.b32.xlu0 %v1315, 24
  %v2913 = vpop.permute.xlu0 %2912
  %2914 = vrot.lane.b32.xlu0 %v1316, 24
  %v2915 = vpop.permute.xlu0 %2914
  %2916 = vrot.lane.b32.xlu0 %v1317, 24
  %v2917 = vpop.permute.xlu0 %2916
  %3046 = vrot.lane.b32.xlu0 %v1318, 28
  %v3047 = vpop.permute.xlu0 %3046
  %3048 = vrot.lane.b32.xlu0 %v1319, 28
  %v3049 = vpop.permute.xlu0 %3048
  %3050 = vrot.lane.b32.xlu0 %v1320, 28
  %v3051 = vpop.permute.xlu0 %3050
  %3052 = vrot.lane.b32.xlu0 %v1321, 28
  %v3053 = vpop.permute.xlu0 %3052
  %3054 = vrot.lane.b32.xlu0 %v1322, 28
  %v3055 = vpop.permute.xlu0 %3054
  %3056 = vrot.lane.b32.xlu0 %v1323, 28
  %v3057 = vpop.permute.xlu0 %3056
  %3058 = vrot.lane.b32.xlu0 %v1324, 28
  %v3059 = vpop.permute.xlu0 %3058
  %3060 = vrot.lane.b32.xlu0 %v1325, 28
  %v3061 = vpop.permute.xlu0 %3060
  %3062 = vrot.lane.b32.xlu0 %v1326, 28
  %v3063 = vpop.permute.xlu0 %3062
  %3064 = vrot.lane.b32.xlu0 %v1327, 28
  %v3065 = vpop.permute.xlu0 %3064
  %3066 = vrot.lane.b32.xlu0 %v1328, 28
  %v3067 = vpop.permute.xlu0 %3066
  %3068 = vrot.lane.b32.xlu0 %v1329, 28
  %v3069 = vpop.permute.xlu0 %3068
  %3070 = vrot.lane.b32.xlu0 %v1330, 28
  %v3071 = vpop.permute.xlu0 %3070
  %3072 = vrot.lane.b32.xlu0 %v1331, 28
  %v3073 = vpop.permute.xlu0 %3072
  %3074 = vrot.lane.b32.xlu0 %v1332, 28
  %v3075 = vpop.permute.xlu0 %3074
  %3076 = vrot.lane.b32.xlu0 %v1333, 28
  %v3077 = vpop.permute.xlu0 %3076
  %3078 = vrot.lane.b32.xlu0 %v1334, 28
  %v3079 = vpop.permute.xlu0 %3078
  %3080 = vrot.lane.b32.xlu0 %v1335, 28
  %v3081 = vpop.permute.xlu0 %3080
  %3082 = vrot.lane.b32.xlu0 %v1336, 28
  %v3083 = vpop.permute.xlu0 %3082
  %3084 = vrot.lane.b32.xlu0 %v1337, 28
  %v3085 = vpop.permute.xlu0 %3084
  %3086 = vrot.lane.b32.xlu0 %v1338, 28
  %v3087 = vpop.permute.xlu0 %3086
  %3088 = vrot.lane.b32.xlu0 %v1339, 28
  %v3089 = vpop.permute.xlu0 %3088
  %3090 = vrot.lane.b32.xlu0 %v1340, 28
  %v3091 = vpop.permute.xlu0 %3090
  %3092 = vrot.lane.b32.xlu0 %v1341, 28
  %v3093 = vpop.permute.xlu0 %3092
  %3094 = vrot.lane.b32.xlu0 %v1342, 28
  %v3095 = vpop.permute.xlu0 %3094
  %3096 = vrot.lane.b32.xlu0 %v1343, 28
  %v3097 = vpop.permute.xlu0 %3096
  %3098 = vrot.lane.b32.xlu0 %v1344, 28
  %v3099 = vpop.permute.xlu0 %3098
  %3100 = vrot.lane.b32.xlu0 %v1345, 28
  %v3101 = vpop.permute.xlu0 %3100
  %3102 = vrot.lane.b32.xlu0 %v1346, 28
  %v3103 = vpop.permute.xlu0 %3102
  %3104 = vrot.lane.b32.xlu0 %v1347, 28
  %v3105 = vpop.permute.xlu0 %3104
  %3106 = vrot.lane.b32.xlu0 %v1348, 28
  %v3107 = vpop.permute.xlu0 %3106
  %3108 = vrot.lane.b32.xlu0 %v1349, 28
  %v3109 = vpop.permute.xlu0 %3108
  %3110 = vrot.lane.b32.xlu0 %v1350, 28
  %v3111 = vpop.permute.xlu0 %3110
  %3112 = vrot.lane.b32.xlu0 %v1351, 28
  %v3113 = vpop.permute.xlu0 %3112
  %3114 = vrot.lane.b32.xlu0 %v1352, 28
  %v3115 = vpop.permute.xlu0 %3114
  %3116 = vrot.lane.b32.xlu0 %v1353, 28
  %v3117 = vpop.permute.xlu0 %3116
  %3118 = vrot.lane.b32.xlu0 %v1354, 28
  %v3119 = vpop.permute.xlu0 %3118
  %3120 = vrot.lane.b32.xlu0 %v1355, 28
  %v3121 = vpop.permute.xlu0 %3120
  %3122 = vrot.lane.b32.xlu0 %v1356, 28
  %v3123 = vpop.permute.xlu0 %3122
  %3124 = vrot.lane.b32.xlu0 %v1357, 28
  %v3125 = vpop.permute.xlu0 %3124
  %3126 = vrot.lane.b32.xlu0 %v1358, 28
  %v3127 = vpop.permute.xlu0 %3126
  %3128 = vrot.lane.b32.xlu0 %v1359, 28
  %v3129 = vpop.permute.xlu0 %3128
  %3130 = vrot.lane.b32.xlu0 %v1360, 28
  %v3131 = vpop.permute.xlu0 %3130
  %3132 = vrot.lane.b32.xlu0 %v1361, 28
  %v3133 = vpop.permute.xlu0 %3132
  %3134 = vrot.lane.b32.xlu0 %v1362, 28
  %v3135 = vpop.permute.xlu0 %3134
  %3136 = vrot.lane.b32.xlu0 %v1363, 28
  %v3137 = vpop.permute.xlu0 %3136
  %3138 = vrot.lane.b32.xlu0 %v1364, 28
  %v3139 = vpop.permute.xlu0 %3138
  %3140 = vrot.lane.b32.xlu0 %v1365, 28
  %v3141 = vpop.permute.xlu0 %3140
  %3142 = vrot.lane.b32.xlu0 %v1366, 28
  %v3143 = vpop.permute.xlu0 %3142
  %3144 = vrot.lane.b32.xlu0 %v1367, 28
  %v3145 = vpop.permute.xlu0 %3144
  %3146 = vrot.lane.b32.xlu0 %v1368, 28
  %v3147 = vpop.permute.xlu0 %3146
  %3148 = vrot.lane.b32.xlu0 %v1369, 28
  %v3149 = vpop.permute.xlu0 %3148
  %3150 = vrot.lane.b32.xlu0 %v1370, 28
  %v3151 = vpop.permute.xlu0 %3150
  %3152 = vrot.lane.b32.xlu0 %v1371, 28
  %v3153 = vpop.permute.xlu0 %3152
  %3154 = vrot.lane.b32.xlu0 %v1372, 28
  %v3155 = vpop.permute.xlu0 %3154
  %3156 = vrot.lane.b32.xlu0 %v1373, 28
  %v3157 = vpop.permute.xlu0 %3156
  %3158 = vrot.lane.b32.xlu0 %v1374, 28
  %v3159 = vpop.permute.xlu0 %3158
  %3160 = vrot.lane.b32.xlu0 %v1375, 28
  %v3161 = vpop.permute.xlu0 %3160
  %3162 = vrot.lane.b32.xlu0 %v1376, 28
  %v3163 = vpop.permute.xlu0 %3162
  %3164 = vrot.lane.b32.xlu0 %v1377, 28
  %v3165 = vpop.permute.xlu0 %3164
  %3166 = vrot.lane.b32.xlu0 %v1378, 28
  %v3167 = vpop.permute.xlu0 %3166
  %3168 = vrot.lane.b32.xlu0 %v1379, 28
  %v3169 = vpop.permute.xlu0 %3168
  %3170 = vrot.lane.b32.xlu0 %v1380, 28
  %v3171 = vpop.permute.xlu0 %3170
  %3172 = vrot.lane.b32.xlu0 %v1381, 28
  %v3173 = vpop.permute.xlu0 %3172
  %3302 = vrot.lane.b32.xlu0 %v1382, 32
  %v3303 = vpop.permute.xlu0 %3302
  %3304 = vrot.lane.b32.xlu0 %v1383, 32
  %v3305 = vpop.permute.xlu0 %3304
  %3306 = vrot.lane.b32.xlu0 %v1384, 32
  %v3307 = vpop.permute.xlu0 %3306
  %3308 = vrot.lane.b32.xlu0 %v1385, 32
  %v3309 = vpop.permute.xlu0 %3308
  %3310 = vrot.lane.b32.xlu0 %v1386, 32
  %v3311 = vpop.permute.xlu0 %3310
  %3312 = vrot.lane.b32.xlu0 %v1387, 32
  %v3313 = vpop.permute.xlu0 %3312
  %3314 = vrot.lane.b32.xlu0 %v1388, 32
  %v3315 = vpop.permute.xlu0 %3314
  %3316 = vrot.lane.b32.xlu0 %v1389, 32
  %v3317 = vpop.permute.xlu0 %3316
  %3318 = vrot.lane.b32.xlu0 %v1390, 32
  %v3319 = vpop.permute.xlu0 %3318
  %3320 = vrot.lane.b32.xlu0 %v1391, 32
  %v3321 = vpop.permute.xlu0 %3320
  %3322 = vrot.lane.b32.xlu0 %v1392, 32
  %v3323 = vpop.permute.xlu0 %3322
  %3324 = vrot.lane.b32.xlu0 %v1393, 32
  %v3325 = vpop.permute.xlu0 %3324
  %3326 = vrot.lane.b32.xlu0 %v1394, 32
  %v3327 = vpop.permute.xlu0 %3326
  %3328 = vrot.lane.b32.xlu0 %v1395, 32
  %v3329 = vpop.permute.xlu0 %3328
  %3330 = vrot.lane.b32.xlu0 %v1396, 32
  %v3331 = vpop.permute.xlu0 %3330
  %3332 = vrot.lane.b32.xlu0 %v1397, 32
  %v3333 = vpop.permute.xlu0 %3332
  %3334 = vrot.lane.b32.xlu0 %v1398, 32
  %v3335 = vpop.permute.xlu0 %3334
  %3336 = vrot.lane.b32.xlu0 %v1399, 32
  %v3337 = vpop.permute.xlu0 %3336
  %3338 = vrot.lane.b32.xlu0 %v1400, 32
  %v3339 = vpop.permute.xlu0 %3338
  %3340 = vrot.lane.b32.xlu0 %v1401, 32
  %v3341 = vpop.permute.xlu0 %3340
  %3342 = vrot.lane.b32.xlu0 %v1402, 32
  %v3343 = vpop.permute.xlu0 %3342
  %3344 = vrot.lane.b32.xlu0 %v1403, 32
  %v3345 = vpop.permute.xlu0 %3344
  %3346 = vrot.lane.b32.xlu0 %v1404, 32
  %v3347 = vpop.permute.xlu0 %3346
  %3348 = vrot.lane.b32.xlu0 %v1405, 32
  %v3349 = vpop.permute.xlu0 %3348
  %3350 = vrot.lane.b32.xlu0 %v1406, 32
  %v3351 = vpop.permute.xlu0 %3350
  %3352 = vrot.lane.b32.xlu0 %v1407, 32
  %v3353 = vpop.permute.xlu0 %3352
  %3354 = vrot.lane.b32.xlu0 %v1408, 32
  %v3355 = vpop.permute.xlu0 %3354
  %3356 = vrot.lane.b32.xlu0 %v1409, 32
  %v3357 = vpop.permute.xlu0 %3356
  %3358 = vrot.lane.b32.xlu0 %v1410, 32
  %v3359 = vpop.permute.xlu0 %3358
  %3360 = vrot.lane.b32.xlu0 %v1411, 32
  %v3361 = vpop.permute.xlu0 %3360
  %3362 = vrot.lane.b32.xlu0 %v1412, 32
  %v3363 = vpop.permute.xlu0 %3362
  %3364 = vrot.lane.b32.xlu0 %v1413, 32
  %v3365 = vpop.permute.xlu0 %3364
  %3366 = vrot.lane.b32.xlu0 %v1414, 32
  %v3367 = vpop.permute.xlu0 %3366
  %3368 = vrot.lane.b32.xlu0 %v1415, 32
  %v3369 = vpop.permute.xlu0 %3368
  %3370 = vrot.lane.b32.xlu0 %v1416, 32
  %v3371 = vpop.permute.xlu0 %3370
  %3372 = vrot.lane.b32.xlu0 %v1417, 32
  %v3373 = vpop.permute.xlu0 %3372
  %3374 = vrot.lane.b32.xlu0 %v1418, 32
  %v3375 = vpop.permute.xlu0 %3374
  %3376 = vrot.lane.b32.xlu0 %v1419, 32
  %v3377 = vpop.permute.xlu0 %3376
  %3378 = vrot.lane.b32.xlu0 %v1420, 32
  %v3379 = vpop.permute.xlu0 %3378
  %3380 = vrot.lane.b32.xlu0 %v1421, 32
  %v3381 = vpop.permute.xlu0 %3380
  %3382 = vrot.lane.b32.xlu0 %v1422, 32
  %v3383 = vpop.permute.xlu0 %3382
  %3384 = vrot.lane.b32.xlu0 %v1423, 32
  %v3385 = vpop.permute.xlu0 %3384
  %3386 = vrot.lane.b32.xlu0 %v1424, 32
  %v3387 = vpop.permute.xlu0 %3386
  %3388 = vrot.lane.b32.xlu0 %v1425, 32
  %v3389 = vpop.permute.xlu0 %3388
  %3390 = vrot.lane.b32.xlu0 %v1426, 32
  %v3391 = vpop.permute.xlu0 %3390
  %3392 = vrot.lane.b32.xlu0 %v1427, 32
  %v3393 = vpop.permute.xlu0 %3392
  %3394 = vrot.lane.b32.xlu0 %v1428, 32
  %v3395 = vpop.permute.xlu0 %3394
  %3396 = vrot.lane.b32.xlu0 %v1429, 32
  %v3397 = vpop.permute.xlu0 %3396
  %3398 = vrot.lane.b32.xlu0 %v1430, 32
  %v3399 = vpop.permute.xlu0 %3398
  %3400 = vrot.lane.b32.xlu0 %v1431, 32
  %v3401 = vpop.permute.xlu0 %3400
  %3402 = vrot.lane.b32.xlu0 %v1432, 32
  %v3403 = vpop.permute.xlu0 %3402
  %3404 = vrot.lane.b32.xlu0 %v1433, 32
  %v3405 = vpop.permute.xlu0 %3404
  %3406 = vrot.lane.b32.xlu0 %v1434, 32
  %v3407 = vpop.permute.xlu0 %3406
  %3408 = vrot.lane.b32.xlu0 %v1435, 32
  %v3409 = vpop.permute.xlu0 %3408
  %3410 = vrot.lane.b32.xlu0 %v1436, 32
  %v3411 = vpop.permute.xlu0 %3410
  %3412 = vrot.lane.b32.xlu0 %v1437, 32
  %v3413 = vpop.permute.xlu0 %3412
  %3414 = vrot.lane.b32.xlu0 %v1438, 32
  %v3415 = vpop.permute.xlu0 %3414
  %3416 = vrot.lane.b32.xlu0 %v1439, 32
  %v3417 = vpop.permute.xlu0 %3416
  %3418 = vrot.lane.b32.xlu0 %v1440, 32
  %v3419 = vpop.permute.xlu0 %3418
  %3420 = vrot.lane.b32.xlu0 %v1441, 32
  %v3421 = vpop.permute.xlu0 %3420
  %3422 = vrot.lane.b32.xlu0 %v1442, 32
  %v3423 = vpop.permute.xlu0 %3422
  %3424 = vrot.lane.b32.xlu0 %v1443, 32
  %v3425 = vpop.permute.xlu0 %3424
  %3426 = vrot.lane.b32.xlu0 %v1444, 32
  %v3427 = vpop.permute.xlu0 %3426
  %3428 = vrot.lane.b32.xlu0 %v1445, 32
  %v3429 = vpop.permute.xlu0 %3428
  %v3494 = vsel %vm716, %v869, %v1511
  %v3495 = vsel %vm716, %v870, %v1513
  %v3496 = vsel %vm716, %v871, %v1515
  %v3497 = vsel %vm716, %v872, %v1517
  %v3498 = vsel %vm716, %v873, %v1519
  %v3499 = vsel %vm716, %v874, %v1521
  %v3500 = vsel %vm716, %v875, %v1523
  %v3501 = vsel %vm716, %v876, %v1525
  %v3502 = vsel %vm716, %v877, %v1527
  %v3503 = vsel %vm716, %v878, %v1529
  %v3504 = vsel %vm716, %v879, %v1531
  %v3505 = vsel %vm716, %v880, %v1533
  %v3506 = vsel %vm716, %v881, %v1535
  %v3507 = vsel %vm716, %v882, %v1537
  %v3508 = vsel %vm716, %v883, %v1539
  %v3509 = vsel %vm716, %v884, %v1541
  %v3510 = vsel %vm716, %v885, %v1543
  %v3511 = vsel %vm716, %v886, %v1545
  %v3512 = vsel %vm716, %v887, %v1547
  %v3513 = vsel %vm716, %v888, %v1549
  %v3514 = vsel %vm716, %v889, %v1551
  %v3515 = vsel %vm716, %v890, %v1553
  %v3516 = vsel %vm716, %v891, %v1555
  %v3517 = vsel %vm716, %v892, %v1557
  %v3518 = vsel %vm716, %v893, %v1559
  %v3519 = vsel %vm716, %v894, %v1561
  %v3520 = vsel %vm716, %v895, %v1563
  %v3521 = vsel %vm716, %v896, %v1565
  %v3522 = vsel %vm716, %v897, %v1567
  %v3523 = vsel %vm716, %v898, %v1569
  %v3524 = vsel %vm716, %v899, %v1571
  %v3525 = vsel %vm716, %v900, %v1573
  %v3526 = vsel %vm716, %v901, %v1575
  %v3527 = vsel %vm716, %v902, %v1577
  %v3528 = vsel %vm716, %v903, %v1579
  %v3529 = vsel %vm716, %v904, %v1581
  %v3530 = vsel %vm716, %v905, %v1583
  %v3531 = vsel %vm716, %v906, %v1585
  %v3532 = vsel %vm716, %v907, %v1587
  %v3533 = vsel %vm716, %v908, %v1589
  %v3534 = vsel %vm716, %v909, %v1591
  %v3535 = vsel %vm716, %v910, %v1593
  %v3536 = vsel %vm716, %v911, %v1595
  %v3537 = vsel %vm716, %v912, %v1597
  %v3538 = vsel %vm716, %v913, %v1599
  %v3539 = vsel %vm716, %v914, %v1601
  %v3540 = vsel %vm716, %v915, %v1603
  %v3541 = vsel %vm716, %v916, %v1605
  %v3542 = vsel %vm716, %v917, %v1607
  %v3543 = vsel %vm716, %v918, %v1609
  %v3544 = vsel %vm716, %v919, %v1611
  %v3545 = vsel %vm716, %v920, %v1613
  %v3546 = vsel %vm716, %v921, %v1615
  %v3547 = vsel %vm716, %v922, %v1617
  %v3548 = vsel %vm716, %v923, %v1619
  %v3549 = vsel %vm716, %v924, %v1621
  %v3550 = vsel %vm716, %v925, %v1623
  %v3551 = vsel %vm716, %v926, %v1625
  %v3552 = vsel %vm716, %v927, %v1627
  %v3553 = vsel %vm716, %v928, %v1629
  %v3554 = vsel %vm716, %v929, %v1631
  %v3555 = vsel %vm716, %v930, %v1633
  %v3556 = vsel %vm716, %v931, %v1635
  %v3557 = vsel %vm716, %v932, %v1637
  %vm3558 = vcmask 64512
  %v3559 = vsel %vm3558, %v3494, %v1767
  %v3560 = vsel %vm3558, %v3495, %v1769
  %v3561 = vsel %vm3558, %v3496, %v1771
  %v3562 = vsel %vm3558, %v3497, %v1773
  %v3563 = vsel %vm3558, %v3498, %v1775
  %v3564 = vsel %vm3558, %v3499, %v1777
  %v3565 = vsel %vm3558, %v3500, %v1779
  %v3566 = vsel %vm3558, %v3501, %v1781
  %v3567 = vsel %vm3558, %v3502, %v1783
  %v3568 = vsel %vm3558, %v3503, %v1785
  %v3569 = vsel %vm3558, %v3504, %v1787
  %v3570 = vsel %vm3558, %v3505, %v1789
  %v3571 = vsel %vm3558, %v3506, %v1791
  %v3572 = vsel %vm3558, %v3507, %v1793
  %v3573 = vsel %vm3558, %v3508, %v1795
  %v3574 = vsel %vm3558, %v3509, %v1797
  %v3575 = vsel %vm3558, %v3510, %v1799
  %v3576 = vsel %vm3558, %v3511, %v1801
  %v3577 = vsel %vm3558, %v3512, %v1803
  %v3578 = vsel %vm3558, %v3513, %v1805
  %v3579 = vsel %vm3558, %v3514, %v1807
  %v3580 = vsel %vm3558, %v3515, %v1809
  %v3581 = vsel %vm3558, %v3516, %v1811
  %v3582 = vsel %vm3558, %v3517, %v1813
  %v3583 = vsel %vm3558, %v3518, %v1815
  %v3584 = vsel %vm3558, %v3519, %v1817
  %v3585 = vsel %vm3558, %v3520, %v1819
  %v3586 = vsel %vm3558, %v3521, %v1821
  %v3587 = vsel %vm3558, %v3522, %v1823
  %v3588 = vsel %vm3558, %v3523, %v1825
  %v3589 = vsel %vm3558, %v3524, %v1827
  %v3590 = vsel %vm3558, %v3525, %v1829
  %v3591 = vsel %vm3558, %v3526, %v1831
  %v3592 = vsel %vm3558, %v3527, %v1833
  %v3593 = vsel %vm3558, %v3528, %v1835
  %v3594 = vsel %vm3558, %v3529, %v1837
  %v3595 = vsel %vm3558, %v3530, %v1839
  %v3596 = vsel %vm3558, %v3531, %v1841
  %v3597 = vsel %vm3558, %v3532, %v1843
  %v3598 = vsel %vm3558, %v3533, %v1845
  %v3599 = vsel %vm3558, %v3534, %v1847
  %v3600 = vsel %vm3558, %v3535, %v1849
  %v3601 = vsel %vm3558, %v3536, %v1851
  %v3602 = vsel %vm3558, %v3537, %v1853
  %v3603 = vsel %vm3558, %v3538, %v1855
  %v3604 = vsel %vm3558, %v3539, %v1857
  %v3605 = vsel %vm3558, %v3540, %v1859
  %v3606 = vsel %vm3558, %v3541, %v1861
  %v3607 = vsel %vm3558, %v3542, %v1863
  %v3608 = vsel %vm3558, %v3543, %v1865
  %v3609 = vsel %vm3558, %v3544, %v1867
  %v3610 = vsel %vm3558, %v3545, %v1869
  %v3611 = vsel %vm3558, %v3546, %v1871
  %v3612 = vsel %vm3558, %v3547, %v1873
  %v3613 = vsel %vm3558, %v3548, %v1875
  %v3614 = vsel %vm3558, %v3549, %v1877
  %v3615 = vsel %vm3558, %v3550, %v1879
  %v3616 = vsel %vm3558, %v3551, %v1881
  %v3617 = vsel %vm3558, %v3552, %v1883
  %v3618 = vsel %vm3558, %v3553, %v1885
  %v3619 = vsel %vm3558, %v3554, %v1887
  %v3620 = vsel %vm3558, %v3555, %v1889
  %v3621 = vsel %vm3558, %v3556, %v1891
  %v3622 = vsel %vm3558, %v3557, %v1893
  %vm3623 = vcmask 97280
  %v3624 = vsel %vm3623, %v3559, %v2023
  %v3625 = vsel %vm3623, %v3560, %v2025
  %v3626 = vsel %vm3623, %v3561, %v2027
  %v3627 = vsel %vm3623, %v3562, %v2029
  %v3628 = vsel %vm3623, %v3563, %v2031
  %v3629 = vsel %vm3623, %v3564, %v2033
  %v3630 = vsel %vm3623, %v3565, %v2035
  %v3631 = vsel %vm3623, %v3566, %v2037
  %v3632 = vsel %vm3623, %v3567, %v2039
  %v3633 = vsel %vm3623, %v3568, %v2041
  %v3634 = vsel %vm3623, %v3569, %v2043
  %v3635 = vsel %vm3623, %v3570, %v2045
  %v3636 = vsel %vm3623, %v3571, %v2047
  %v3637 = vsel %vm3623, %v3572, %v2049
  %v3638 = vsel %vm3623, %v3573, %v2051
  %v3639 = vsel %vm3623, %v3574, %v2053
  %v3640 = vsel %vm3623, %v3575, %v2055
  %v3641 = vsel %vm3623, %v3576, %v2057
  %v3642 = vsel %vm3623, %v3577, %v2059
  %v3643 = vsel %vm3623, %v3578, %v2061
  %v3644 = vsel %vm3623, %v3579, %v2063
  %v3645 = vsel %vm3623, %v3580, %v2065
  %v3646 = vsel %vm3623, %v3581, %v2067
  %v3647 = vsel %vm3623, %v3582, %v2069
  %v3648 = vsel %vm3623, %v3583, %v2071
  %v3649 = vsel %vm3623, %v3584, %v2073
  %v3650 = vsel %vm3623, %v3585, %v2075
  %v3651 = vsel %vm3623, %v3586, %v2077
  %v3652 = vsel %vm3623, %v3587, %v2079
  %v3653 = vsel %vm3623, %v3588, %v2081
  %v3654 = vsel %vm3623, %v3589, %v2083
  %v3655 = vsel %vm3623, %v3590, %v2085
  %v3656 = vsel %vm3623, %v3591, %v2087
  %v3657 = vsel %vm3623, %v3592, %v2089
  %v3658 = vsel %vm3623, %v3593, %v2091
  %v3659 = vsel %vm3623, %v3594, %v2093
  %v3660 = vsel %vm3623, %v3595, %v2095
  %v3661 = vsel %vm3623, %v3596, %v2097
  %v3662 = vsel %vm3623, %v3597, %v2099
  %v3663 = vsel %vm3623, %v3598, %v2101
  %v3664 = vsel %vm3623, %v3599, %v2103
  %v3665 = vsel %vm3623, %v3600, %v2105
  %v3666 = vsel %vm3623, %v3601, %v2107
  %v3667 = vsel %vm3623, %v3602, %v2109
  %v3668 = vsel %vm3623, %v3603, %v2111
  %v3669 = vsel %vm3623, %v3604, %v2113
  %v3670 = vsel %vm3623, %v3605, %v2115
  %v3671 = vsel %vm3623, %v3606, %v2117
  %v3672 = vsel %vm3623, %v3607, %v2119
  %v3673 = vsel %vm3623, %v3608, %v2121
  %v3674 = vsel %vm3623, %v3609, %v2123
  %v3675 = vsel %vm3623, %v3610, %v2125
  %v3676 = vsel %vm3623, %v3611, %v2127
  %v3677 = vsel %vm3623, %v3612, %v2129
  %v3678 = vsel %vm3623, %v3613, %v2131
  %v3679 = vsel %vm3623, %v3614, %v2133
  %v3680 = vsel %vm3623, %v3615, %v2135
  %v3681 = vsel %vm3623, %v3616, %v2137
  %v3682 = vsel %vm3623, %v3617, %v2139
  %v3683 = vsel %vm3623, %v3618, %v2141
  %v3684 = vsel %vm3623, %v3619, %v2143
  %v3685 = vsel %vm3623, %v3620, %v2145
  %v3686 = vsel %vm3623, %v3621, %v2147
  %v3687 = vsel %vm3623, %v3622, %v2149
  %v3688 = vsel %vm266, %v3624, %v2279
  %v3689 = vsel %vm266, %v3625, %v2281
  %v3690 = vsel %vm266, %v3626, %v2283
  %v3691 = vsel %vm266, %v3627, %v2285
  %v3692 = vsel %vm266, %v3628, %v2287
  %v3693 = vsel %vm266, %v3629, %v2289
  %v3694 = vsel %vm266, %v3630, %v2291
  %v3695 = vsel %vm266, %v3631, %v2293
  %v3696 = vsel %vm266, %v3632, %v2295
  %v3697 = vsel %vm266, %v3633, %v2297
  %v3698 = vsel %vm266, %v3634, %v2299
  %v3699 = vsel %vm266, %v3635, %v2301
  %v3700 = vsel %vm266, %v3636, %v2303
  %v3701 = vsel %vm266, %v3637, %v2305
  %v3702 = vsel %vm266, %v3638, %v2307
  %v3703 = vsel %vm266, %v3639, %v2309
  %v3704 = vsel %vm266, %v3640, %v2311
  %v3705 = vsel %vm266, %v3641, %v2313
  %v3706 = vsel %vm266, %v3642, %v2315
  %v3707 = vsel %vm266, %v3643, %v2317
  %v3708 = vsel %vm266, %v3644, %v2319
  %v3709 = vsel %vm266, %v3645, %v2321
  %v3710 = vsel %vm266, %v3646, %v2323
  %v3711 = vsel %vm266, %v3647, %v2325
  %v3712 = vsel %vm266, %v3648, %v2327
  %v3713 = vsel %vm266, %v3649, %v2329
  %v3714 = vsel %vm266, %v3650, %v2331
  %v3715 = vsel %vm266, %v3651, %v2333
  %v3716 = vsel %vm266, %v3652, %v2335
  %v3717 = vsel %vm266, %v3653, %v2337
  %v3718 = vsel %vm266, %v3654, %v2339
  %v3719 = vsel %vm266, %v3655, %v2341
  %v3720 = vsel %vm266, %v3656, %v2343
  %v3721 = vsel %vm266, %v3657, %v2345
  %v3722 = vsel %vm266, %v3658, %v2347
  %v3723 = vsel %vm266, %v3659, %v2349
  %v3724 = vsel %vm266, %v3660, %v2351
  %v3725 = vsel %vm266, %v3661, %v2353
  %v3726 = vsel %vm266, %v3662, %v2355
  %v3727 = vsel %vm266, %v3663, %v2357
  %v3728 = vsel %vm266, %v3664, %v2359
  %v3729 = vsel %vm266, %v3665, %v2361
  %v3730 = vsel %vm266, %v3666, %v2363
  %v3731 = vsel %vm266, %v3667, %v2365
  %v3732 = vsel %vm266, %v3668, %v2367
  %v3733 = vsel %vm266, %v3669, %v2369
  %v3734 = vsel %vm266, %v3670, %v2371
  %v3735 = vsel %vm266, %v3671, %v2373
  %v3736 = vsel %vm266, %v3672, %v2375
  %v3737 = vsel %vm266, %v3673, %v2377
  %v3738 = vsel %vm266, %v3674, %v2379
  %v3739 = vsel %vm266, %v3675, %v2381
  %v3740 = vsel %vm266, %v3676, %v2383
  %v3741 = vsel %vm266, %v3677, %v2385
  %v3742 = vsel %vm266, %v3678, %v2387
  %v3743 = vsel %vm266, %v3679, %v2389
  %v3744 = vsel %vm266, %v3680, %v2391
  %v3745 = vsel %vm266, %v3681, %v2393
  %v3746 = vsel %vm266, %v3682, %v2395
  %v3747 = vsel %vm266, %v3683, %v2397
  %v3748 = vsel %vm266, %v3684, %v2399
  %v3749 = vsel %vm266, %v3685, %v2401
  %v3750 = vsel %vm266, %v3686, %v2403
  %v3751 = vsel %vm266, %v3687, %v2405
  %vm3752 = vcmask 162816
  %v3753 = vsel %vm3752, %v3688, %v2535
  %v3754 = vsel %vm3752, %v3689, %v2537
  %v3755 = vsel %vm3752, %v3690, %v2539
  %v3756 = vsel %vm3752, %v3691, %v2541
  %v3757 = vsel %vm3752, %v3692, %v2543
  %v3758 = vsel %vm3752, %v3693, %v2545
  %v3759 = vsel %vm3752, %v3694, %v2547
  %v3760 = vsel %vm3752, %v3695, %v2549
  %v3761 = vsel %vm3752, %v3696, %v2551
  %v3762 = vsel %vm3752, %v3697, %v2553
  %v3763 = vsel %vm3752, %v3698, %v2555
  %v3764 = vsel %vm3752, %v3699, %v2557
  %v3765 = vsel %vm3752, %v3700, %v2559
  %v3766 = vsel %vm3752, %v3701, %v2561
  %v3767 = vsel %vm3752, %v3702, %v2563
  %v3768 = vsel %vm3752, %v3703, %v2565
  %v3769 = vsel %vm3752, %v3704, %v2567
  %v3770 = vsel %vm3752, %v3705, %v2569
  %v3771 = vsel %vm3752, %v3706, %v2571
  %v3772 = vsel %vm3752, %v3707, %v2573
  %v3773 = vsel %vm3752, %v3708, %v2575
  %v3774 = vsel %vm3752, %v3709, %v2577
  %v3775 = vsel %vm3752, %v3710, %v2579
  %v3776 = vsel %vm3752, %v3711, %v2581
  %v3777 = vsel %vm3752, %v3712, %v2583
  %v3778 = vsel %vm3752, %v3713, %v2585
  %v3779 = vsel %vm3752, %v3714, %v2587
  %v3780 = vsel %vm3752, %v3715, %v2589
  %v3781 = vsel %vm3752, %v3716, %v2591
  %v3782 = vsel %vm3752, %v3717, %v2593
  %v3783 = vsel %vm3752, %v3718, %v2595
  %v3784 = vsel %vm3752, %v3719, %v2597
  %v3785 = vsel %vm3752, %v3720, %v2599
  %v3786 = vsel %vm3752, %v3721, %v2601
  %v3787 = vsel %vm3752, %v3722, %v2603
  %v3788 = vsel %vm3752, %v3723, %v2605
  %v3789 = vsel %vm3752, %v3724, %v2607
  %v3790 = vsel %vm3752, %v3725, %v2609
  %v3791 = vsel %vm3752, %v3726, %v2611
  %v3792 = vsel %vm3752, %v3727, %v2613
  %v3793 = vsel %vm3752, %v3728, %v2615
  %v3794 = vsel %vm3752, %v3729, %v2617
  %v3795 = vsel %vm3752, %v3730, %v2619
  %v3796 = vsel %vm3752, %v3731, %v2621
  %v3797 = vsel %vm3752, %v3732, %v2623
  %v3798 = vsel %vm3752, %v3733, %v2625
  %v3799 = vsel %vm3752, %v3734, %v2627
  %v3800 = vsel %vm3752, %v3735, %v2629
  %v3801 = vsel %vm3752, %v3736, %v2631
  %v3802 = vsel %vm3752, %v3737, %v2633
  %v3803 = vsel %vm3752, %v3738, %v2635
  %v3804 = vsel %vm3752, %v3739, %v2637
  %v3805 = vsel %vm3752, %v3740, %v2639
  %v3806 = vsel %vm3752, %v3741, %v2641
  %v3807 = vsel %vm3752, %v3742, %v2643
  %v3808 = vsel %vm3752, %v3743, %v2645
  %v3809 = vsel %vm3752, %v3744, %v2647
  %v3810 = vsel %vm3752, %v3745, %v2649
  %v3811 = vsel %vm3752, %v3746, %v2651
  %v3812 = vsel %vm3752, %v3747, %v2653
  %v3813 = vsel %vm3752, %v3748, %v2655
  %v3814 = vsel %vm3752, %v3749, %v2657
  %v3815 = vsel %vm3752, %v3750, %v2659
  %v3816 = vsel %vm3752, %v3751, %v2661
  %vm3817 = vcmask 195584
  %v3818 = vsel %vm3817, %v3753, %v2791
  %v3819 = vsel %vm3817, %v3754, %v2793
  %v3820 = vsel %vm3817, %v3755, %v2795
  %v3821 = vsel %vm3817, %v3756, %v2797
  %v3822 = vsel %vm3817, %v3757, %v2799
  %v3823 = vsel %vm3817, %v3758, %v2801
  %v3824 = vsel %vm3817, %v3759, %v2803
  %v3825 = vsel %vm3817, %v3760, %v2805
  %v3826 = vsel %vm3817, %v3761, %v2807
  %v3827 = vsel %vm3817, %v3762, %v2809
  %v3828 = vsel %vm3817, %v3763, %v2811
  %v3829 = vsel %vm3817, %v3764, %v2813
  %v3830 = vsel %vm3817, %v3765, %v2815
  %v3831 = vsel %vm3817, %v3766, %v2817
  %v3832 = vsel %vm3817, %v3767, %v2819
  %v3833 = vsel %vm3817, %v3768, %v2821
  %v3834 = vsel %vm3817, %v3769, %v2823
  %v3835 = vsel %vm3817, %v3770, %v2825
  %v3836 = vsel %vm3817, %v3771, %v2827
  %v3837 = vsel %vm3817, %v3772, %v2829
  %v3838 = vsel %vm3817, %v3773, %v2831
  %v3839 = vsel %vm3817, %v3774, %v2833
  %v3840 = vsel %vm3817, %v3775, %v2835
  %v3841 = vsel %vm3817, %v3776, %v2837
  %v3842 = vsel %vm3817, %v3777, %v2839
  %v3843 = vsel %vm3817, %v3778, %v2841
  %v3844 = vsel %vm3817, %v3779, %v2843
  %v3845 = vsel %vm3817, %v3780, %v2845
  %v3846 = vsel %vm3817, %v3781, %v2847
  %v3847 = vsel %vm3817, %v3782, %v2849
  %v3848 = vsel %vm3817, %v3783, %v2851
  %v3849 = vsel %vm3817, %v3784, %v2853
  %v3850 = vsel %vm3817, %v3785, %v2855
  %v3851 = vsel %vm3817, %v3786, %v2857
  %v3852 = vsel %vm3817, %v3787, %v2859
  %v3853 = vsel %vm3817, %v3788, %v2861
  %v3854 = vsel %vm3817, %v3789, %v2863
  %v3855 = vsel %vm3817, %v3790, %v2865
  %v3856 = vsel %vm3817, %v3791, %v2867
  %v3857 = vsel %vm3817, %v3792, %v2869
  %v3858 = vsel %vm3817, %v3793, %v2871
  %v3859 = vsel %vm3817, %v3794, %v2873
  %v3860 = vsel %vm3817, %v3795, %v2875
  %v3861 = vsel %vm3817, %v3796, %v2877
  %v3862 = vsel %vm3817, %v3797, %v2879
  %v3863 = vsel %vm3817, %v3798, %v2881
  %v3864 = vsel %vm3817, %v3799, %v2883
  %v3865 = vsel %vm3817, %v3800, %v2885
  %v3866 = vsel %vm3817, %v3801, %v2887
  %v3867 = vsel %vm3817, %v3802, %v2889
  %v3868 = vsel %vm3817, %v3803, %v2891
  %v3869 = vsel %vm3817, %v3804, %v2893
  %v3870 = vsel %vm3817, %v3805, %v2895
  %v3871 = vsel %vm3817, %v3806, %v2897
  %v3872 = vsel %vm3817, %v3807, %v2899
  %v3873 = vsel %vm3817, %v3808, %v2901
  %v3874 = vsel %vm3817, %v3809, %v2903
  %v3875 = vsel %vm3817, %v3810, %v2905
  %v3876 = vsel %vm3817, %v3811, %v2907
  %v3877 = vsel %vm3817, %v3812, %v2909
  %v3878 = vsel %vm3817, %v3813, %v2911
  %v3879 = vsel %vm3817, %v3814, %v2913
  %v3880 = vsel %vm3817, %v3815, %v2915
  %v3881 = vsel %vm3817, %v3816, %v2917
  %vm3882 = vcmask 228352
  %v3883 = vsel %vm3882, %v3818, %v3047
  %v3884 = vsel %vm3882, %v3819, %v3049
  %v3885 = vsel %vm3882, %v3820, %v3051
  %v3886 = vsel %vm3882, %v3821, %v3053
  %v3887 = vsel %vm3882, %v3822, %v3055
  %v3888 = vsel %vm3882, %v3823, %v3057
  %v3889 = vsel %vm3882, %v3824, %v3059
  %v3890 = vsel %vm3882, %v3825, %v3061
  %v3891 = vsel %vm3882, %v3826, %v3063
  %v3892 = vsel %vm3882, %v3827, %v3065
  %v3893 = vsel %vm3882, %v3828, %v3067
  %v3894 = vsel %vm3882, %v3829, %v3069
  %v3895 = vsel %vm3882, %v3830, %v3071
  %v3896 = vsel %vm3882, %v3831, %v3073
  %v3897 = vsel %vm3882, %v3832, %v3075
  %v3898 = vsel %vm3882, %v3833, %v3077
  %v3899 = vsel %vm3882, %v3834, %v3079
  %v3900 = vsel %vm3882, %v3835, %v3081
  %v3901 = vsel %vm3882, %v3836, %v3083
  %v3902 = vsel %vm3882, %v3837, %v3085
  %v3903 = vsel %vm3882, %v3838, %v3087
  %v3904 = vsel %vm3882, %v3839, %v3089
  %v3905 = vsel %vm3882, %v3840, %v3091
  %v3906 = vsel %vm3882, %v3841, %v3093
  %v3907 = vsel %vm3882, %v3842, %v3095
  %v3908 = vsel %vm3882, %v3843, %v3097
  %v3909 = vsel %vm3882, %v3844, %v3099
  %v3910 = vsel %vm3882, %v3845, %v3101
  %v3911 = vsel %vm3882, %v3846, %v3103
  %v3912 = vsel %vm3882, %v3847, %v3105
  %v3913 = vsel %vm3882, %v3848, %v3107
  %v3914 = vsel %vm3882, %v3849, %v3109
  %v3915 = vsel %vm3882, %v3850, %v3111
  %v3916 = vsel %vm3882, %v3851, %v3113
  %v3917 = vsel %vm3882, %v3852, %v3115
  %v3918 = vsel %vm3882, %v3853, %v3117
  %v3919 = vsel %vm3882, %v3854, %v3119
  %v3920 = vsel %vm3882, %v3855, %v3121
  %v3921 = vsel %vm3882, %v3856, %v3123
  %v3922 = vsel %vm3882, %v3857, %v3125
  %v3923 = vsel %vm3882, %v3858, %v3127
  %v3924 = vsel %vm3882, %v3859, %v3129
  %v3925 = vsel %vm3882, %v3860, %v3131
  %v3926 = vsel %vm3882, %v3861, %v3133
  %v3927 = vsel %vm3882, %v3862, %v3135
  %v3928 = vsel %vm3882, %v3863, %v3137
  %v3929 = vsel %vm3882, %v3864, %v3139
  %v3930 = vsel %vm3882, %v3865, %v3141
  %v3931 = vsel %vm3882, %v3866, %v3143
  %v3932 = vsel %vm3882, %v3867, %v3145
  %v3933 = vsel %vm3882, %v3868, %v3147
  %v3934 = vsel %vm3882, %v3869, %v3149
  %v3935 = vsel %vm3882, %v3870, %v3151
  %v3936 = vsel %vm3882, %v3871, %v3153
  %v3937 = vsel %vm3882, %v3872, %v3155
  %v3938 = vsel %vm3882, %v3873, %v3157
  %v3939 = vsel %vm3882, %v3874, %v3159
  %v3940 = vsel %vm3882, %v3875, %v3161
  %v3941 = vsel %vm3882, %v3876, %v3163
  %v3942 = vsel %vm3882, %v3877, %v3165
  %v3943 = vsel %vm3882, %v3878, %v3167
  %v3944 = vsel %vm3882, %v3879, %v3169
  %v3945 = vsel %vm3882, %v3880, %v3171
  %v3946 = vsel %vm3882, %v3881, %v3173
  %vm3947 = vcmask 261120
  %v3948 = vsel %vm3947, %v3883, %v3303
  %v3949 = vsel %vm3947, %v3884, %v3305
  %v3950 = vsel %vm3947, %v3885, %v3307
  %v3951 = vsel %vm3947, %v3886, %v3309
  %v3952 = vsel %vm3947, %v3887, %v3311
  %v3953 = vsel %vm3947, %v3888, %v3313
  %v3954 = vsel %vm3947, %v3889, %v3315
  %v3955 = vsel %vm3947, %v3890, %v3317
  %v3956 = vsel %vm3947, %v3891, %v3319
  %v3957 = vsel %vm3947, %v3892, %v3321
  %v3958 = vsel %vm3947, %v3893, %v3323
  %v3959 = vsel %vm3947, %v3894, %v3325
  %v3960 = vsel %vm3947, %v3895, %v3327
  %v3961 = vsel %vm3947, %v3896, %v3329
  %v3962 = vsel %vm3947, %v3897, %v3331
  %v3963 = vsel %vm3947, %v3898, %v3333
  %v3964 = vsel %vm3947, %v3899, %v3335
  %v3965 = vsel %vm3947, %v3900, %v3337
  %v3966 = vsel %vm3947, %v3901, %v3339
  %v3967 = vsel %vm3947, %v3902, %v3341
  %v3968 = vsel %vm3947, %v3903, %v3343
  %v3969 = vsel %vm3947, %v3904, %v3345
  %v3970 = vsel %vm3947, %v3905, %v3347
  %v3971 = vsel %vm3947, %v3906, %v3349
  %v3972 = vsel %vm3947, %v3907, %v3351
  %v3973 = vsel %vm3947, %v3908, %v3353
  %v3974 = vsel %vm3947, %v3909, %v3355
  %v3975 = vsel %vm3947, %v3910, %v3357
  %v3976 = vsel %vm3947, %v3911, %v3359
  %v3977 = vsel %vm3947, %v3912, %v3361
  %v3978 = vsel %vm3947, %v3913, %v3363
  %v3979 = vsel %vm3947, %v3914, %v3365
  %v3980 = vsel %vm3947, %v3915, %v3367
  %v3981 = vsel %vm3947, %v3916, %v3369
  %v3982 = vsel %vm3947, %v3917, %v3371
  %v3983 = vsel %vm3947, %v3918, %v3373
  %v3984 = vsel %vm3947, %v3919, %v3375
  %v3985 = vsel %vm3947, %v3920, %v3377
  %v3986 = vsel %vm3947, %v3921, %v3379
  %v3987 = vsel %vm3947, %v3922, %v3381
  %v3988 = vsel %vm3947, %v3923, %v3383
  %v3989 = vsel %vm3947, %v3924, %v3385
  %v3990 = vsel %vm3947, %v3925, %v3387
  %v3991 = vsel %vm3947, %v3926, %v3389
  %v3992 = vsel %vm3947, %v3927, %v3391
  %v3993 = vsel %vm3947, %v3928, %v3393
  %v3994 = vsel %vm3947, %v3929, %v3395
  %v3995 = vsel %vm3947, %v3930, %v3397
  %v3996 = vsel %vm3947, %v3931, %v3399
  %v3997 = vsel %vm3947, %v3932, %v3401
  %v3998 = vsel %vm3947, %v3933, %v3403
  %v3999 = vsel %vm3947, %v3934, %v3405
  %v4000 = vsel %vm3947, %v3935, %v3407
  %v4001 = vsel %vm3947, %v3936, %v3409
  %v4002 = vsel %vm3947, %v3937, %v3411
  %v4003 = vsel %vm3947, %v3938, %v3413
  %v4004 = vsel %vm3947, %v3939, %v3415
  %v4005 = vsel %vm3947, %v3940, %v3417
  %v4006 = vsel %vm3947, %v3941, %v3419
  %v4007 = vsel %vm3947, %v3942, %v3421
  %v4008 = vsel %vm3947, %v3943, %v3423
  %v4009 = vsel %vm3947, %v3944, %v3425
  %v4010 = vsel %vm3947, %v3945, %v3427
  %v4011 = vsel %vm3947, %v3946, %v3429
  %v4012 = vpack.c.bf16 %v3949, %v3948
  %v4013 = vpack.c.bf16 %v3951, %v3950
  %v4014 = vpack.c.bf16 %v3953, %v3952
  %v4015 = vpack.c.bf16 %v3955, %v3954
  %v4016 = vpack.c.bf16 %v3957, %v3956
  %v4017 = vpack.c.bf16 %v3959, %v3958
  %v4018 = vpack.c.bf16 %v3961, %v3960
  %v4019 = vpack.c.bf16 %v3963, %v3962
  %v4020 = vpack.c.bf16 %v3965, %v3964
  %v4021 = vpack.c.bf16 %v3967, %v3966
  %v4022 = vpack.c.bf16 %v3969, %v3968
  %v4023 = vpack.c.bf16 %v3971, %v3970
  %v4024 = vpack.c.bf16 %v3973, %v3972
  %v4025 = vpack.c.bf16 %v3975, %v3974
  %v4026 = vpack.c.bf16 %v3977, %v3976
  %v4027 = vpack.c.bf16 %v3979, %v3978
  %v4028 = vpack.c.bf16 %v3981, %v3980
  %v4029 = vpack.c.bf16 %v3983, %v3982
  %v4030 = vpack.c.bf16 %v3985, %v3984
  %v4031 = vpack.c.bf16 %v3987, %v3986
  %v4032 = vpack.c.bf16 %v3989, %v3988
  %v4033 = vpack.c.bf16 %v3991, %v3990
  %v4034 = vpack.c.bf16 %v3993, %v3992
  %v4035 = vpack.c.bf16 %v3995, %v3994
  %v4036 = vpack.c.bf16 %v3997, %v3996
  %v4037 = vpack.c.bf16 %v3999, %v3998
  %v4038 = vpack.c.bf16 %v4001, %v4000
  %v4039 = vpack.c.bf16 %v4003, %v4002
  %v4040 = vpack.c.bf16 %v4005, %v4004
  %v4041 = vpack.c.bf16 %v4007, %v4006
  %v4042 = vpack.c.bf16 %v4009, %v4008
  %v4043 = vpack.c.bf16 %v4011, %v4010
  %v4044 = vld [vmem:[%s3] sm:$0xf]
  %v4045 = vld [vmem:[%s3 + $0x4] sm:$0xf]
  %v4046 = vld [vmem:[%s3 + $0x8] sm:$0xf]
  %v4047 = vld [vmem:[%s3 + $0xc] sm:$0xf]
  %v4048 = vld [vmem:[%s3 + $0x10] sm:$0x3]
  %v4049 = vld [vmem:[%s4] sm:$0x1]
  %v4051 = vlaneseq
  %v4052 = vshrl.u32 %v4051, 7
  %v4053 = vsub.s32 0, %v4052
  %v4054 = vrot.slane %v4049, %v4053
  %v4061 = vunpack.c.l.b16 %v4044
  %v4062 = vunpack.c.l.b16 %v4045
  %v4063 = vunpack.c.l.b16 %v4046
  %v4064 = vunpack.c.l.b16 %v4047
  %v4065 = vunpack.c.l.b16 %v4048
  %v4066 = vpack.c.b16 %v4062, %v4061
  %v4067 = vpack.c.b16 %v4064, %v4063
  %v4068 = vpack.c.b16 %v4065, %v4065
  %vm4071 = vcmask 293888
  %v4073 = vsel %vm4071, %v4012, 0
  %v4076 = vsel %vm4071, %v4013, 0
  %v4079 = vsel %vm4071, %v4014, 0
  %v4082 = vsel %vm4071, %v4015, 0
  %v4085 = vsel %vm4071, %v4016, 0
  %v4088 = vsel %vm4071, %v4017, 0
  %v4091 = vsel %vm4071, %v4018, 0
  %v4094 = vsel %vm4071, %v4019, 0
  %v4097 = vsel %vm4071, %v4020, 0
  %v4100 = vsel %vm4071, %v4021, 0
  %v4103 = vsel %vm4071, %v4022, 0
  %v4106 = vsel %vm4071, %v4023, 0
  %v4109 = vsel %vm4071, %v4024, 0
  %v4112 = vsel %vm4071, %v4025, 0
  %v4115 = vsel %vm4071, %v4026, 0
  %v4118 = vsel %vm4071, %v4027, 0
  %v4121 = vsel %vm4071, %v4028, 0
  %v4124 = vsel %vm4071, %v4029, 0
  %v4127 = vsel %vm4071, %v4030, 0
  %v4130 = vsel %vm4071, %v4031, 0
  %v4133 = vsel %vm4071, %v4032, 0
  %v4136 = vsel %vm4071, %v4033, 0
  %v4139 = vsel %vm4071, %v4034, 0
  %v4142 = vsel %vm4071, %v4035, 0
  %v4145 = vsel %vm4071, %v4036, 0
  %v4148 = vsel %vm4071, %v4037, 0
  %v4151 = vsel %vm4071, %v4038, 0
  %v4154 = vsel %vm4071, %v4039, 0
  %v4157 = vsel %vm4071, %v4040, 0
  %v4160 = vsel %vm4071, %v4041, 0
  %v4163 = vsel %vm4071, %v4042, 0
  %v4166 = vsel %vm4071, %v4043, 0
  %vm4168 = vcmask 1041408
  %v4170 = vsel %vm4168, %v4068, 0
  %4172 = vmatprep.subr.bf16.mxu0 0
  %4173 = vmatpush1.bf16.msra.mxu0 %v4066
  %4174 = vmatprep.subr.bf16.mxu0 0
  %4175 = vmatpush1.bf16.msra.mxu0 %v4067
  %4176 = vmatprep.subr.bf16.mxu0 0
  %4177 = vmatpush1.bf16.msra.mxu0 %v4170
  %4178 = vmatprep.subr.bf16.mxu0 0
  %4179 = vmatpush1.bf16.msra.mxu0 0
  %4180 = vmatprep.subr.bf16.mxu0 0
  %4181 = vmatpush1.bf16.msra.mxu0 0
  %4182 = vmatprep.subr.bf16.mxu0 0
  %4183 = vmatpush1.bf16.msra.mxu0 0
  %4184 = vmatprep.subr.bf16.mxu0 0
  %4185 = vmatpush1.bf16.msra.mxu0 0
  %4186 = vmatprep.subr.bf16.mxu0 0
  %4187 = vmatpush1.bf16.msra.mxu0 0
  %4188 = vmatprep.subr.bf16.mxu0 0
  %4189 = vmatpush1.bf16.msra.mxu0 0
  %4190 = vmatprep.subr.bf16.mxu0 0
  %4191 = vmatpush1.bf16.msra.mxu0 0
  %4192 = vmatprep.subr.bf16.mxu0 0
  %4193 = vmatpush1.bf16.msra.mxu0 0
  %4194 = vmatprep.subr.bf16.mxu0 0
  %4195 = vmatpush1.bf16.msra.mxu0 0
  %4196 = vmatprep.subr.bf16.mxu0 0
  %4197 = vmatpush1.bf16.msra.mxu0 0
  %4198 = vmatprep.subr.bf16.mxu0 0
  %4199 = vmatpush1.bf16.msra.mxu0 0
  %4200 = vmatprep.subr.bf16.mxu0 0
  %4201 = vmatpush1.bf16.msra.mxu0 0
  %4202 = vmatprep.subr.bf16.mxu0 0
  %4203 = vmatpush1.bf16.msra.mxu0 0
  %4204 = vmatprep.mubr.bf16.mxu0 0
  %4205 = vmatmul.mubr.bf16.gmra.mrb[0].mxu0 %v4073
  %v4206 = vpop.f32.mrb[0].mxu0
  %v4207 = vadd.f32 %v4054, %v4206
  %v4208 = vpop.f32.mrb[0].mxu0
  %v4209 = vpop.f32.mrb[0].mxu0
  %v4210 = vadd.f32 %v4054, %v4209
  %v4211 = vpop.f32.mrb[0].mxu0
  %4212 = vmatprep.mubr.bf16.mxu0 0
  %4213 = vmatmul.mubr.bf16.gmra.mrb[0].mxu0 %v4076
  %v4214 = vpop.f32.mrb[0].mxu0
  %v4215 = vadd.f32 %v4054, %v4214
  %v4216 = vpop.f32.mrb[0].mxu0
  %v4217 = vpop.f32.mrb[0].mxu0
  %v4218 = vadd.f32 %v4054, %v4217
  %v4219 = vpop.f32.mrb[0].mxu0
  %4220 = vmatprep.mubr.bf16.mxu0 0
  %4221 = vmatmul.mubr.bf16.gmra.mrb[0].mxu0 %v4079
  %v4222 = vpop.f32.mrb[0].mxu0
  %v4223 = vadd.f32 %v4054, %v4222
  %v4224 = vpop.f32.mrb[0].mxu0
  %v4225 = vpop.f32.mrb[0].mxu0
  %v4226 = vadd.f32 %v4054, %v4225
  %v4227 = vpop.f32.mrb[0].mxu0
  %4228 = vmatprep.mubr.bf16.mxu0 0
  %4229 = vmatmul.mubr.bf16.gmra.mrb[0].mxu0 %v4082
  %v4230 = vpop.f32.mrb[0].mxu0
  %v4231 = vadd.f32 %v4054, %v4230
  %v4232 = vpop.f32.mrb[0].mxu0
  %v4233 = vpop.f32.mrb[0].mxu0
  %v4234 = vadd.f32 %v4054, %v4233
  %v4235 = vpop.f32.mrb[0].mxu0
  %4236 = vmatprep.mubr.bf16.mxu0 0
  %4237 = vmatmul.mubr.bf16.gmra.mrb[0].mxu0 %v4085
  %v4238 = vpop.f32.mrb[0].mxu0
  %v4239 = vadd.f32 %v4054, %v4238
  %v4240 = vpop.f32.mrb[0].mxu0
  %v4241 = vpop.f32.mrb[0].mxu0
  %v4242 = vadd.f32 %v4054, %v4241
  %v4243 = vpop.f32.mrb[0].mxu0
  %4244 = vmatprep.mubr.bf16.mxu0 0
  %4245 = vmatmul.mubr.bf16.gmra.mrb[0].mxu0 %v4088
  %v4246 = vpop.f32.mrb[0].mxu0
  %v4247 = vadd.f32 %v4054, %v4246
  %v4248 = vpop.f32.mrb[0].mxu0
  %v4249 = vpop.f32.mrb[0].mxu0
  %v4250 = vadd.f32 %v4054, %v4249
  %v4251 = vpop.f32.mrb[0].mxu0
  %4252 = vmatprep.mubr.bf16.mxu0 0
  %4253 = vmatmul.mubr.bf16.gmra.mrb[0].mxu0 %v4091
  %v4254 = vpop.f32.mrb[0].mxu0
  %v4255 = vadd.f32 %v4054, %v4254
  %v4256 = vpop.f32.mrb[0].mxu0
  %v4257 = vpop.f32.mrb[0].mxu0
  %v4258 = vadd.f32 %v4054, %v4257
  %v4259 = vpop.f32.mrb[0].mxu0
  %4260 = vmatprep.mubr.bf16.mxu0 0
  %4261 = vmatmul.mubr.bf16.gmra.mrb[0].mxu0 %v4094
  %v4262 = vpop.f32.mrb[0].mxu0
  %v4263 = vadd.f32 %v4054, %v4262
  %v4264 = vpop.f32.mrb[0].mxu0
  %v4265 = vpop.f32.mrb[0].mxu0
  %v4266 = vadd.f32 %v4054, %v4265
  %v4267 = vpop.f32.mrb[0].mxu0
  %4268 = vmatprep.mubr.bf16.mxu0 0
  %4269 = vmatmul.mubr.bf16.gmra.mrb[0].mxu0 %v4097
  %v4270 = vpop.f32.mrb[0].mxu0
  %v4271 = vadd.f32 %v4054, %v4270
  %v4272 = vpop.f32.mrb[0].mxu0
  %v4273 = vpop.f32.mrb[0].mxu0
  %v4274 = vadd.f32 %v4054, %v4273
  %v4275 = vpop.f32.mrb[0].mxu0
  %4276 = vmatprep.mubr.bf16.mxu0 0
  %4277 = vmatmul.mubr.bf16.gmra.mrb[0].mxu0 %v4100
  %v4278 = vpop.f32.mrb[0].mxu0
  %v4279 = vadd.f32 %v4054, %v4278
  %v4280 = vpop.f32.mrb[0].mxu0
  %v4281 = vpop.f32.mrb[0].mxu0
  %v4282 = vadd.f32 %v4054, %v4281
  %v4283 = vpop.f32.mrb[0].mxu0
  %4284 = vmatprep.mubr.bf16.mxu0 0
  %4285 = vmatmul.mubr.bf16.gmra.mrb[0].mxu0 %v4103
  %v4286 = vpop.f32.mrb[0].mxu0
  %v4287 = vadd.f32 %v4054, %v4286
  %v4288 = vpop.f32.mrb[0].mxu0
  %v4289 = vpop.f32.mrb[0].mxu0
  %v4290 = vadd.f32 %v4054, %v4289
  %v4291 = vpop.f32.mrb[0].mxu0
  %4292 = vmatprep.mubr.bf16.mxu0 0
  %4293 = vmatmul.mubr.bf16.gmra.mrb[0].mxu0 %v4106
  %v4294 = vpop.f32.mrb[0].mxu0
  %v4295 = vadd.f32 %v4054, %v4294
  %v4296 = vpop.f32.mrb[0].mxu0
  %v4297 = vpop.f32.mrb[0].mxu0
  %v4298 = vadd.f32 %v4054, %v4297
  %v4299 = vpop.f32.mrb[0].mxu0
  %4300 = vmatprep.mubr.bf16.mxu0 0
  %4301 = vmatmul.mubr.bf16.gmra.mrb[0].mxu0 %v4109
  %v4302 = vpop.f32.mrb[0].mxu0
  %v4303 = vadd.f32 %v4054, %v4302
  %v4304 = vpop.f32.mrb[0].mxu0
  %v4305 = vpop.f32.mrb[0].mxu0
  %v4306 = vadd.f32 %v4054, %v4305
  %v4307 = vpop.f32.mrb[0].mxu0
  %4308 = vmatprep.mubr.bf16.mxu0 0
  %4309 = vmatmul.mubr.bf16.gmra.mrb[0].mxu0 %v4112
  %v4310 = vpop.f32.mrb[0].mxu0
  %v4311 = vadd.f32 %v4054, %v4310
  %v4312 = vpop.f32.mrb[0].mxu0
  %v4313 = vpop.f32.mrb[0].mxu0
  %v4314 = vadd.f32 %v4054, %v4313
  %v4315 = vpop.f32.mrb[0].mxu0
  %4316 = vmatprep.mubr.bf16.mxu0 0
  %4317 = vmatmul.mubr.bf16.gmra.mrb[0].mxu0 %v4115
  %v4318 = vpop.f32.mrb[0].mxu0
  %v4319 = vadd.f32 %v4054, %v4318
  %v4320 = vpop.f32.mrb[0].mxu0
  %v4321 = vpop.f32.mrb[0].mxu0
  %v4322 = vadd.f32 %v4054, %v4321
  %v4323 = vpop.f32.mrb[0].mxu0
  %4324 = vmatprep.mubr.bf16.mxu0 0
  %4325 = vmatmul.mubr.bf16.gmra.mrb[0].mxu0 %v4118
  %v4326 = vpop.f32.mrb[0].mxu0
  %v4327 = vadd.f32 %v4054, %v4326
  %v4328 = vpop.f32.mrb[0].mxu0
  %v4329 = vpop.f32.mrb[0].mxu0
  %v4330 = vadd.f32 %v4054, %v4329
  %v4331 = vpop.f32.mrb[0].mxu0
  %4332 = vmatprep.mubr.bf16.mxu0 0
  %4333 = vmatmul.mubr.bf16.gmra.mrb[0].mxu0 %v4121
  %v4334 = vpop.f32.mrb[0].mxu0
  %v4335 = vadd.f32 %v4054, %v4334
  %v4336 = vpop.f32.mrb[0].mxu0
  %v4337 = vpop.f32.mrb[0].mxu0
  %v4338 = vadd.f32 %v4054, %v4337
  %v4339 = vpop.f32.mrb[0].mxu0
  %4340 = vmatprep.mubr.bf16.mxu0 0
  %4341 = vmatmul.mubr.bf16.gmra.mrb[0].mxu0 %v4124
  %v4342 = vpop.f32.mrb[0].mxu0
  %v4343 = vadd.f32 %v4054, %v4342
  %v4344 = vpop.f32.mrb[0].mxu0
  %v4345 = vpop.f32.mrb[0].mxu0
  %v4346 = vadd.f32 %v4054, %v4345
  %v4347 = vpop.f32.mrb[0].mxu0
  %4348 = vmatprep.mubr.bf16.mxu0 0
  %4349 = vmatmul.mubr.bf16.gmra.mrb[0].mxu0 %v4127
  %v4350 = vpop.f32.mrb[0].mxu0
  %v4351 = vadd.f32 %v4054, %v4350
  %v4352 = vpop.f32.mrb[0].mxu0
  %v4353 = vpop.f32.mrb[0].mxu0
  %v4354 = vadd.f32 %v4054, %v4353
  %v4355 = vpop.f32.mrb[0].mxu0
  %4356 = vmatprep.mubr.bf16.mxu0 0
  %4357 = vmatmul.mubr.bf16.gmra.mrb[0].mxu0 %v4130
  %v4358 = vpop.f32.mrb[0].mxu0
  %v4359 = vadd.f32 %v4054, %v4358
  %v4360 = vpop.f32.mrb[0].mxu0
  %v4361 = vpop.f32.mrb[0].mxu0
  %v4362 = vadd.f32 %v4054, %v4361
  %v4363 = vpop.f32.mrb[0].mxu0
  %4364 = vmatprep.mubr.bf16.mxu0 0
  %4365 = vmatmul.mubr.bf16.gmra.mrb[0].mxu0 %v4133
  %v4366 = vpop.f32.mrb[0].mxu0
  %v4367 = vadd.f32 %v4054, %v4366
  %v4368 = vpop.f32.mrb[0].mxu0
  %v4369 = vpop.f32.mrb[0].mxu0
  %v4370 = vadd.f32 %v4054, %v4369
  %v4371 = vpop.f32.mrb[0].mxu0
  %4372 = vmatprep.mubr.bf16.mxu0 0
  %4373 = vmatmul.mubr.bf16.gmra.mrb[0].mxu0 %v4136
  %v4374 = vpop.f32.mrb[0].mxu0
  %v4375 = vadd.f32 %v4054, %v4374
  %v4376 = vpop.f32.mrb[0].mxu0
  %v4377 = vpop.f32.mrb[0].mxu0
  %v4378 = vadd.f32 %v4054, %v4377
  %v4379 = vpop.f32.mrb[0].mxu0
  %4380 = vmatprep.mubr.bf16.mxu0 0
  %4381 = vmatmul.mubr.bf16.gmra.mrb[0].mxu0 %v4139
  %v4382 = vpop.f32.mrb[0].mxu0
  %v4383 = vadd.f32 %v4054, %v4382
  %v4384 = vpop.f32.mrb[0].mxu0
  %v4385 = vpop.f32.mrb[0].mxu0
  %v4386 = vadd.f32 %v4054, %v4385
  %v4387 = vpop.f32.mrb[0].mxu0
  %4388 = vmatprep.mubr.bf16.mxu0 0
  %4389 = vmatmul.mubr.bf16.gmra.mrb[0].mxu0 %v4142
  %v4390 = vpop.f32.mrb[0].mxu0
  %v4391 = vadd.f32 %v4054, %v4390
  %v4392 = vpop.f32.mrb[0].mxu0
  %v4393 = vpop.f32.mrb[0].mxu0
  %v4394 = vadd.f32 %v4054, %v4393
  %v4395 = vpop.f32.mrb[0].mxu0
  %4396 = vmatprep.mubr.bf16.mxu0 0
  %4397 = vmatmul.mubr.bf16.gmra.mrb[0].mxu0 %v4145
  %v4398 = vpop.f32.mrb[0].mxu0
  %v4399 = vadd.f32 %v4054, %v4398
  %v4400 = vpop.f32.mrb[0].mxu0
  %v4401 = vpop.f32.mrb[0].mxu0
  %v4402 = vadd.f32 %v4054, %v4401
  %v4403 = vpop.f32.mrb[0].mxu0
  %4404 = vmatprep.mubr.bf16.mxu0 0
  %4405 = vmatmul.mubr.bf16.gmra.mrb[0].mxu0 %v4148
  %v4406 = vpop.f32.mrb[0].mxu0
  %v4407 = vadd.f32 %v4054, %v4406
  %v4408 = vpop.f32.mrb[0].mxu0
  %v4409 = vpop.f32.mrb[0].mxu0
  %v4410 = vadd.f32 %v4054, %v4409
  %v4411 = vpop.f32.mrb[0].mxu0
  %4412 = vmatprep.mubr.bf16.mxu0 0
  %4413 = vmatmul.mubr.bf16.gmra.mrb[0].mxu0 %v4151
  %v4414 = vpop.f32.mrb[0].mxu0
  %v4415 = vadd.f32 %v4054, %v4414
  %v4416 = vpop.f32.mrb[0].mxu0
  %v4417 = vpop.f32.mrb[0].mxu0
  %v4418 = vadd.f32 %v4054, %v4417
  %v4419 = vpop.f32.mrb[0].mxu0
  %4420 = vmatprep.mubr.bf16.mxu0 0
  %4421 = vmatmul.mubr.bf16.gmra.mrb[0].mxu0 %v4154
  %v4422 = vpop.f32.mrb[0].mxu0
  %v4423 = vadd.f32 %v4054, %v4422
  %v4424 = vpop.f32.mrb[0].mxu0
  %v4425 = vpop.f32.mrb[0].mxu0
  %v4426 = vadd.f32 %v4054, %v4425
  %v4427 = vpop.f32.mrb[0].mxu0
  %4428 = vmatprep.mubr.bf16.mxu0 0
  %4429 = vmatmul.mubr.bf16.gmra.mrb[0].mxu0 %v4157
  %v4430 = vpop.f32.mrb[0].mxu0
  %v4431 = vadd.f32 %v4054, %v4430
  %v4432 = vpop.f32.mrb[0].mxu0
  %v4433 = vpop.f32.mrb[0].mxu0
  %v4434 = vadd.f32 %v4054, %v4433
  %v4435 = vpop.f32.mrb[0].mxu0
  %4436 = vmatprep.mubr.bf16.mxu0 0
  %4437 = vmatmul.mubr.bf16.gmra.mrb[0].mxu0 %v4160
  %v4438 = vpop.f32.mrb[0].mxu0
  %v4439 = vadd.f32 %v4054, %v4438
  %v4440 = vpop.f32.mrb[0].mxu0
  %v4441 = vpop.f32.mrb[0].mxu0
  %v4442 = vadd.f32 %v4054, %v4441
  %v4443 = vpop.f32.mrb[0].mxu0
  %4444 = vmatprep.mubr.bf16.mxu0 0
  %4445 = vmatmul.mubr.bf16.gmra.mrb[0].mxu0 %v4163
  %v4446 = vpop.f32.mrb[0].mxu0
  %v4447 = vadd.f32 %v4054, %v4446
  %v4448 = vpop.f32.mrb[0].mxu0
  %v4449 = vpop.f32.mrb[0].mxu0
  %v4450 = vadd.f32 %v4054, %v4449
  %v4451 = vpop.f32.mrb[0].mxu0
  %4452 = vmatprep.mubr.bf16.mxu0 0
  %4453 = vmatmul.mubr.bf16.gmra.mrb[0].mxu0 %v4166
  %v4454 = vpop.f32.mrb[0].mxu0
  %v4455 = vadd.f32 %v4054, %v4454
  %v4456 = vpop.f32.mrb[0].mxu0
  %v4457 = vpop.f32.mrb[0].mxu0
  %v4458 = vadd.f32 %v4054, %v4457
  %v4459 = vpop.f32.mrb[0].mxu0
  %4460 = vdwg.mxu0
  %v4461 = vmax.f32 %v4207, 0.0
  %v4462 = vmax.f32 %v4210, 0.0
  %v4463 = vmax.f32 %v4215, 0.0
  %v4464 = vmax.f32 %v4218, 0.0
  %v4465 = vmax.f32 %v4223, 0.0
  %v4466 = vmax.f32 %v4226, 0.0
  %v4467 = vmax.f32 %v4231, 0.0
  %v4468 = vmax.f32 %v4234, 0.0
  %v4469 = vmax.f32 %v4239, 0.0
  %v4470 = vmax.f32 %v4242, 0.0
  %v4471 = vmax.f32 %v4247, 0.0
  %v4472 = vmax.f32 %v4250, 0.0
  %v4473 = vmax.f32 %v4255, 0.0
  %v4474 = vmax.f32 %v4258, 0.0
  %v4475 = vmax.f32 %v4263, 0.0
  %v4476 = vmax.f32 %v4266, 0.0
  %v4477 = vmax.f32 %v4271, 0.0
  %v4478 = vmax.f32 %v4274, 0.0
  %v4479 = vmax.f32 %v4279, 0.0
  %v4480 = vmax.f32 %v4282, 0.0
  %v4481 = vmax.f32 %v4287, 0.0
  %v4482 = vmax.f32 %v4290, 0.0
  %v4483 = vmax.f32 %v4295, 0.0
  %v4484 = vmax.f32 %v4298, 0.0
  %v4485 = vmax.f32 %v4303, 0.0
  %v4486 = vmax.f32 %v4306, 0.0
  %v4487 = vmax.f32 %v4311, 0.0
  %v4488 = vmax.f32 %v4314, 0.0
  %v4489 = vmax.f32 %v4319, 0.0
  %v4490 = vmax.f32 %v4322, 0.0
  %v4491 = vmax.f32 %v4327, 0.0
  %v4492 = vmax.f32 %v4330, 0.0
  %v4493 = vmax.f32 %v4335, 0.0
  %v4494 = vmax.f32 %v4338, 0.0
  %v4495 = vmax.f32 %v4343, 0.0
  %v4496 = vmax.f32 %v4346, 0.0
  %v4497 = vmax.f32 %v4351, 0.0
  %v4498 = vmax.f32 %v4354, 0.0
  %v4499 = vmax.f32 %v4359, 0.0
  %v4500 = vmax.f32 %v4362, 0.0
  %v4501 = vmax.f32 %v4367, 0.0
  %v4502 = vmax.f32 %v4370, 0.0
  %v4503 = vmax.f32 %v4375, 0.0
  %v4504 = vmax.f32 %v4378, 0.0
  %v4505 = vmax.f32 %v4383, 0.0
  %v4506 = vmax.f32 %v4386, 0.0
  %v4507 = vmax.f32 %v4391, 0.0
  %v4508 = vmax.f32 %v4394, 0.0
  %v4509 = vmax.f32 %v4399, 0.0
  %v4510 = vmax.f32 %v4402, 0.0
  %v4511 = vmax.f32 %v4407, 0.0
  %v4512 = vmax.f32 %v4410, 0.0
  %v4513 = vmax.f32 %v4415, 0.0
  %v4514 = vmax.f32 %v4418, 0.0
  %v4515 = vmax.f32 %v4423, 0.0
  %v4516 = vmax.f32 %v4426, 0.0
  %v4517 = vmax.f32 %v4431, 0.0
  %v4518 = vmax.f32 %v4434, 0.0
  %v4519 = vmax.f32 %v4439, 0.0
  %v4520 = vmax.f32 %v4442, 0.0
  %v4521 = vmax.f32 %v4447, 0.0
  %v4522 = vmax.f32 %v4450, 0.0
  %v4523 = vmax.f32 %v4455, 0.0
  %v4524 = vmax.f32 %v4458, 0.0
  %v4525 = vpack.c.bf16 %v4462, %v4461
  %v4526 = vpack.c.bf16 %v4464, %v4463
  %v4527 = vpack.c.bf16 %v4466, %v4465
  %v4528 = vpack.c.bf16 %v4468, %v4467
  %v4529 = vpack.c.bf16 %v4470, %v4469
  %v4530 = vpack.c.bf16 %v4472, %v4471
  %v4531 = vpack.c.bf16 %v4474, %v4473
  %v4532 = vpack.c.bf16 %v4476, %v4475
  %v4533 = vpack.c.bf16 %v4478, %v4477
  %v4534 = vpack.c.bf16 %v4480, %v4479
  %v4535 = vpack.c.bf16 %v4482, %v4481
  %v4536 = vpack.c.bf16 %v4484, %v4483
  %v4537 = vpack.c.bf16 %v4486, %v4485
  %v4538 = vpack.c.bf16 %v4488, %v4487
  %v4539 = vpack.c.bf16 %v4490, %v4489
  %v4540 = vpack.c.bf16 %v4492, %v4491
  %v4541 = vpack.c.bf16 %v4494, %v4493
  %v4542 = vpack.c.bf16 %v4496, %v4495
  %v4543 = vpack.c.bf16 %v4498, %v4497
  %v4544 = vpack.c.bf16 %v4500, %v4499
  %v4545 = vpack.c.bf16 %v4502, %v4501
  %v4546 = vpack.c.bf16 %v4504, %v4503
  %v4547 = vpack.c.bf16 %v4506, %v4505
  %v4548 = vpack.c.bf16 %v4508, %v4507
  %v4549 = vpack.c.bf16 %v4510, %v4509
  %v4550 = vpack.c.bf16 %v4512, %v4511
  %v4551 = vpack.c.bf16 %v4514, %v4513
  %v4552 = vpack.c.bf16 %v4516, %v4515
  %v4553 = vpack.c.bf16 %v4518, %v4517
  %v4554 = vpack.c.bf16 %v4520, %v4519
  %v4555 = vpack.c.bf16 %v4522, %v4521
  %v4556 = vpack.c.bf16 %v4524, %v4523
  %v4557 = vld [vmem:[%s5] sm:$0x3]
  %v4558 = vld [vmem:[%s6] sm:$0x1]
  %v4560 = vlaneseq
  %v4561 = vshrl.u32 %v4560, 7
  %v4562 = vsub.s32 0, %v4561
  %v4563 = vrot.slane %v4558, %v4562
  %v4566 = vsel %vm716, %v4525, 0
  %v4569 = vsel %vm716, %v4526, 0
  %v4572 = vsel %vm716, %v4527, 0
  %v4575 = vsel %vm716, %v4528, 0
  %v4578 = vsel %vm716, %v4529, 0
  %v4581 = vsel %vm716, %v4530, 0
  %v4584 = vsel %vm716, %v4531, 0
  %v4587 = vsel %vm716, %v4532, 0
  %v4590 = vsel %vm716, %v4533, 0
  %v4593 = vsel %vm716, %v4534, 0
  %v4596 = vsel %vm716, %v4535, 0
  %v4599 = vsel %vm716, %v4536, 0
  %v4602 = vsel %vm716, %v4537, 0
  %v4605 = vsel %vm716, %v4538, 0
  %v4608 = vsel %vm716, %v4539, 0
  %v4611 = vsel %vm716, %v4540, 0
  %v4614 = vsel %vm716, %v4541, 0
  %v4617 = vsel %vm716, %v4542, 0
  %v4620 = vsel %vm716, %v4543, 0
  %v4623 = vsel %vm716, %v4544, 0
  %v4626 = vsel %vm716, %v4545, 0
  %v4629 = vsel %vm716, %v4546, 0
  %v4632 = vsel %vm716, %v4547, 0
  %v4635 = vsel %vm716, %v4548, 0
  %v4638 = vsel %vm716, %v4549, 0
  %v4641 = vsel %vm716, %v4550, 0
  %v4644 = vsel %vm716, %v4551, 0
  %v4647 = vsel %vm716, %v4552, 0
  %v4650 = vsel %vm716, %v4553, 0
  %v4653 = vsel %vm716, %v4554, 0
  %v4656 = vsel %vm716, %v4555, 0
  %v4659 = vsel %vm716, %v4556, 0
  %v4662 = vsel %vm4168, %v4557, 0
  %4664 = vmatprep.subr.bf16.mxu0 0
  %4665 = vmatpush1.bf16.msra.mxu0 %v4662
  %4666 = vmatprep.subr.bf16.mxu0 0
  %4667 = vmatpush1.bf16.msra.mxu0 0
  %4668 = vmatprep.subr.bf16.mxu0 0
  %4669 = vmatpush1.bf16.msra.mxu0 0
  %4670 = vmatprep.subr.bf16.mxu0 0
  %4671 = vmatpush1.bf16.msra.mxu0 0
  %4672 = vmatprep.subr.bf16.mxu0 0
  %4673 = vmatpush1.bf16.msra.mxu0 0
  %4674 = vmatprep.subr.bf16.mxu0 0
  %4675 = vmatpush1.bf16.msra.mxu0 0
  %4676 = vmatprep.subr.bf16.mxu0 0
  %4677 = vmatpush1.bf16.msra.mxu0 0
  %4678 = vmatprep.subr.bf16.mxu0 0
  %4679 = vmatpush1.bf16.msra.mxu0 0
  %4680 = vmatprep.subr.bf16.mxu0 0
  %4681 = vmatpush1.bf16.msra.mxu0 0
  %4682 = vmatprep.subr.bf16.mxu0 0
  %4683 = vmatpush1.bf16.msra.mxu0 0
  %4684 = vmatprep.subr.bf16.mxu0 0
  %4685 = vmatpush1.bf16.msra.mxu0 0
  %4686 = vmatprep.subr.bf16.mxu0 0
  %4687 = vmatpush1.bf16.msra.mxu0 0
  %4688 = vmatprep.subr.bf16.mxu0 0
  %4689 = vmatpush1.bf16.msra.mxu0 0
  %4690 = vmatprep.subr.bf16.mxu0 0
  %4691 = vmatpush1.bf16.msra.mxu0 0
  %4692 = vmatprep.subr.bf16.mxu0 0
  %4693 = vmatpush1.bf16.msra.mxu0 0
  %4694 = vmatprep.subr.bf16.mxu0 0
  %4695 = vmatpush1.bf16.msra.mxu0 0
  %4696 = vmatprep.mubr.bf16.mxu0 0
  %4697 = vmatmul.mubr.bf16.gmra.mrb[0].mxu0 %v4566
  %v4698 = vpop.f32.mrb[0].mxu0
  %v4699 = vadd.f32 %v4563, %v4698
  %v4700 = vpop.f32.mrb[0].mxu0
  %v4701 = vpop.f32.mrb[0].mxu0
  %v4702 = vadd.f32 %v4563, %v4701
  %v4703 = vpop.f32.mrb[0].mxu0
  %4704 = vmatprep.mubr.bf16.mxu0 0
  %4705 = vmatmul.mubr.bf16.gmra.mrb[0].mxu0 %v4569
  %v4706 = vpop.f32.mrb[0].mxu0
  %v4707 = vadd.f32 %v4563, %v4706
  %v4708 = vpop.f32.mrb[0].mxu0
  %v4709 = vpop.f32.mrb[0].mxu0
  %v4710 = vadd.f32 %v4563, %v4709
  %v4711 = vpop.f32.mrb[0].mxu0
  %4712 = vmatprep.mubr.bf16.mxu0 0
  %4713 = vmatmul.mubr.bf16.gmra.mrb[0].mxu0 %v4572
  %v4714 = vpop.f32.mrb[0].mxu0
  %v4715 = vadd.f32 %v4563, %v4714
  %v4716 = vpop.f32.mrb[0].mxu0
  %v4717 = vpop.f32.mrb[0].mxu0
  %v4718 = vadd.f32 %v4563, %v4717
  %v4719 = vpop.f32.mrb[0].mxu0
  %4720 = vmatprep.mubr.bf16.mxu0 0
  %4721 = vmatmul.mubr.bf16.gmra.mrb[0].mxu0 %v4575
  %v4722 = vpop.f32.mrb[0].mxu0
  %v4723 = vadd.f32 %v4563, %v4722
  %v4724 = vpop.f32.mrb[0].mxu0
  %v4725 = vpop.f32.mrb[0].mxu0
  %v4726 = vadd.f32 %v4563, %v4725
  %v4727 = vpop.f32.mrb[0].mxu0
  %4728 = vmatprep.mubr.bf16.mxu0 0
  %4729 = vmatmul.mubr.bf16.gmra.mrb[0].mxu0 %v4578
  %v4730 = vpop.f32.mrb[0].mxu0
  %v4731 = vadd.f32 %v4563, %v4730
  %v4732 = vpop.f32.mrb[0].mxu0
  %v4733 = vpop.f32.mrb[0].mxu0
  %v4734 = vadd.f32 %v4563, %v4733
  %v4735 = vpop.f32.mrb[0].mxu0
  %4736 = vmatprep.mubr.bf16.mxu0 0
  %4737 = vmatmul.mubr.bf16.gmra.mrb[0].mxu0 %v4581
  %v4738 = vpop.f32.mrb[0].mxu0
  %v4739 = vadd.f32 %v4563, %v4738
  %v4740 = vpop.f32.mrb[0].mxu0
  %v4741 = vpop.f32.mrb[0].mxu0
  %v4742 = vadd.f32 %v4563, %v4741
  %v4743 = vpop.f32.mrb[0].mxu0
  %4744 = vmatprep.mubr.bf16.mxu0 0
  %4745 = vmatmul.mubr.bf16.gmra.mrb[0].mxu0 %v4584
  %v4746 = vpop.f32.mrb[0].mxu0
  %v4747 = vadd.f32 %v4563, %v4746
  %v4748 = vpop.f32.mrb[0].mxu0
  %v4749 = vpop.f32.mrb[0].mxu0
  %v4750 = vadd.f32 %v4563, %v4749
  %v4751 = vpop.f32.mrb[0].mxu0
  %4752 = vmatprep.mubr.bf16.mxu0 0
  %4753 = vmatmul.mubr.bf16.gmra.mrb[0].mxu0 %v4587
  %v4754 = vpop.f32.mrb[0].mxu0
  %v4755 = vadd.f32 %v4563, %v4754
  %v4756 = vpop.f32.mrb[0].mxu0
  %v4757 = vpop.f32.mrb[0].mxu0
  %v4758 = vadd.f32 %v4563, %v4757
  %v4759 = vpop.f32.mrb[0].mxu0
  %4760 = vmatprep.mubr.bf16.mxu0 0
  %4761 = vmatmul.mubr.bf16.gmra.mrb[0].mxu0 %v4590
  %v4762 = vpop.f32.mrb[0].mxu0
  %v4763 = vadd.f32 %v4563, %v4762
  %v4764 = vpop.f32.mrb[0].mxu0
  %v4765 = vpop.f32.mrb[0].mxu0
  %v4766 = vadd.f32 %v4563, %v4765
  %v4767 = vpop.f32.mrb[0].mxu0
  %4768 = vmatprep.mubr.bf16.mxu0 0
  %4769 = vmatmul.mubr.bf16.gmra.mrb[0].mxu0 %v4593
  %v4770 = vpop.f32.mrb[0].mxu0
  %v4771 = vadd.f32 %v4563, %v4770
  %v4772 = vpop.f32.mrb[0].mxu0
  %v4773 = vpop.f32.mrb[0].mxu0
  %v4774 = vadd.f32 %v4563, %v4773
  %v4775 = vpop.f32.mrb[0].mxu0
  %4776 = vmatprep.mubr.bf16.mxu0 0
  %4777 = vmatmul.mubr.bf16.gmra.mrb[0].mxu0 %v4596
  %v4778 = vpop.f32.mrb[0].mxu0
  %v4779 = vadd.f32 %v4563, %v4778
  %v4780 = vpop.f32.mrb[0].mxu0
  %v4781 = vpop.f32.mrb[0].mxu0
  %v4782 = vadd.f32 %v4563, %v4781
  %v4783 = vpop.f32.mrb[0].mxu0
  %4784 = vmatprep.mubr.bf16.mxu0 0
  %4785 = vmatmul.mubr.bf16.gmra.mrb[0].mxu0 %v4599
  %v4786 = vpop.f32.mrb[0].mxu0
  %v4787 = vadd.f32 %v4563, %v4786
  %v4788 = vpop.f32.mrb[0].mxu0
  %v4789 = vpop.f32.mrb[0].mxu0
  %v4790 = vadd.f32 %v4563, %v4789
  %v4791 = vpop.f32.mrb[0].mxu0
  %4792 = vmatprep.mubr.bf16.mxu0 0
  %4793 = vmatmul.mubr.bf16.gmra.mrb[0].mxu0 %v4602
  %v4794 = vpop.f32.mrb[0].mxu0
  %v4795 = vadd.f32 %v4563, %v4794
  %v4796 = vpop.f32.mrb[0].mxu0
  %v4797 = vpop.f32.mrb[0].mxu0
  %v4798 = vadd.f32 %v4563, %v4797
  %v4799 = vpop.f32.mrb[0].mxu0
  %4800 = vmatprep.mubr.bf16.mxu0 0
  %4801 = vmatmul.mubr.bf16.gmra.mrb[0].mxu0 %v4605
  %v4802 = vpop.f32.mrb[0].mxu0
  %v4803 = vadd.f32 %v4563, %v4802
  %v4804 = vpop.f32.mrb[0].mxu0
  %v4805 = vpop.f32.mrb[0].mxu0
  %v4806 = vadd.f32 %v4563, %v4805
  %v4807 = vpop.f32.mrb[0].mxu0
  %4808 = vmatprep.mubr.bf16.mxu0 0
  %4809 = vmatmul.mubr.bf16.gmra.mrb[0].mxu0 %v4608
  %v4810 = vpop.f32.mrb[0].mxu0
  %v4811 = vadd.f32 %v4563, %v4810
  %v4812 = vpop.f32.mrb[0].mxu0
  %v4813 = vpop.f32.mrb[0].mxu0
  %v4814 = vadd.f32 %v4563, %v4813
  %v4815 = vpop.f32.mrb[0].mxu0
  %4816 = vmatprep.mubr.bf16.mxu0 0
  %4817 = vmatmul.mubr.bf16.gmra.mrb[0].mxu0 %v4611
  %v4818 = vpop.f32.mrb[0].mxu0
  %v4819 = vadd.f32 %v4563, %v4818
  %v4820 = vpop.f32.mrb[0].mxu0
  %v4821 = vpop.f32.mrb[0].mxu0
  %v4822 = vadd.f32 %v4563, %v4821
  %v4823 = vpop.f32.mrb[0].mxu0
  %4824 = vmatprep.mubr.bf16.mxu0 0
  %4825 = vmatmul.mubr.bf16.gmra.mrb[0].mxu0 %v4614
  %v4826 = vpop.f32.mrb[0].mxu0
  %v4827 = vadd.f32 %v4563, %v4826
  %v4828 = vpop.f32.mrb[0].mxu0
  %v4829 = vpop.f32.mrb[0].mxu0
  %v4830 = vadd.f32 %v4563, %v4829
  %v4831 = vpop.f32.mrb[0].mxu0
  %4832 = vmatprep.mubr.bf16.mxu0 0
  %4833 = vmatmul.mubr.bf16.gmra.mrb[0].mxu0 %v4617
  %v4834 = vpop.f32.mrb[0].mxu0
  %v4835 = vadd.f32 %v4563, %v4834
  %v4836 = vpop.f32.mrb[0].mxu0
  %v4837 = vpop.f32.mrb[0].mxu0
  %v4838 = vadd.f32 %v4563, %v4837
  %v4839 = vpop.f32.mrb[0].mxu0
  %4840 = vmatprep.mubr.bf16.mxu0 0
  %4841 = vmatmul.mubr.bf16.gmra.mrb[0].mxu0 %v4620
  %v4842 = vpop.f32.mrb[0].mxu0
  %v4843 = vadd.f32 %v4563, %v4842
  %v4844 = vpop.f32.mrb[0].mxu0
  %v4845 = vpop.f32.mrb[0].mxu0
  %v4846 = vadd.f32 %v4563, %v4845
  %v4847 = vpop.f32.mrb[0].mxu0
  %4848 = vmatprep.mubr.bf16.mxu0 0
  %4849 = vmatmul.mubr.bf16.gmra.mrb[0].mxu0 %v4623
  %v4850 = vpop.f32.mrb[0].mxu0
  %v4851 = vadd.f32 %v4563, %v4850
  %v4852 = vpop.f32.mrb[0].mxu0
  %v4853 = vpop.f32.mrb[0].mxu0
  %v4854 = vadd.f32 %v4563, %v4853
  %v4855 = vpop.f32.mrb[0].mxu0
  %4856 = vmatprep.mubr.bf16.mxu0 0
  %4857 = vmatmul.mubr.bf16.gmra.mrb[0].mxu0 %v4626
  %v4858 = vpop.f32.mrb[0].mxu0
  %v4859 = vadd.f32 %v4563, %v4858
  %v4860 = vpop.f32.mrb[0].mxu0
  %v4861 = vpop.f32.mrb[0].mxu0
  %v4862 = vadd.f32 %v4563, %v4861
  %v4863 = vpop.f32.mrb[0].mxu0
  %4864 = vmatprep.mubr.bf16.mxu0 0
  %4865 = vmatmul.mubr.bf16.gmra.mrb[0].mxu0 %v4629
  %v4866 = vpop.f32.mrb[0].mxu0
  %v4867 = vadd.f32 %v4563, %v4866
  %v4868 = vpop.f32.mrb[0].mxu0
  %v4869 = vpop.f32.mrb[0].mxu0
  %v4870 = vadd.f32 %v4563, %v4869
  %v4871 = vpop.f32.mrb[0].mxu0
  %4872 = vmatprep.mubr.bf16.mxu0 0
  %4873 = vmatmul.mubr.bf16.gmra.mrb[0].mxu0 %v4632
  %v4874 = vpop.f32.mrb[0].mxu0
  %v4875 = vadd.f32 %v4563, %v4874
  %v4876 = vpop.f32.mrb[0].mxu0
  %v4877 = vpop.f32.mrb[0].mxu0
  %v4878 = vadd.f32 %v4563, %v4877
  %v4879 = vpop.f32.mrb[0].mxu0
  %4880 = vmatprep.mubr.bf16.mxu0 0
  %4881 = vmatmul.mubr.bf16.gmra.mrb[0].mxu0 %v4635
  %v4882 = vpop.f32.mrb[0].mxu0
  %v4883 = vadd.f32 %v4563, %v4882
  %v4884 = vpop.f32.mrb[0].mxu0
  %v4885 = vpop.f32.mrb[0].mxu0
  %v4886 = vadd.f32 %v4563, %v4885
  %v4887 = vpop.f32.mrb[0].mxu0
  %4888 = vmatprep.mubr.bf16.mxu0 0
  %4889 = vmatmul.mubr.bf16.gmra.mrb[0].mxu0 %v4638
  %v4890 = vpop.f32.mrb[0].mxu0
  %v4891 = vadd.f32 %v4563, %v4890
  %v4892 = vpop.f32.mrb[0].mxu0
  %v4893 = vpop.f32.mrb[0].mxu0
  %v4894 = vadd.f32 %v4563, %v4893
  %v4895 = vpop.f32.mrb[0].mxu0
  %4896 = vmatprep.mubr.bf16.mxu0 0
  %4897 = vmatmul.mubr.bf16.gmra.mrb[0].mxu0 %v4641
  %v4898 = vpop.f32.mrb[0].mxu0
  %v4899 = vadd.f32 %v4563, %v4898
  %v4900 = vpop.f32.mrb[0].mxu0
  %v4901 = vpop.f32.mrb[0].mxu0
  %v4902 = vadd.f32 %v4563, %v4901
  %v4903 = vpop.f32.mrb[0].mxu0
  %4904 = vmatprep.mubr.bf16.mxu0 0
  %4905 = vmatmul.mubr.bf16.gmra.mrb[0].mxu0 %v4644
  %v4906 = vpop.f32.mrb[0].mxu0
  %v4907 = vadd.f32 %v4563, %v4906
  %v4908 = vpop.f32.mrb[0].mxu0
  %v4909 = vpop.f32.mrb[0].mxu0
  %v4910 = vadd.f32 %v4563, %v4909
  %v4911 = vpop.f32.mrb[0].mxu0
  %4912 = vmatprep.mubr.bf16.mxu0 0
  %4913 = vmatmul.mubr.bf16.gmra.mrb[0].mxu0 %v4647
  %v4914 = vpop.f32.mrb[0].mxu0
  %v4915 = vadd.f32 %v4563, %v4914
  %v4916 = vpop.f32.mrb[0].mxu0
  %v4917 = vpop.f32.mrb[0].mxu0
  %v4918 = vadd.f32 %v4563, %v4917
  %v4919 = vpop.f32.mrb[0].mxu0
  %4920 = vmatprep.mubr.bf16.mxu0 0
  %4921 = vmatmul.mubr.bf16.gmra.mrb[0].mxu0 %v4650
  %v4922 = vpop.f32.mrb[0].mxu0
  %v4923 = vadd.f32 %v4563, %v4922
  %v4924 = vpop.f32.mrb[0].mxu0
  %v4925 = vpop.f32.mrb[0].mxu0
  %v4926 = vadd.f32 %v4563, %v4925
  %v4927 = vpop.f32.mrb[0].mxu0
  %4928 = vmatprep.mubr.bf16.mxu0 0
  %4929 = vmatmul.mubr.bf16.gmra.mrb[0].mxu0 %v4653
  %v4930 = vpop.f32.mrb[0].mxu0
  %v4931 = vadd.f32 %v4563, %v4930
  %v4932 = vpop.f32.mrb[0].mxu0
  %v4933 = vpop.f32.mrb[0].mxu0
  %v4934 = vadd.f32 %v4563, %v4933
  %v4935 = vpop.f32.mrb[0].mxu0
  %4936 = vmatprep.mubr.bf16.mxu0 0
  %4937 = vmatmul.mubr.bf16.gmra.mrb[0].mxu0 %v4656
  %v4938 = vpop.f32.mrb[0].mxu0
  %v4939 = vadd.f32 %v4563, %v4938
  %v4940 = vpop.f32.mrb[0].mxu0
  %v4941 = vpop.f32.mrb[0].mxu0
  %v4942 = vadd.f32 %v4563, %v4941
  %v4943 = vpop.f32.mrb[0].mxu0
  %4944 = vmatprep.mubr.bf16.mxu0 0
  %4945 = vmatmul.mubr.bf16.gmra.mrb[0].mxu0 %v4659
  %v4946 = vpop.f32.mrb[0].mxu0
  %v4947 = vadd.f32 %v4563, %v4946
  %v4948 = vpop.f32.mrb[0].mxu0
  %v4949 = vpop.f32.mrb[0].mxu0
  %v4950 = vadd.f32 %v4563, %v4949
  %v4951 = vpop.f32.mrb[0].mxu0
  %4952 = vdwg.mxu0
  %v4953 = vmax.f32 %v4699, 0.0
  %v4954 = vmax.f32 %v4702, 0.0
  %v4955 = vmax.f32 %v4707, 0.0
  %v4956 = vmax.f32 %v4710, 0.0
  %v4957 = vmax.f32 %v4715, 0.0
  %v4958 = vmax.f32 %v4718, 0.0
  %v4959 = vmax.f32 %v4723, 0.0
  %v4960 = vmax.f32 %v4726, 0.0
  %v4961 = vmax.f32 %v4731, 0.0
  %v4962 = vmax.f32 %v4734, 0.0
  %v4963 = vmax.f32 %v4739, 0.0
  %v4964 = vmax.f32 %v4742, 0.0
  %v4965 = vmax.f32 %v4747, 0.0
  %v4966 = vmax.f32 %v4750, 0.0
  %v4967 = vmax.f32 %v4755, 0.0
  %v4968 = vmax.f32 %v4758, 0.0
  %v4969 = vmax.f32 %v4763, 0.0
  %v4970 = vmax.f32 %v4766, 0.0
  %v4971 = vmax.f32 %v4771, 0.0
  %v4972 = vmax.f32 %v4774, 0.0
  %v4973 = vmax.f32 %v4779, 0.0
  %v4974 = vmax.f32 %v4782, 0.0
  %v4975 = vmax.f32 %v4787, 0.0
  %v4976 = vmax.f32 %v4790, 0.0
  %v4977 = vmax.f32 %v4795, 0.0
  %v4978 = vmax.f32 %v4798, 0.0
  %v4979 = vmax.f32 %v4803, 0.0
  %v4980 = vmax.f32 %v4806, 0.0
  %v4981 = vmax.f32 %v4811, 0.0
  %v4982 = vmax.f32 %v4814, 0.0
  %v4983 = vmax.f32 %v4819, 0.0
  %v4984 = vmax.f32 %v4822, 0.0
  %v4985 = vmax.f32 %v4827, 0.0
  %v4986 = vmax.f32 %v4830, 0.0
  %v4987 = vmax.f32 %v4835, 0.0
  %v4988 = vmax.f32 %v4838, 0.0
  %v4989 = vmax.f32 %v4843, 0.0
  %v4990 = vmax.f32 %v4846, 0.0
  %v4991 = vmax.f32 %v4851, 0.0
  %v4992 = vmax.f32 %v4854, 0.0
  %v4993 = vmax.f32 %v4859, 0.0
  %v4994 = vmax.f32 %v4862, 0.0
  %v4995 = vmax.f32 %v4867, 0.0
  %v4996 = vmax.f32 %v4870, 0.0
  %v4997 = vmax.f32 %v4875, 0.0
  %v4998 = vmax.f32 %v4878, 0.0
  %v4999 = vmax.f32 %v4883, 0.0
  %v5000 = vmax.f32 %v4886, 0.0
  %v5001 = vmax.f32 %v4891, 0.0
  %v5002 = vmax.f32 %v4894, 0.0
  %v5003 = vmax.f32 %v4899, 0.0
  %v5004 = vmax.f32 %v4902, 0.0
  %v5005 = vmax.f32 %v4907, 0.0
  %v5006 = vmax.f32 %v4910, 0.0
  %v5007 = vmax.f32 %v4915, 0.0
  %v5008 = vmax.f32 %v4918, 0.0
  %v5009 = vmax.f32 %v4923, 0.0
  %v5010 = vmax.f32 %v4926, 0.0
  %v5011 = vmax.f32 %v4931, 0.0
  %v5012 = vmax.f32 %v4934, 0.0
  %v5013 = vmax.f32 %v4939, 0.0
  %v5014 = vmax.f32 %v4942, 0.0
  %v5015 = vmax.f32 %v4947, 0.0
  %v5016 = vmax.f32 %v4950, 0.0
  %5017 = vst.msk [vmem:[%s7] sm:$0xff] %vm266, %v4953
  %5018 = vst.msk [vmem:[%s7 + $0x8] sm:$0xff] %vm266, %v4954
  %5019 = vst.msk [vmem:[%s7 + $0x10] sm:$0xff] %vm266, %v4955
  %5020 = vst.msk [vmem:[%s7 + $0x18] sm:$0xff] %vm266, %v4956
  %5021 = vst.msk [vmem:[%s7 + $0x20] sm:$0xff] %vm266, %v4957
  %5022 = vst.msk [vmem:[%s7 + $0x28] sm:$0xff] %vm266, %v4958
  %5023 = vst.msk [vmem:[%s7 + $0x30] sm:$0xff] %vm266, %v4959
  %5024 = vst.msk [vmem:[%s7 + $0x38] sm:$0xff] %vm266, %v4960
  %5025 = vst.msk [vmem:[%s7 + $0x40] sm:$0xff] %vm266, %v4961
  %5026 = vst.msk [vmem:[%s7 + $0x48] sm:$0xff] %vm266, %v4962
  %5027 = vst.msk [vmem:[%s7 + $0x50] sm:$0xff] %vm266, %v4963
  %5028 = vst.msk [vmem:[%s7 + $0x58] sm:$0xff] %vm266, %v4964
  %5029 = vst.msk [vmem:[%s7 + $0x60] sm:$0xff] %vm266, %v4965
  %5030 = vst.msk [vmem:[%s7 + $0x68] sm:$0xff] %vm266, %v4966
  %5031 = vst.msk [vmem:[%s7 + $0x70] sm:$0xff] %vm266, %v4967
  %5032 = vst.msk [vmem:[%s7 + $0x78] sm:$0xff] %vm266, %v4968
  %5033 = vst.msk [vmem:[%s7 + $0x80] sm:$0xff] %vm266, %v4969
  %5034 = vst.msk [vmem:[%s7 + $0x88] sm:$0xff] %vm266, %v4970
  %5035 = vst.msk [vmem:[%s7 + $0x90] sm:$0xff] %vm266, %v4971
  %5036 = vst.msk [vmem:[%s7 + $0x98] sm:$0xff] %vm266, %v4972
  %5037 = vst.msk [vmem:[%s7 + $0xa0] sm:$0xff] %vm266, %v4973
  %5038 = vst.msk [vmem:[%s7 + $0xa8] sm:$0xff] %vm266, %v4974
  %5039 = vst.msk [vmem:[%s7 + $0xb0] sm:$0xff] %vm266, %v4975
  %5040 = vst.msk [vmem:[%s7 + $0xb8] sm:$0xff] %vm266, %v4976
  %5041 = vst.msk [vmem:[%s7 + $0xc0] sm:$0xff] %vm266, %v4977
  %5042 = vst.msk [vmem:[%s7 + $0xc8] sm:$0xff] %vm266, %v4978
  %5043 = vst.msk [vmem:[%s7 + $0xd0] sm:$0xff] %vm266, %v4979
  %5044 = vst.msk [vmem:[%s7 + $0xd8] sm:$0xff] %vm266, %v4980
  %5045 = vst.msk [vmem:[%s7 + $0xe0] sm:$0xff] %vm266, %v4981
  %5046 = vst.msk [vmem:[%s7 + $0xe8] sm:$0xff] %vm266, %v4982
  %5047 = vst.msk [vmem:[%s7 + $0xf0] sm:$0xff] %vm266, %v4983
  %5048 = vst.msk [vmem:[%s7 + $0xf8] sm:$0xff] %vm266, %v4984
  %5049 = vst.msk [vmem:[%s7 + $0x100] sm:$0xff] %vm266, %v4985
  %5050 = vst.msk [vmem:[%s7 + $0x108] sm:$0xff] %vm266, %v4986
  %5051 = vst.msk [vmem:[%s7 + $0x110] sm:$0xff] %vm266, %v4987
  %5052 = vst.msk [vmem:[%s7 + $0x118] sm:$0xff] %vm266, %v4988
  %5053 = vst.msk [vmem:[%s7 + $0x120] sm:$0xff] %vm266, %v4989
  %5054 = vst.msk [vmem:[%s7 + $0x128] sm:$0xff] %vm266, %v4990
  %5055 = vst.msk [vmem:[%s7 + $0x130] sm:$0xff] %vm266, %v4991
  %5056 = vst.msk [vmem:[%s7 + $0x138] sm:$0xff] %vm266, %v4992
  %5057 = vst.msk [vmem:[%s7 + $0x140] sm:$0xff] %vm266, %v4993
  %5058 = vst.msk [vmem:[%s7 + $0x148] sm:$0xff] %vm266, %v4994
  %5059 = vst.msk [vmem:[%s7 + $0x150] sm:$0xff] %vm266, %v4995
  %5060 = vst.msk [vmem:[%s7 + $0x158] sm:$0xff] %vm266, %v4996
  %5061 = vst.msk [vmem:[%s7 + $0x160] sm:$0xff] %vm266, %v4997
  %5062 = vst.msk [vmem:[%s7 + $0x168] sm:$0xff] %vm266, %v4998
  %5063 = vst.msk [vmem:[%s7 + $0x170] sm:$0xff] %vm266, %v4999
  %5064 = vst.msk [vmem:[%s7 + $0x178] sm:$0xff] %vm266, %v5000
  %5065 = vst.msk [vmem:[%s7 + $0x180] sm:$0xff] %vm266, %v5001
  %5066 = vst.msk [vmem:[%s7 + $0x188] sm:$0xff] %vm266, %v5002
  %5067 = vst.msk [vmem:[%s7 + $0x190] sm:$0xff] %vm266, %v5003
  %5068 = vst.msk [vmem:[%s7 + $0x198] sm:$0xff] %vm266, %v5004
  %5069 = vst.msk [vmem:[%s7 + $0x1a0] sm:$0xff] %vm266, %v5005
  %5070 = vst.msk [vmem:[%s7 + $0x1a8] sm:$0xff] %vm266, %v5006
  %5071 = vst.msk [vmem:[%s7 + $0x1b0] sm:$0xff] %vm266, %v5007
  %5072 = vst.msk [vmem:[%s7 + $0x1b8] sm:$0xff] %vm266, %v5008
  %5073 = vst.msk [vmem:[%s7 + $0x1c0] sm:$0xff] %vm266, %v5009
  %5074 = vst.msk [vmem:[%s7 + $0x1c8] sm:$0xff] %vm266, %v5010
  %5075 = vst.msk [vmem:[%s7 + $0x1d0] sm:$0xff] %vm266, %v5011
  %5076 = vst.msk [vmem:[%s7 + $0x1d8] sm:$0xff] %vm266, %v5012
  %5077 = vst.msk [vmem:[%s7 + $0x1e0] sm:$0xff] %vm266, %v5013
  %5078 = vst.msk [vmem:[%s7 + $0x1e8] sm:$0xff] %vm266, %v5014
  %5079 = vst.msk [vmem:[%s7 + $0x1f0] sm:$0xff] %vm266, %v5015
  %5080 = vst.msk [vmem:[%s7 + $0x1f8] sm:$0xff] %vm266, %v5016
  // Predicated region
  $region30: #{bottleneck131_pallas.1} parent=0 // pred_check
    _
  $region31: #{bottleneck131_pallas.1} parent=0 // pred_check_branch
    %5082 = sbr.rel (0) target = $region33
  $region32: #{bottleneck131_pallas.1} parent=0 // pred_region
    _
  $region33: #{bottleneck131_pallas.1} parent=0 // pred_fallthru
    _
  // Predicated region
  $region34: #{bottleneck131_pallas.1} parent=0 // pred_check
    _
  $region35: #{bottleneck131_pallas.1} parent=0 // pred_check_branch
    %5084 = sbr.rel (0) target = $region37
  $region36: #{bottleneck131_pallas.1} parent=0 // pred_region
    _
  $region37: #{bottleneck131_pallas.1} parent=0 // pred_fallthru
    _

</llo_original>
